<compile_context>
chip_gen: v7x
topology: tpu7x:2x2x1
jax: 0.10.0
libtpu: 0.0.40
codegen_flags: <defaults>
</compile_context>

<pallas_src>
from functools import partial

import numpy as np

import jax
import jax.numpy as jnp
from jax.experimental import pallas as pl
from jax.experimental.pallas import tpu as pltpu


# ----------------------------- static geometry -----------------------------
KH = KW = 5
IC1, OC1 = 1, 32
IC2, OC2 = 32, 64
H0 = W0 = 28                              # MNIST-style input implied by module
OH1, OW1 = H0 - KH + 1, W0 - KW + 1       # 24, 24  (conv1 output)
PH1, PW1 = OH1 // 2, OW1 // 2             # 12, 12  (pool1 output)
OH2, OW2 = PH1 - KH + 1, PW1 - KW + 1     # 8, 8    (conv2 output)
PH2, PW2 = OH2 // 2, OW2 // 2             # 4, 4    (pool2 output)

R1 = OH1 // 4                             # 6   conv1 rows per (row mod 4) class
M2 = OH2 // 2                             # 4   conv2 rows per parity class
K1 = KH * W0                              # 140 conv1 matmul K (H-taps folded in)
N1 = OW1 * OC1                            # 768 conv1 matmul N (lane-dense)
HALF1 = PW1 * OC1                         # 384 even/odd conv1-ow lane split
K2 = PW1 * IC2                            # 384 conv2 matmul K (compact pool1)
N2 = OW2 * OC2                            # 512 conv2 matmul N (lane-dense)
NOUT = PW2 * OC2                          # 256 output lanes (lane-dense)

MXU_DTYPE = jnp.bfloat16                  # MXU input dtype (f32 accumulate)


# ------------------------- host-side weight packing ------------------------
def prepare_stem_params(w1, b1, w2, b2):
    """Pack torch-layout conv weights into Toeplitz-structured matmul slabs.

    Lane layouts (the "even/odd" reordering that makes both pools lane-dense):
      conv1 output lane = g1(ow)*32 + oc,  g1(ow) = ow//2      if ow even
                                                  = 12 + ow//2 if ow odd
      conv2 output lane = g2(ow2)*64 + oc, g2(ow2) = ow2//2     if ow2 even
                                                   = 4 + ow2//2 if ow2 odd
    so pool-W is always max(first_half, second_half) of the lane axis.
    """
    w1 = np.asarray(w1, np.float32)       # (32, 1, 5, 5)
    b1 = np.asarray(b1, np.float32)       # (32,)
    w2 = np.asarray(w2, np.float32)       # (64, 32, 5, 5)
    b2 = np.asarray(b2, np.float32)       # (64,)

    # conv1:  out1[(r,b), lane] = x1[(r,b), :] @ a1, with the 5 H-taps folded
    # into K on the host:  x1[(r,b), di*28 + w] = x[b, 4r+k+di, w].
    a1 = np.zeros((K1, N1), np.float32)                     # (140, 768)
    for di in range(KH):
        for ow in range(OW1):
            g = (ow // 2) if ow % 2 == 0 else (PW1 + ow // 2)
            for dj in range(KW):
                a1[di * W0 + ow + dj, g * OC1:(g + 1) * OC1] = w1[:, 0, di, dj]
    b1row = np.tile(b1, PW1)[None, :]                       # (1, 384)

    # conv2 reads the compacted pool1 slab whose lane q = j*32 + ic, where j is
    # the pool1 column (0..11).  No zero K rows remain.
    a2 = np.zeros((KH, K2, N2), np.float32)                 # (5, 384, 512)
    for di in range(KH):
        for ow2 in range(OW2):
            g = (ow2 // 2) if ow2 % 2 == 0 else (PW2 + ow2 // 2)
            for dj in range(KW):
                j = ow2 + dj                                # pool1 column, 0..11
                a2[di, j * IC2:(j + 1) * IC2,
                   g * OC2:(g + 1) * OC2] = w2[:, :, di, dj].T   # (ic, oc)
    b2row = np.tile(b2, PW2)[None, :]                       # (1, 256)

    return dict(
        a1=jnp.asarray(a1, dtype=MXU_DTYPE),                # bf16 (140, 768)
        b1row=jnp.asarray(b1row),                           # f32  (1, 384)
        a2=jnp.asarray(a2, dtype=MXU_DTYPE),                # bf16 (5, 384, 512)
        b2row=jnp.asarray(b2row),                           # f32  (1, 256)
    )


# ------------------------------ fused kernel -------------------------------
def _stem_kernel(x1_ref, a1_ref, b1_ref, a2_ref, b2_ref, o_ref, *, blk):
    # x1_ref: (4, 6, blk, 140) bf16   input, H-tap-unrolled, grouped by row%4
    # a1_ref: (140, 768) bf16, b1_ref: (1, 384) f32
    # a2_ref: (5, 384, 512) bf16, b2_ref: (1, 256) f32
    # o_ref:  (4, blk, 256) f32       pool2 output, lanes = pool2col*64 + oc
    a1 = a1_ref[...]
    b1 = b1_ref[...]
    b2 = b2_ref[...]

    # ---- conv1 (bf16 MXU, f32 acc): one dot per (conv1-row mod 4) class ----
    def conv1(k):
        lhs = x1_ref[k].reshape(R1 * blk, K1)               # (6B, 140) bf16
        return jnp.dot(lhs, a1, preferred_element_type=jnp.float32)  # (6B, 768)

    # ---- pool1 + bias1 (f32), consumed immediately; one bf16 cast each ----
    # H: class-pair max; W: lane-dense halves max (even|odd ow lane layout).
    p1e = jnp.maximum(conv1(0), conv1(1))                   # pool1 rows 0,2,..
    p1e = (jnp.maximum(p1e[:, :HALF1], p1e[:, HALF1:]) + b1).astype(MXU_DTYPE)
    p1o = jnp.maximum(conv1(2), conv1(3))                   # pool1 rows 1,3,..
    p1o = (jnp.maximum(p1o[:, :HALF1], p1o[:, HALF1:]) + b1).astype(MXU_DTYPE)
    # p1e/p1o: (6B, 384) bf16, row index = r*blk + b

    # ---- conv2 (bf16 MXU, f32 acc): rows split by output parity for pool2 ----
    acc_e = None                                            # conv2 rows 0,2,4,6
    acc_o = None                                            # conv2 rows 1,3,5,7
    for di in range(KH):
        h = di // 2
        if di % 2 == 0:
            lhs_e = p1e[h * blk:(h + M2) * blk]
            lhs_o = p1o[h * blk:(h + M2) * blk]
        else:
            lhs_e = p1o[h * blk:(h + M2) * blk]
            lhs_o = p1e[(h + 1) * blk:(h + 1 + M2) * blk]
        a2d = a2_ref[di]                                    # (384, 512) bf16
        te = jnp.dot(lhs_e, a2d, preferred_element_type=jnp.float32)
        to = jnp.dot(lhs_o, a2d, preferred_element_type=jnp.float32)
        acc_e = te if acc_e is None else acc_e + te
        acc_o = to if acc_o is None else acc_o + to         # (4B, 512) f32

    # ---- pool2 + bias2: H parity max, then lane-dense W halves max ---------
    m2 = jnp.maximum(acc_e, acc_o)                          # (4B, 512)
    m2 = jnp.maximum(m2[:, :NOUT], m2[:, NOUT:]) + b2       # (4B, 256)
    o_ref[...] = m2.reshape(PH2, blk, NOUT)


# ------------------------------- forward -----------------------------------
def _pick_batch_block(n):
    """Per-step batch tile (multiple of 8); prefer >=2 grid steps (v7x 2 TCs)."""
    n8 = -(-n // 8) * 8
    for cand in (32, 16):
        if n8 >= 2 * cand:
            return cand
    return 8


@jax.jit
def m2_stem_forward(prep, x_nchw):
    assert x_nchw.shape[1:] == (IC1, H0, W0), x_nchw.shape
    n = x_nchw.shape[0]
    blk = _pick_batch_block(n)
    n_pad = -(-n // blk) * blk
    grid = n_pad // blk

    x = x_nchw[:, 0, :, :].astype(MXU_DTYPE)                # (n, 28, 28) bf16
    if n_pad != n:
        x = jnp.pad(x, ((0, n_pad - n), (0, 0), (0, 0)))

    # Tiny host-side glue: fold the 5 conv1 H-taps into the matmul K dim and
    # group rows by (row mod 4):  x1[k, r, b, di*28 + w] = x[b, 4r + k + di, w]
    rows = (np.arange(4)[:, None, None]
            + 4 * np.arange(R1)[None, :, None]
            + np.arange(KH)[None, None, :])                 # (4, 6, 5)
    x1 = x[:, rows, :]                                      # (n_pad, 4, 6, 5, 28)
    x1 = jnp.transpose(x1, (1, 2, 0, 3, 4)).reshape(4, R1, n_pad, K1)

    out = pl.pallas_call(
        partial(_stem_kernel, blk=blk),
        out_shape=jax.ShapeDtypeStruct((PH2, n_pad, NOUT), jnp.float32),
        grid=(grid,),
        in_specs=[
            pl.BlockSpec((4, R1, blk, K1), lambda i: (0, 0, i, 0)),
            pl.BlockSpec((K1, N1), lambda i: (0, 0)),
            pl.BlockSpec((1, HALF1), lambda i: (0, 0)),
            pl.BlockSpec((KH, K2, N2), lambda i: (0, 0, 0)),
            pl.BlockSpec((1, NOUT), lambda i: (0, 0)),
        ],
        out_specs=pl.BlockSpec((PH2, blk, NOUT), lambda i: (0, i, 0)),
        compiler_params=pltpu.CompilerParams(
            dimension_semantics=("parallel",),
        ),
    )(x1, prep["a1"], prep["b1row"], prep["a2"], prep["b2row"])

    # (4, n_pad, 256) -> (n, 64, 4, 4)  (tiny NHWC->NCHW glue)
    y = out.reshape(PH2, n_pad, PW2, OC2)[:, :n]            # (4, n, 4, 64)
    return jnp.transpose(y, (1, 3, 0, 2))


# ---------------------------- params / reference ---------------------------
def init_params(key):
    k1, k2, k3, k4 = jax.random.split(key, 4)
    w1 = 0.1 * jax.random.normal(k1, (OC1, IC1, KH, KW), jnp.float32)
    b1 = 0.1 * jax.random.normal(k2, (OC1,), jnp.float32)
    w2 = 0.05 * jax.random.normal(k3, (OC2, IC2, KH, KW), jnp.float32)
    b2 = 0.05 * jax.random.normal(k4, (OC2,), jnp.float32)
    return dict(w1=w1, b1=b1, w2=w2, b2=b2)


def _reference(params, x_nchw):
    def conv(x, w, b):
        y = jax.lax.conv_general_dilated(
            x, w, window_strides=(1, 1), padding="VALID",
            dimension_numbers=("NCHW", "OIHW", "NCHW"))
        return y + b.reshape(1, -1, 1, 1)

    def pool(x):
        return jax.lax.reduce_window(
            x, -jnp.inf, jax.lax.max,
            window_dimensions=(1, 1, 2, 2), window_strides=(1, 1, 2, 2),
            padding="VALID")

    y = conv(x_nchw, params["w1"], params["b1"])
    y = pool(y)
    y = conv(y, params["w2"], params["b2"])
    y = pool(y)
    return y


if __name__ == "__main__":
    key = jax.random.PRNGKey(0)
    kx, kp = jax.random.split(key)
    x = jax.random.normal(kx, (2, IC1, H0, W0), jnp.float32)
    params = init_params(kp)
    prep = prepare_stem_params(params["w1"], params["b1"],
                               params["w2"], params["b2"])

    out = m2_stem_forward(prep, x)
    out = jax.block_until_ready(out)
    assert out.shape == (2, OC2, PH2, PW2), out.shape

    ref = _reference(params, x)
    # bf16 MXU inputs for both convs (f32 accumulation) -> loosened tolerance.
    assert jnp.allclose(out, ref, atol=5e-2, rtol=5e-2), \
        float(jnp.max(jnp.abs(out - ref)))

    print("KERNEL_OK")
</pallas_src>

<mosaic_0001>
module attributes {stable_mosaic.version = 11 : i64} {
  func.func @_stem_kernel(%arg0: i32, %arg1: memref<4x6x8x140xbf16, #tpu.memory_space<vmem>>, %arg2: memref<140x768xbf16, #tpu.memory_space<vmem>>, %arg3: memref<1x384xf32, #tpu.memory_space<vmem>>, %arg4: memref<5x384x512xbf16, #tpu.memory_space<vmem>>, %arg5: memref<1x256xf32, #tpu.memory_space<vmem>>, %arg6: memref<4x8x256xf32, #tpu.memory_space<vmem>>) attributes {dimension_semantics = [#tpu.dimension_semantics<parallel>], iteration_bounds = array<i64: 1>, scalar_prefetch = 0 : i64, scratch_operands = 0 : i64, tpu.core_type = #tpu.core_type<tc>, window_params = [{transform_indices = @transform_0, window_bounds = array<i64: 4, 6, 8, 140>}, {pipeline_mode = #tpu.pipeline_mode<synchronous>, transform_indices = @transform_1, window_bounds = array<i64: 140, 768>}, {pipeline_mode = #tpu.pipeline_mode<synchronous>, transform_indices = @transform_2, window_bounds = array<i64: 1, 384>}, {pipeline_mode = #tpu.pipeline_mode<synchronous>, transform_indices = @transform_3, window_bounds = array<i64: 5, 384, 512>}, {pipeline_mode = #tpu.pipeline_mode<synchronous>, transform_indices = @transform_4, window_bounds = array<i64: 1, 256>}, {transform_indices = @transform_5, window_bounds = array<i64: 4, 8, 256>}]} {
    %c0 = arith.constant 0 : index
    %c0_0 = arith.constant 0 : index
    %0 = vector.load %arg2[%c0, %c0_0] : memref<140x768xbf16, #tpu.memory_space<vmem>>, vector<140x768xbf16>
    %c0_1 = arith.constant 0 : index
    %c0_2 = arith.constant 0 : index
    %1 = vector.load %arg3[%c0_1, %c0_2] : memref<1x384xf32, #tpu.memory_space<vmem>>, vector<1x384xf32>
    %c0_3 = arith.constant 0 : index
    %c0_4 = arith.constant 0 : index
    %2 = vector.load %arg5[%c0_3, %c0_4] : memref<1x256xf32, #tpu.memory_space<vmem>>, vector<1x256xf32>
    %c0_5 = arith.constant 0 : index
    %c0_6 = arith.constant 0 : index
    %c0_7 = arith.constant 0 : index
    %c0_8 = arith.constant 0 : index
    %3 = vector.load %arg1[%c0_5, %c0_6, %c0_7, %c0_8] : memref<4x6x8x140xbf16, #tpu.memory_space<vmem>>, vector<1x6x8x140xbf16>
    %4 = vector.shape_cast %3 : vector<1x6x8x140xbf16> to vector<6x8x140xbf16>
    %5 = vector.shape_cast %4 : vector<6x8x140xbf16> to vector<48x140xbf16>
    %cst = arith.constant dense<0.000000e+00> : vector<48x768xf32>
    %6 = tpu.matmul %5, %0, %cst {dimension_numbers = #tpu.dot_dimension_numbers<[1], [0], [0], [1], [0, 0, 1, 1], [], []>} : vector<48x140xbf16>, vector<140x768xbf16>, vector<48x768xf32> -> vector<48x768xf32>
    %c1 = arith.constant 1 : index
    %c0_9 = arith.constant 0 : index
    %c0_10 = arith.constant 0 : index
    %c0_11 = arith.constant 0 : index
    %7 = vector.load %arg1[%c1, %c0_9, %c0_10, %c0_11] : memref<4x6x8x140xbf16, #tpu.memory_space<vmem>>, vector<1x6x8x140xbf16>
    %8 = vector.shape_cast %7 : vector<1x6x8x140xbf16> to vector<6x8x140xbf16>
    %9 = vector.shape_cast %8 : vector<6x8x140xbf16> to vector<48x140xbf16>
    %cst_12 = arith.constant dense<0.000000e+00> : vector<48x768xf32>
    %10 = tpu.matmul %9, %0, %cst_12 {dimension_numbers = #tpu.dot_dimension_numbers<[1], [0], [0], [1], [0, 0, 1, 1], [], []>} : vector<48x140xbf16>, vector<140x768xbf16>, vector<48x768xf32> -> vector<48x768xf32>
    %11 = arith.maximumf %6, %10 : vector<48x768xf32>
    %12 = vector.extract_strided_slice %11 {offsets = [0, 0], sizes = [48, 384], strides = [1, 1]} : vector<48x768xf32> to vector<48x384xf32>
    %13 = vector.extract_strided_slice %11 {offsets = [0, 384], sizes = [48, 384], strides = [1, 1]} : vector<48x768xf32> to vector<48x384xf32>
    %14 = arith.maximumf %12, %13 : vector<48x384xf32>
    %15 = vector.broadcast %1 : vector<1x384xf32> to vector<48x384xf32>
    %16 = arith.addf %14, %15 : vector<48x384xf32>
    %17 = arith.truncf %16 : vector<48x384xf32> to vector<48x384xbf16>
    %c2 = arith.constant 2 : index
    %c0_13 = arith.constant 0 : index
    %c0_14 = arith.constant 0 : index
    %c0_15 = arith.constant 0 : index
    %18 = vector.load %arg1[%c2, %c0_13, %c0_14, %c0_15] : memref<4x6x8x140xbf16, #tpu.memory_space<vmem>>, vector<1x6x8x140xbf16>
    %19 = vector.shape_cast %18 : vector<1x6x8x140xbf16> to vector<6x8x140xbf16>
    %20 = vector.shape_cast %19 : vector<6x8x140xbf16> to vector<48x140xbf16>
    %cst_16 = arith.constant dense<0.000000e+00> : vector<48x768xf32>
    %21 = tpu.matmul %20, %0, %cst_16 {dimension_numbers = #tpu.dot_dimension_numbers<[1], [0], [0], [1], [0, 0, 1, 1], [], []>} : vector<48x140xbf16>, vector<140x768xbf16>, vector<48x768xf32> -> vector<48x768xf32>
    %c3 = arith.constant 3 : index
    %c0_17 = arith.constant 0 : index
    %c0_18 = arith.constant 0 : index
    %c0_19 = arith.constant 0 : index
    %22 = vector.load %arg1[%c3, %c0_17, %c0_18, %c0_19] : memref<4x6x8x140xbf16, #tpu.memory_space<vmem>>, vector<1x6x8x140xbf16>
    %23 = vector.shape_cast %22 : vector<1x6x8x140xbf16> to vector<6x8x140xbf16>
    %24 = vector.shape_cast %23 : vector<6x8x140xbf16> to vector<48x140xbf16>
    %cst_20 = arith.constant dense<0.000000e+00> : vector<48x768xf32>
    %25 = tpu.matmul %24, %0, %cst_20 {dimension_numbers = #tpu.dot_dimension_numbers<[1], [0], [0], [1], [0, 0, 1, 1], [], []>} : vector<48x140xbf16>, vector<140x768xbf16>, vector<48x768xf32> -> vector<48x768xf32>
    %26 = arith.maximumf %21, %25 : vector<48x768xf32>
    %27 = vector.extract_strided_slice %26 {offsets = [0, 0], sizes = [48, 384], strides = [1, 1]} : vector<48x768xf32> to vector<48x384xf32>
    %28 = vector.extract_strided_slice %26 {offsets = [0, 384], sizes = [48, 384], strides = [1, 1]} : vector<48x768xf32> to vector<48x384xf32>
    %29 = arith.maximumf %27, %28 : vector<48x384xf32>
    %30 = vector.broadcast %1 : vector<1x384xf32> to vector<48x384xf32>
    %31 = arith.addf %29, %30 : vector<48x384xf32>
    %32 = arith.truncf %31 : vector<48x384xf32> to vector<48x384xbf16>
    %33 = vector.extract_strided_slice %17 {offsets = [0, 0], sizes = [32, 384], strides = [1, 1]} : vector<48x384xbf16> to vector<32x384xbf16>
    %34 = vector.extract_strided_slice %32 {offsets = [0, 0], sizes = [32, 384], strides = [1, 1]} : vector<48x384xbf16> to vector<32x384xbf16>
    %c0_21 = arith.constant 0 : index
    %c0_22 = arith.constant 0 : index
    %c0_23 = arith.constant 0 : index
    %35 = vector.load %arg4[%c0_21, %c0_22, %c0_23] : memref<5x384x512xbf16, #tpu.memory_space<vmem>>, vector<1x384x512xbf16>
    %36 = vector.shape_cast %35 : vector<1x384x512xbf16> to vector<384x512xbf16>
    %cst_24 = arith.constant dense<0.000000e+00> : vector<32x512xf32>
    %37 = tpu.matmul %33, %36, %cst_24 {dimension_numbers = #tpu.dot_dimension_numbers<[1], [0], [0], [1], [0, 0, 1, 1], [], []>} : vector<32x384xbf16>, vector<384x512xbf16>, vector<32x512xf32> -> vector<32x512xf32>
    %cst_25 = arith.constant dense<0.000000e+00> : vector<32x512xf32>
    %38 = tpu.matmul %34, %36, %cst_25 {dimension_numbers = #tpu.dot_dimension_numbers<[1], [0], [0], [1], [0, 0, 1, 1], [], []>} : vector<32x384xbf16>, vector<384x512xbf16>, vector<32x512xf32> -> vector<32x512xf32>
    %39 = vector.extract_strided_slice %32 {offsets = [0, 0], sizes = [32, 384], strides = [1, 1]} : vector<48x384xbf16> to vector<32x384xbf16>
    %40 = vector.extract_strided_slice %17 {offsets = [8, 0], sizes = [32, 384], strides = [1, 1]} : vector<48x384xbf16> to vector<32x384xbf16>
    %c1_26 = arith.constant 1 : index
    %c0_27 = arith.constant 0 : index
    %c0_28 = arith.constant 0 : index
    %41 = vector.load %arg4[%c1_26, %c0_27, %c0_28] : memref<5x384x512xbf16, #tpu.memory_space<vmem>>, vector<1x384x512xbf16>
    %42 = vector.shape_cast %41 : vector<1x384x512xbf16> to vector<384x512xbf16>
    %cst_29 = arith.constant dense<0.000000e+00> : vector<32x512xf32>
    %43 = tpu.matmul %39, %42, %cst_29 {dimension_numbers = #tpu.dot_dimension_numbers<[1], [0], [0], [1], [0, 0, 1, 1], [], []>} : vector<32x384xbf16>, vector<384x512xbf16>, vector<32x512xf32> -> vector<32x512xf32>
    %cst_30 = arith.constant dense<0.000000e+00> : vector<32x512xf32>
    %44 = tpu.matmul %40, %42, %cst_30 {dimension_numbers = #tpu.dot_dimension_numbers<[1], [0], [0], [1], [0, 0, 1, 1], [], []>} : vector<32x384xbf16>, vector<384x512xbf16>, vector<32x512xf32> -> vector<32x512xf32>
    %45 = arith.addf %37, %43 : vector<32x512xf32>
    %46 = arith.addf %38, %44 : vector<32x512xf32>
    %47 = vector.extract_strided_slice %17 {offsets = [8, 0], sizes = [32, 384], strides = [1, 1]} : vector<48x384xbf16> to vector<32x384xbf16>
    %48 = vector.extract_strided_slice %32 {offsets = [8, 0], sizes = [32, 384], strides = [1, 1]} : vector<48x384xbf16> to vector<32x384xbf16>
    %c2_31 = arith.constant 2 : index
    %c0_32 = arith.constant 0 : index
    %c0_33 = arith.constant 0 : index
    %49 = vector.load %arg4[%c2_31, %c0_32, %c0_33] : memref<5x384x512xbf16, #tpu.memory_space<vmem>>, vector<1x384x512xbf16>
    %50 = vector.shape_cast %49 : vector<1x384x512xbf16> to vector<384x512xbf16>
    %cst_34 = arith.constant dense<0.000000e+00> : vector<32x512xf32>
    %51 = tpu.matmul %47, %50, %cst_34 {dimension_numbers = #tpu.dot_dimension_numbers<[1], [0], [0], [1], [0, 0, 1, 1], [], []>} : vector<32x384xbf16>, vector<384x512xbf16>, vector<32x512xf32> -> vector<32x512xf32>
    %cst_35 = arith.constant dense<0.000000e+00> : vector<32x512xf32>
    %52 = tpu.matmul %48, %50, %cst_35 {dimension_numbers = #tpu.dot_dimension_numbers<[1], [0], [0], [1], [0, 0, 1, 1], [], []>} : vector<32x384xbf16>, vector<384x512xbf16>, vector<32x512xf32> -> vector<32x512xf32>
    %53 = arith.addf %45, %51 : vector<32x512xf32>
    %54 = arith.addf %46, %52 : vector<32x512xf32>
    %55 = vector.extract_strided_slice %32 {offsets = [8, 0], sizes = [32, 384], strides = [1, 1]} : vector<48x384xbf16> to vector<32x384xbf16>
    %56 = vector.extract_strided_slice %17 {offsets = [16, 0], sizes = [32, 384], strides = [1, 1]} : vector<48x384xbf16> to vector<32x384xbf16>
    %c3_36 = arith.constant 3 : index
    %c0_37 = arith.constant 0 : index
    %c0_38 = arith.constant 0 : index
    %57 = vector.load %arg4[%c3_36, %c0_37, %c0_38] : memref<5x384x512xbf16, #tpu.memory_space<vmem>>, vector<1x384x512xbf16>
    %58 = vector.shape_cast %57 : vector<1x384x512xbf16> to vector<384x512xbf16>
    %cst_39 = arith.constant dense<0.000000e+00> : vector<32x512xf32>
    %59 = tpu.matmul %55, %58, %cst_39 {dimension_numbers = #tpu.dot_dimension_numbers<[1], [0], [0], [1], [0, 0, 1, 1], [], []>} : vector<32x384xbf16>, vector<384x512xbf16>, vector<32x512xf32> -> vector<32x512xf32>
    %cst_40 = arith.constant dense<0.000000e+00> : vector<32x512xf32>
    %60 = tpu.matmul %56, %58, %cst_40 {dimension_numbers = #tpu.dot_dimension_numbers<[1], [0], [0], [1], [0, 0, 1, 1], [], []>} : vector<32x384xbf16>, vector<384x512xbf16>, vector<32x512xf32> -> vector<32x512xf32>
    %61 = arith.addf %53, %59 : vector<32x512xf32>
    %62 = arith.addf %54, %60 : vector<32x512xf32>
    %63 = vector.extract_strided_slice %17 {offsets = [16, 0], sizes = [32, 384], strides = [1, 1]} : vector<48x384xbf16> to vector<32x384xbf16>
    %64 = vector.extract_strided_slice %32 {offsets = [16, 0], sizes = [32, 384], strides = [1, 1]} : vector<48x384xbf16> to vector<32x384xbf16>
    %c4 = arith.constant 4 : index
    %c0_41 = arith.constant 0 : index
    %c0_42 = arith.constant 0 : index
    %65 = vector.load %arg4[%c4, %c0_41, %c0_42] : memref<5x384x512xbf16, #tpu.memory_space<vmem>>, vector<1x384x512xbf16>
    %66 = vector.shape_cast %65 : vector<1x384x512xbf16> to vector<384x512xbf16>
    %cst_43 = arith.constant dense<0.000000e+00> : vector<32x512xf32>
    %67 = tpu.matmul %63, %66, %cst_43 {dimension_numbers = #tpu.dot_dimension_numbers<[1], [0], [0], [1], [0, 0, 1, 1], [], []>} : vector<32x384xbf16>, vector<384x512xbf16>, vector<32x512xf32> -> vector<32x512xf32>
    %cst_44 = arith.constant dense<0.000000e+00> : vector<32x512xf32>
    %68 = tpu.matmul %64, %66, %cst_44 {dimension_numbers = #tpu.dot_dimension_numbers<[1], [0], [0], [1], [0, 0, 1, 1], [], []>} : vector<32x384xbf16>, vector<384x512xbf16>, vector<32x512xf32> -> vector<32x512xf32>
    %69 = arith.addf %61, %67 : vector<32x512xf32>
    %70 = arith.addf %62, %68 : vector<32x512xf32>
    %71 = arith.maximumf %69, %70 : vector<32x512xf32>
    %72 = vector.extract_strided_slice %71 {offsets = [0, 0], sizes = [32, 256], strides = [1, 1]} : vector<32x512xf32> to vector<32x256xf32>
    %73 = vector.extract_strided_slice %71 {offsets = [0, 256], sizes = [32, 256], strides = [1, 1]} : vector<32x512xf32> to vector<32x256xf32>
    %74 = arith.maximumf %72, %73 : vector<32x256xf32>
    %75 = vector.broadcast %2 : vector<1x256xf32> to vector<32x256xf32>
    %76 = arith.addf %74, %75 : vector<32x256xf32>
    %77 = vector.shape_cast %76 : vector<32x256xf32> to vector<4x8x256xf32>
    %c0_45 = arith.constant 0 : index
    %c0_46 = arith.constant 0 : index
    %c0_47 = arith.constant 0 : index
    %78 = vector.load %arg6[%c0_45, %c0_46, %c0_47] : memref<4x8x256xf32, #tpu.memory_space<vmem>>, vector<4x8x256xf32>
    tpu.vector_store %arg6[%c0_45, %c0_46, %c0_47], %77 {strides = array<i32>} : memref<4x8x256xf32, #tpu.memory_space<vmem>>, vector<4x8x256xf32>,
    return
  }
  func.func @transform_0(%arg0: i32) -> (i32, i32, i32, i32) {
    %c0_i32 = arith.constant 0 : i32
    %c0_i32_0 = arith.constant 0 : i32
    %c0_i32_1 = arith.constant 0 : i32
    %c0_i32_2 = arith.constant 0 : i32
    return %c0_i32, %c0_i32_0, %arg0, %c0_i32_1 : i32, i32, i32, i32
  }
  func.func @transform_1(%arg0: i32) -> (i32, i32) {
    %c0_i32 = arith.constant 0 : i32
    %c0_i32_0 = arith.constant 0 : i32
    %c0_i32_1 = arith.constant 0 : i32
    return %c0_i32, %c0_i32_0 : i32, i32
  }
  func.func @transform_2(%arg0: i32) -> (i32, i32) {
    %c0_i32 = arith.constant 0 : i32
    %c0_i32_0 = arith.constant 0 : i32
    %c0_i32_1 = arith.constant 0 : i32
    return %c0_i32, %c0_i32_0 : i32, i32
  }
  func.func @transform_3(%arg0: i32) -> (i32, i32, i32) {
    %c0_i32 = arith.constant 0 : i32
    %c0_i32_0 = arith.constant 0 : i32
    %c0_i32_1 = arith.constant 0 : i32
    %c0_i32_2 = arith.constant 0 : i32
    return %c0_i32, %c0_i32_0, %c0_i32_1 : i32, i32, i32
  }
  func.func @transform_4(%arg0: i32) -> (i32, i32) {
    %c0_i32 = arith.constant 0 : i32
    %c0_i32_0 = arith.constant 0 : i32
    %c0_i32_1 = arith.constant 0 : i32
    return %c0_i32, %c0_i32_0 : i32, i32
  }
  func.func @transform_5(%arg0: i32) -> (i32, i32, i32) {
    %c0_i32 = arith.constant 0 : i32
    %c0_i32_0 = arith.constant 0 : i32
    %c0_i32_1 = arith.constant 0 : i32
    return %c0_i32, %arg0, %c0_i32_0 : i32, i32, i32
  }
}

</mosaic_0001>

<llo_original>
// kernel: m2_stem_forward.1
$region0: #{m2_stem_forward.1}
  #allocation0 [shape = 'u32[]', space=smem, size = 0x4, offset = 0x4, fixed_abs, tag = 'smem constant byte address 0x4 - core index']
  #allocation1 [shape = 'u32[144,128]{1,0:T(1,128)}', space=vmem, size = 0x12000, scoped, tag = 'internal scratch']
  %s0 = inlined_call_operand.vmem [shape: bf16[4,6,8,140], index: 0, kind: input, shape index: {}]
  %s1 = inlined_call_operand.hbm [shape: bf16[140,768], index: 1, kind: input, shape index: {}]
  %s2 = inlined_call_operand.hbm [shape: f32[1,384], index: 2, kind: input, shape index: {}]
  %s3 = inlined_call_operand.hbm [shape: bf16[5,384,512], index: 3, kind: input, shape index: {}]
  %s4 = inlined_call_operand.hbm [shape: f32[1,256], index: 4, kind: input, shape index: {}]
  %s5 = inlined_call_operand.vmem [shape: f32[4,8,256], index: 5, kind: output, shape index: {}]
  %s6 = sld [smem:[#allocation0]]
  $region46: #{m2_stem_forward.1} parent=0
    _
  %s8 = ssub.s32 1, %s6
  %s9 = scalar_select 0, %s8, %s6
  $region1: #{m2_stem_forward.1} parent=0
    #allocation2 [shape = 'u8[221184]{0}', space=vmem, size = 0x36000, scoped, tag = 'input window, operand 1, single buffered']
    #allocation3 [shape = 's32[1]{0}', space=sflag, size = 0x4, scoped, tag = 'scoped memory for m2_stem_forward.1']
    #allocation4 [shape = 'u8[1536]{0}', space=vmem, size = 0x800, scoped, tag = 'input window, operand 2, single buffered']
    #allocation5 [shape = 's32[1]{0}', space=sflag, size = 0x4, scoped, tag = 'scoped memory for m2_stem_forward.1']
    #allocation6 [shape = 'u8[1966080]{0}', space=vmem, size = 0x1e0000, scoped, tag = 'input window, operand 3, single buffered']
    #allocation7 [shape = 'u8[1024]{0}', space=vmem, size = 0x400, scoped, tag = 'input window, operand 4, single buffered']
    #allocation8 [shape = 's32[1]{0}', space=sflag, size = 0x4, scoped, tag = 'scoped memory for m2_stem_forward.1']
    %10 = vsyncpa [#allocation3], 0
    %11 = vsyncpa [#allocation5], 0
    %12 = vsyncpa [#allocation8], 0
    // Predicated region
    $region2: #{m2_stem_forward.1} parent=1 // pred_check
      _
    $region3: #{m2_stem_forward.1} parent=1 // pred_check_branch
      %14 = sbr.rel (0) target = $region5
    $region4: #{m2_stem_forward.1} parent=1 // pred_region
      _
    $region5: #{m2_stem_forward.1} parent=1 // pred_fallthru
      _
    // Predicated region
    $region6: #{m2_stem_forward.1} parent=1 // pred_check
      _
    $region7: #{m2_stem_forward.1} parent=1 // pred_check_branch
      %16 = sbr.rel (0) target = $region9
    $region8: #{m2_stem_forward.1} parent=1 // pred_region
      %s18 = ssub.s32 6912, 6912
      %19 = vsyncadd [#allocation3], %s18
      %s20 = sshll.u32 [#allocation2], 4
      %s21 = int_to_ptr.vmem [resolvable:$true] %s20
      %26 = dma.hbm_to_vmem [thread:$0]  %s1, 6912, %s21, [#allocation3], 384, 384, 24
    $region9: #{m2_stem_forward.1} parent=1 // pred_fallthru
      _
    // Predicated region
    $region10: #{m2_stem_forward.1} parent=1 // pred_check
      _
    $region11: #{m2_stem_forward.1} parent=1 // pred_check_branch
      %28 = sbr.rel (0) target = $region13
    $region12: #{m2_stem_forward.1} parent=1 // pred_region
      %s30 = ssub.s32 48, 48
      %31 = vsyncadd [#allocation5], %s30
      %s33 = sshll.u32 [#allocation4], 4
      %s34 = int_to_ptr.vmem [resolvable:$true] %s33
      %36 = dma.hbm_to_vmem [thread:$0]  %s2, 48, %s34, [#allocation5]
    $region13: #{m2_stem_forward.1} parent=1 // pred_fallthru
      _
    // Predicated region
    $region14: #{m2_stem_forward.1} parent=1 // pred_check
      _
    $region15: #{m2_stem_forward.1} parent=1 // pred_check_branch
      %38 = sbr.rel (0) target = $region17
    $region16: #{m2_stem_forward.1} parent=1 // pred_region
      %s40 = ssub.s32 61440, 61440
      %41 = vsyncadd [#allocation5], %s40
      %s42 = sshll.u32 [#allocation6], 4
      %s43 = int_to_ptr.vmem [resolvable:$true] %s42
      %48 = dma.hbm_to_vmem [thread:$0]  %s3, 61440, %s43, [#allocation5], 256, 256, 16
    $region17: #{m2_stem_forward.1} parent=1 // pred_fallthru
      _
    // Predicated region
    $region18: #{m2_stem_forward.1} parent=1 // pred_check
      _
    $region19: #{m2_stem_forward.1} parent=1 // pred_check_branch
      %50 = sbr.rel (0) target = $region21
    $region20: #{m2_stem_forward.1} parent=1 // pred_region
      %s52 = ssub.s32 32, 32
      %53 = vsyncadd [#allocation8], %s52
      %s55 = sshll.u32 [#allocation7], 4
      %s56 = int_to_ptr.vmem [resolvable:$true] %s55
      %58 = dma.hbm_to_vmem [thread:$0]  %s4, 32, %s56, [#allocation8]
    $region21: #{m2_stem_forward.1} parent=1 // pred_fallthru
      _
    // Predicated region
    $region22: #{m2_stem_forward.1} parent=1 // pred_check
      _
    $region23: #{m2_stem_forward.1} parent=1 // pred_check_branch
      %60 = sbr.rel (0) target = $region25
    $region24: #{m2_stem_forward.1} parent=1 // pred_region
      %61 = dma.done [#allocation3], 6912
    $region25: #{m2_stem_forward.1} parent=1 // pred_fallthru
      _
    // Predicated region
    $region26: #{m2_stem_forward.1} parent=1 // pred_check
      _
    $region27: #{m2_stem_forward.1} parent=1 // pred_check_branch
      %63 = sbr.rel (0) target = $region29
    $region28: #{m2_stem_forward.1} parent=1 // pred_region
      %64 = dma.done [#allocation5], 48
    $region29: #{m2_stem_forward.1} parent=1 // pred_fallthru
      _
    // Predicated region
    $region30: #{m2_stem_forward.1} parent=1 // pred_check
      _
    $region31: #{m2_stem_forward.1} parent=1 // pred_check_branch
      %66 = sbr.rel (0) target = $region33
    $region32: #{m2_stem_forward.1} parent=1 // pred_region
      %67 = dma.done [#allocation5], 61440
    $region33: #{m2_stem_forward.1} parent=1 // pred_fallthru
      _
    // Predicated region
    $region34: #{m2_stem_forward.1} parent=1 // pred_check
      _
    $region35: #{m2_stem_forward.1} parent=1 // pred_check_branch
      %69 = sbr.rel (0) target = $region37
    $region36: #{m2_stem_forward.1} parent=1 // pred_region
      %70 = dma.done [#allocation8], 32
    $region37: #{m2_stem_forward.1} parent=1 // pred_fallthru
      _
    %v72 = vld [vmem:[#allocation2] sm:$0xff]
    %v73 = vld [vmem:[#allocation2 + $0x8] sm:$0xff]
    %v74 = vld [vmem:[#allocation2 + $0x10] sm:$0xff]
    %v75 = vld [vmem:[#allocation2 + $0x18] sm:$0xff]
    %v76 = vld [vmem:[#allocation2 + $0x20] sm:$0xff]
    %v77 = vld [vmem:[#allocation2 + $0x28] sm:$0xff]
    %v78 = vld [vmem:[#allocation2 + $0x30] sm:$0xff]
    %v79 = vld [vmem:[#allocation2 + $0x38] sm:$0xff]
    %v80 = vld [vmem:[#allocation2 + $0x40] sm:$0xff]
    %v81 = vld [vmem:[#allocation2 + $0x48] sm:$0xff]
    %v82 = vld [vmem:[#allocation2 + $0x50] sm:$0xff]
    %v83 = vld [vmem:[#allocation2 + $0x58] sm:$0xff]
    %v84 = vld [vmem:[#allocation2 + $0x60] sm:$0xff]
    %v85 = vld [vmem:[#allocation2 + $0x68] sm:$0xff]
    %v86 = vld [vmem:[#allocation2 + $0x70] sm:$0xff]
    %v87 = vld [vmem:[#allocation2 + $0x78] sm:$0xff]
    %v88 = vld [vmem:[#allocation2 + $0x80] sm:$0xff]
    %v89 = vld [vmem:[#allocation2 + $0x88] sm:$0xff]
    %v90 = vld [vmem:[#allocation2 + $0x90] sm:$0xff]
    %v91 = vld [vmem:[#allocation2 + $0x98] sm:$0xff]
    %v92 = vld [vmem:[#allocation2 + $0xa0] sm:$0xff]
    %v93 = vld [vmem:[#allocation2 + $0xa8] sm:$0xff]
    %v94 = vld [vmem:[#allocation2 + $0xb0] sm:$0xff]
    %v95 = vld [vmem:[#allocation2 + $0xb8] sm:$0xff]
    %v96 = vld [vmem:[#allocation2 + $0xc0] sm:$0xff]
    %v97 = vld [vmem:[#allocation2 + $0xc8] sm:$0xff]
    %v98 = vld [vmem:[#allocation2 + $0xd0] sm:$0xff]
    %v99 = vld [vmem:[#allocation2 + $0xd8] sm:$0xff]
    %v100 = vld [vmem:[#allocation2 + $0xe0] sm:$0xff]
    %v101 = vld [vmem:[#allocation2 + $0xe8] sm:$0xff]
    %v102 = vld [vmem:[#allocation2 + $0xf0] sm:$0xff]
    %v103 = vld [vmem:[#allocation2 + $0xf8] sm:$0xff]
    %v104 = vld [vmem:[#allocation2 + $0x100] sm:$0xff]
    %v105 = vld [vmem:[#allocation2 + $0x108] sm:$0xff]
    %v106 = vld [vmem:[#allocation2 + $0x110] sm:$0xff]
    %v107 = vld [vmem:[#allocation2 + $0x118] sm:$0xff]
    %v108 = vld [vmem:[#allocation2 + $0x120] sm:$0xff]
    %v109 = vld [vmem:[#allocation2 + $0x128] sm:$0xff]
    %v110 = vld [vmem:[#allocation2 + $0x130] sm:$0xff]
    %v111 = vld [vmem:[#allocation2 + $0x138] sm:$0xff]
    %v112 = vld [vmem:[#allocation2 + $0x140] sm:$0xff]
    %v113 = vld [vmem:[#allocation2 + $0x148] sm:$0xff]
    %v114 = vld [vmem:[#allocation2 + $0x150] sm:$0xff]
    %v115 = vld [vmem:[#allocation2 + $0x158] sm:$0xff]
    %v116 = vld [vmem:[#allocation2 + $0x160] sm:$0xff]
    %v117 = vld [vmem:[#allocation2 + $0x168] sm:$0xff]
    %v118 = vld [vmem:[#allocation2 + $0x170] sm:$0xff]
    %v119 = vld [vmem:[#allocation2 + $0x178] sm:$0xff]
    %v120 = vld [vmem:[#allocation2 + $0x180] sm:$0xff]
    %v121 = vld [vmem:[#allocation2 + $0x188] sm:$0xff]
    %v122 = vld [vmem:[#allocation2 + $0x190] sm:$0xff]
    %v123 = vld [vmem:[#allocation2 + $0x198] sm:$0x33]
    %v124 = vld [vmem:[#allocation2 + $0x1a0] sm:$0x33]
    %v125 = vld [vmem:[#allocation2 + $0x1a8] sm:$0x33]
    %v126 = vld [vmem:[#allocation4] sm:$0x7]
    %v127 = vld [vmem:[#allocation7] sm:$0x3]
    %v128 = vld [vmem:[%s0] sm:$0xff]
    %v129 = vld [vmem:[%s0 + $0x8] sm:$0xff]
    %v130 = vld [vmem:[%s0 + $0x10] sm:$0xff]
    %v131 = vld [vmem:[%s0 + $0x18] sm:$0xff]
    %v132 = vld [vmem:[%s0 + $0x20] sm:$0xff]
    %v133 = vld [vmem:[%s0 + $0x28] sm:$0xff]
    %v140 = vunpack.c.l.b16 %v128
    %v141 = vunpack.c.h.b16 %v128
    %v142 = vunpack.c.l.b16 %v129
    %v143 = vunpack.c.h.b16 %v129
    %v144 = vunpack.c.l.b16 %v130
    %v145 = vunpack.c.h.b16 %v130
    %v146 = vunpack.c.l.b16 %v131
    %v147 = vunpack.c.h.b16 %v131
    %v148 = vunpack.c.l.b16 %v132
    %v149 = vunpack.c.h.b16 %v132
    %v150 = vunpack.c.l.b16 %v133
    %v151 = vunpack.c.h.b16 %v133
    %v152 = vpack.c.b16 %v142, %v140
    %v153 = vpack.c.b16 %v143, %v141
    %v154 = vpack.c.b16 %v146, %v144
    %v155 = vpack.c.b16 %v147, %v145
    %v156 = vpack.c.b16 %v150, %v148
    %v157 = vpack.c.b16 %v151, %v149
    %v215 = vunpack.c.l.b16 %v72
    %v216 = vunpack.c.h.b16 %v72
    %v217 = vunpack.c.l.b16 %v73
    %v218 = vunpack.c.h.b16 %v73
    %v219 = vunpack.c.l.b16 %v74
    %v220 = vunpack.c.h.b16 %v74
    %v221 = vunpack.c.l.b16 %v75
    %v222 = vunpack.c.h.b16 %v75
    %v223 = vunpack.c.l.b16 %v76
    %v224 = vunpack.c.h.b16 %v76
    %v225 = vunpack.c.l.b16 %v77
    %v226 = vunpack.c.h.b16 %v77
    %v227 = vunpack.c.l.b16 %v78
    %v228 = vunpack.c.h.b16 %v78
    %v229 = vunpack.c.l.b16 %v79
    %v230 = vunpack.c.h.b16 %v79
    %v231 = vunpack.c.l.b16 %v80
    %v232 = vunpack.c.h.b16 %v80
    %v233 = vunpack.c.l.b16 %v81
    %v234 = vunpack.c.h.b16 %v81
    %v235 = vunpack.c.l.b16 %v82
    %v236 = vunpack.c.h.b16 %v82
    %v237 = vunpack.c.l.b16 %v83
    %v238 = vunpack.c.h.b16 %v83
    %v239 = vunpack.c.l.b16 %v84
    %v240 = vunpack.c.h.b16 %v84
    %v241 = vunpack.c.l.b16 %v85
    %v242 = vunpack.c.h.b16 %v85
    %v243 = vunpack.c.l.b16 %v86
    %v244 = vunpack.c.h.b16 %v86
    %v245 = vunpack.c.l.b16 %v87
    %v246 = vunpack.c.h.b16 %v87
    %v247 = vunpack.c.l.b16 %v88
    %v248 = vunpack.c.h.b16 %v88
    %v249 = vunpack.c.l.b16 %v89
    %v250 = vunpack.c.h.b16 %v89
    %v251 = vunpack.c.l.b16 %v90
    %v252 = vunpack.c.h.b16 %v90
    %v253 = vunpack.c.l.b16 %v91
    %v254 = vunpack.c.h.b16 %v91
    %v255 = vunpack.c.l.b16 %v92
    %v256 = vunpack.c.h.b16 %v92
    %v257 = vunpack.c.l.b16 %v93
    %v258 = vunpack.c.h.b16 %v93
    %v259 = vunpack.c.l.b16 %v94
    %v260 = vunpack.c.h.b16 %v94
    %v261 = vunpack.c.l.b16 %v95
    %v262 = vunpack.c.h.b16 %v95
    %v263 = vunpack.c.l.b16 %v96
    %v264 = vunpack.c.h.b16 %v96
    %v265 = vunpack.c.l.b16 %v97
    %v266 = vunpack.c.h.b16 %v97
    %v267 = vunpack.c.l.b16 %v98
    %v268 = vunpack.c.h.b16 %v98
    %v269 = vunpack.c.l.b16 %v99
    %v270 = vunpack.c.h.b16 %v99
    %v271 = vunpack.c.l.b16 %v100
    %v272 = vunpack.c.h.b16 %v100
    %v273 = vunpack.c.l.b16 %v101
    %v274 = vunpack.c.h.b16 %v101
    %v275 = vunpack.c.l.b16 %v102
    %v276 = vunpack.c.h.b16 %v102
    %v277 = vunpack.c.l.b16 %v103
    %v278 = vunpack.c.h.b16 %v103
    %v279 = vunpack.c.l.b16 %v104
    %v280 = vunpack.c.h.b16 %v104
    %v281 = vunpack.c.l.b16 %v105
    %v282 = vunpack.c.h.b16 %v105
    %v283 = vunpack.c.l.b16 %v106
    %v284 = vunpack.c.h.b16 %v106
    %v285 = vunpack.c.l.b16 %v107
    %v286 = vunpack.c.h.b16 %v107
    %v287 = vunpack.c.l.b16 %v108
    %v288 = vunpack.c.h.b16 %v108
    %v289 = vunpack.c.l.b16 %v109
    %v290 = vunpack.c.h.b16 %v109
    %v291 = vunpack.c.l.b16 %v110
    %v292 = vunpack.c.h.b16 %v110
    %v293 = vunpack.c.l.b16 %v111
    %v294 = vunpack.c.h.b16 %v111
    %v295 = vunpack.c.l.b16 %v112
    %v296 = vunpack.c.h.b16 %v112
    %v297 = vunpack.c.l.b16 %v113
    %v298 = vunpack.c.h.b16 %v113
    %v299 = vunpack.c.l.b16 %v114
    %v300 = vunpack.c.h.b16 %v114
    %v301 = vunpack.c.l.b16 %v115
    %v302 = vunpack.c.h.b16 %v115
    %v303 = vunpack.c.l.b16 %v116
    %v304 = vunpack.c.h.b16 %v116
    %v305 = vunpack.c.l.b16 %v117
    %v306 = vunpack.c.h.b16 %v117
    %v307 = vunpack.c.l.b16 %v118
    %v308 = vunpack.c.h.b16 %v118
    %v309 = vunpack.c.l.b16 %v119
    %v310 = vunpack.c.h.b16 %v119
    %v311 = vunpack.c.l.b16 %v120
    %v312 = vunpack.c.h.b16 %v120
    %v313 = vunpack.c.l.b16 %v121
    %v314 = vunpack.c.h.b16 %v121
    %v315 = vunpack.c.l.b16 %v122
    %v316 = vunpack.c.h.b16 %v122
    %v317 = vunpack.c.l.b16 %v123
    %v318 = vunpack.c.h.b16 %v123
    %v319 = vunpack.c.l.b16 %v124
    %v320 = vunpack.c.h.b16 %v124
    %v321 = vunpack.c.l.b16 %v125
    %v322 = vunpack.c.h.b16 %v125
    %v323 = vpack.c.b16 %v221, %v215
    %v324 = vpack.c.b16 %v222, %v216
    %v325 = vpack.c.b16 %v223, %v217
    %v326 = vpack.c.b16 %v224, %v218
    %v327 = vpack.c.b16 %v225, %v219
    %v328 = vpack.c.b16 %v226, %v220
    %v329 = vpack.c.b16 %v233, %v227
    %v330 = vpack.c.b16 %v234, %v228
    %v331 = vpack.c.b16 %v235, %v229
    %v332 = vpack.c.b16 %v236, %v230
    %v333 = vpack.c.b16 %v237, %v231
    %v334 = vpack.c.b16 %v238, %v232
    %v335 = vpack.c.b16 %v245, %v239
    %v336 = vpack.c.b16 %v246, %v240
    %v337 = vpack.c.b16 %v247, %v241
    %v338 = vpack.c.b16 %v248, %v242
    %v339 = vpack.c.b16 %v249, %v243
    %v340 = vpack.c.b16 %v250, %v244
    %v341 = vpack.c.b16 %v257, %v251
    %v342 = vpack.c.b16 %v258, %v252
    %v343 = vpack.c.b16 %v259, %v253
    %v344 = vpack.c.b16 %v260, %v254
    %v345 = vpack.c.b16 %v261, %v255
    %v346 = vpack.c.b16 %v262, %v256
    %v347 = vpack.c.b16 %v269, %v263
    %v348 = vpack.c.b16 %v270, %v264
    %v349 = vpack.c.b16 %v271, %v265
    %v350 = vpack.c.b16 %v272, %v266
    %v351 = vpack.c.b16 %v273, %v267
    %v352 = vpack.c.b16 %v274, %v268
    %v353 = vpack.c.b16 %v281, %v275
    %v354 = vpack.c.b16 %v282, %v276
    %v355 = vpack.c.b16 %v283, %v277
    %v356 = vpack.c.b16 %v284, %v278
    %v357 = vpack.c.b16 %v285, %v279
    %v358 = vpack.c.b16 %v286, %v280
    %v359 = vpack.c.b16 %v293, %v287
    %v360 = vpack.c.b16 %v294, %v288
    %v361 = vpack.c.b16 %v295, %v289
    %v362 = vpack.c.b16 %v296, %v290
    %v363 = vpack.c.b16 %v297, %v291
    %v364 = vpack.c.b16 %v298, %v292
    %v365 = vpack.c.b16 %v305, %v299
    %v366 = vpack.c.b16 %v306, %v300
    %v367 = vpack.c.b16 %v307, %v301
    %v368 = vpack.c.b16 %v308, %v302
    %v369 = vpack.c.b16 %v309, %v303
    %v370 = vpack.c.b16 %v310, %v304
    %v371 = vpack.c.b16 %v317, %v311
    %v372 = vpack.c.b16 %v318, %v312
    %v373 = vpack.c.b16 %v319, %v313
    %v374 = vpack.c.b16 %v320, %v314
    %v375 = vpack.c.b16 %v321, %v315
    %v376 = vpack.c.b16 %v322, %v316
    %vm425 = vcmask 97280
    %v427 = vsel %vm425, %v153, 0
    %v430 = vsel %vm425, %v155, 0
    %v433 = vsel %vm425, %v157, 0
    %vm435 = vcmask 1045504
    %v437 = vsel %vm435, %v371, 0
    %v440 = vsel %vm435, %v372, 0
    %v443 = vsel %vm435, %v373, 0
    %v446 = vsel %vm435, %v374, 0
    %v449 = vsel %vm435, %v375, 0
    %v452 = vsel %vm435, %v376, 0
    %454 = vmatprep.subr.bf16.mxu0 %v324
    %455 = vmatpush1.bf16.msra.mxu0 %v323
    %456 = vmatprep.subr.bf16.mxu0 %v330
    %457 = vmatpush1.bf16.msra.mxu0 %v329
    %458 = vmatprep.subr.bf16.mxu0 %v336
    %459 = vmatpush1.bf16.msra.mxu0 %v335
    %460 = vmatprep.subr.bf16.mxu0 %v342
    %461 = vmatpush1.bf16.msra.mxu0 %v341
    %462 = vmatprep.subr.bf16.mxu0 %v348
    %463 = vmatpush1.bf16.msra.mxu0 %v347
    %464 = vmatprep.subr.bf16.mxu0 %v354
    %465 = vmatpush1.bf16.msra.mxu0 %v353
    %466 = vmatprep.subr.bf16.mxu0 %v360
    %467 = vmatpush1.bf16.msra.mxu0 %v359
    %468 = vmatprep.subr.bf16.mxu0 %v366
    %469 = vmatpush1.bf16.msra.mxu0 %v365
    %470 = vmatprep.subr.bf16.mxu0 %v440
    %471 = vmatpush1.bf16.msra.mxu0 %v437
    %472 = vmatprep.subr.bf16.mxu0 0
    %473 = vmatpush1.bf16.msra.mxu0 0
    %474 = vmatprep.subr.bf16.mxu0 0
    %475 = vmatpush1.bf16.msra.mxu0 0
    %476 = vmatprep.subr.bf16.mxu0 0
    %477 = vmatpush1.bf16.msra.mxu0 0
    %478 = vmatprep.subr.bf16.mxu0 0
    %479 = vmatpush1.bf16.msra.mxu0 0
    %480 = vmatprep.subr.bf16.mxu0 0
    %481 = vmatpush1.bf16.msra.mxu0 0
    %482 = vmatprep.subr.bf16.mxu0 0
    %483 = vmatpush1.bf16.msra.mxu0 0
    %484 = vmatprep.subr.bf16.mxu0 0
    %485 = vmatpush1.bf16.msra.mxu0 0
    %486 = vmatprep.mubr.bf16.mxu0 %v427
    %487 = vmatmul.mubr.bf16.gmra.mrb[0].mxu0 %v152
    %v488 = vpop.f32.mrb[0].mxu0
    %v489 = vadd.f32 0.0, %v488
    %v490 = vpop.f32.mrb[0].mxu0
    %v491 = vadd.f32 0.0, %v490
    %v492 = vpop.f32.mrb[0].mxu0
    %v493 = vadd.f32 0.0, %v492
    %v494 = vpop.f32.mrb[0].mxu0
    %v495 = vadd.f32 0.0, %v494
    %496 = vmatprep.mubr.bf16.mxu0 %v430
    %497 = vmatmul.mubr.bf16.gmra.mrb[0].mxu0 %v154
    %v498 = vpop.f32.mrb[0].mxu0
    %v499 = vadd.f32 0.0, %v498
    %v500 = vpop.f32.mrb[0].mxu0
    %v501 = vadd.f32 0.0, %v500
    %v502 = vpop.f32.mrb[0].mxu0
    %v503 = vadd.f32 0.0, %v502
    %v504 = vpop.f32.mrb[0].mxu0
    %v505 = vadd.f32 0.0, %v504
    %506 = vmatprep.mubr.bf16.mxu0 %v433
    %507 = vmatmul.mubr.bf16.gmra.mrb[0].mxu0 %v156
    %v508 = vpop.f32.mrb[0].mxu0
    %v509 = vadd.f32 0.0, %v508
    %v510 = vpop.f32.mrb[0].mxu0
    %v511 = vadd.f32 0.0, %v510
    %v512 = vpop.f32.mrb[0].mxu0
    %v513 = vadd.f32 0.0, %v512
    %v514 = vpop.f32.mrb[0].mxu0
    %v515 = vadd.f32 0.0, %v514
    %516 = vdwg.mxu0
    %517 = vmatprep.subr.bf16.mxu0 %v326
    %518 = vmatpush1.bf16.msra.mxu0 %v325
    %519 = vmatprep.subr.bf16.mxu0 %v332
    %520 = vmatpush1.bf16.msra.mxu0 %v331
    %521 = vmatprep.subr.bf16.mxu0 %v338
    %522 = vmatpush1.bf16.msra.mxu0 %v337
    %523 = vmatprep.subr.bf16.mxu0 %v344
    %524 = vmatpush1.bf16.msra.mxu0 %v343
    %525 = vmatprep.subr.bf16.mxu0 %v350
    %526 = vmatpush1.bf16.msra.mxu0 %v349
    %527 = vmatprep.subr.bf16.mxu0 %v356
    %528 = vmatpush1.bf16.msra.mxu0 %v355
    %529 = vmatprep.subr.bf16.mxu0 %v362
    %530 = vmatpush1.bf16.msra.mxu0 %v361
    %531 = vmatprep.subr.bf16.mxu0 %v368
    %532 = vmatpush1.bf16.msra.mxu0 %v367
    %533 = vmatprep.subr.bf16.mxu0 %v446
    %534 = vmatpush1.bf16.msra.mxu0 %v443
    %535 = vmatprep.subr.bf16.mxu0 0
    %536 = vmatpush1.bf16.msra.mxu0 0
    %537 = vmatprep.subr.bf16.mxu0 0
    %538 = vmatpush1.bf16.msra.mxu0 0
    %539 = vmatprep.subr.bf16.mxu0 0
    %540 = vmatpush1.bf16.msra.mxu0 0
    %541 = vmatprep.subr.bf16.mxu0 0
    %542 = vmatpush1.bf16.msra.mxu0 0
    %543 = vmatprep.subr.bf16.mxu0 0
    %544 = vmatpush1.bf16.msra.mxu0 0
    %545 = vmatprep.subr.bf16.mxu0 0
    %546 = vmatpush1.bf16.msra.mxu0 0
    %547 = vmatprep.subr.bf16.mxu0 0
    %548 = vmatpush1.bf16.msra.mxu0 0
    %549 = vmatprep.mubr.bf16.mxu0 %v427
    %550 = vmatmul.mubr.bf16.gmra.mrb[0].mxu0 %v152
    %v551 = vpop.f32.mrb[0].mxu0
    %v552 = vadd.f32 0.0, %v551
    %v553 = vpop.f32.mrb[0].mxu0
    %v554 = vadd.f32 0.0, %v553
    %v555 = vpop.f32.mrb[0].mxu0
    %v556 = vadd.f32 0.0, %v555
    %v557 = vpop.f32.mrb[0].mxu0
    %v558 = vadd.f32 0.0, %v557
    %559 = vmatprep.mubr.bf16.mxu0 %v430
    %560 = vmatmul.mubr.bf16.gmra.mrb[0].mxu0 %v154
    %v561 = vpop.f32.mrb[0].mxu0
    %v562 = vadd.f32 0.0, %v561
    %v563 = vpop.f32.mrb[0].mxu0
    %v564 = vadd.f32 0.0, %v563
    %v565 = vpop.f32.mrb[0].mxu0
    %v566 = vadd.f32 0.0, %v565
    %v567 = vpop.f32.mrb[0].mxu0
    %v568 = vadd.f32 0.0, %v567
    %569 = vmatprep.mubr.bf16.mxu0 %v433
    %570 = vmatmul.mubr.bf16.gmra.mrb[0].mxu0 %v156
    %v571 = vpop.f32.mrb[0].mxu0
    %v572 = vadd.f32 0.0, %v571
    %v573 = vpop.f32.mrb[0].mxu0
    %v574 = vadd.f32 0.0, %v573
    %v575 = vpop.f32.mrb[0].mxu0
    %v576 = vadd.f32 0.0, %v575
    %v577 = vpop.f32.mrb[0].mxu0
    %v578 = vadd.f32 0.0, %v577
    %579 = vdwg.mxu0
    %580 = vmatprep.subr.bf16.mxu0 %v328
    %581 = vmatpush1.bf16.msra.mxu0 %v327
    %582 = vmatprep.subr.bf16.mxu0 %v334
    %583 = vmatpush1.bf16.msra.mxu0 %v333
    %584 = vmatprep.subr.bf16.mxu0 %v340
    %585 = vmatpush1.bf16.msra.mxu0 %v339
    %586 = vmatprep.subr.bf16.mxu0 %v346
    %587 = vmatpush1.bf16.msra.mxu0 %v345
    %588 = vmatprep.subr.bf16.mxu0 %v352
    %589 = vmatpush1.bf16.msra.mxu0 %v351
    %590 = vmatprep.subr.bf16.mxu0 %v358
    %591 = vmatpush1.bf16.msra.mxu0 %v357
    %592 = vmatprep.subr.bf16.mxu0 %v364
    %593 = vmatpush1.bf16.msra.mxu0 %v363
    %594 = vmatprep.subr.bf16.mxu0 %v370
    %595 = vmatpush1.bf16.msra.mxu0 %v369
    %596 = vmatprep.subr.bf16.mxu0 %v452
    %597 = vmatpush1.bf16.msra.mxu0 %v449
    %598 = vmatprep.subr.bf16.mxu0 0
    %599 = vmatpush1.bf16.msra.mxu0 0
    %600 = vmatprep.subr.bf16.mxu0 0
    %601 = vmatpush1.bf16.msra.mxu0 0
    %602 = vmatprep.subr.bf16.mxu0 0
    %603 = vmatpush1.bf16.msra.mxu0 0
    %604 = vmatprep.subr.bf16.mxu0 0
    %605 = vmatpush1.bf16.msra.mxu0 0
    %606 = vmatprep.subr.bf16.mxu0 0
    %607 = vmatpush1.bf16.msra.mxu0 0
    %608 = vmatprep.subr.bf16.mxu0 0
    %609 = vmatpush1.bf16.msra.mxu0 0
    %610 = vmatprep.subr.bf16.mxu0 0
    %611 = vmatpush1.bf16.msra.mxu0 0
    %612 = vmatprep.mubr.bf16.mxu0 %v427
    %613 = vmatmul.mubr.bf16.gmra.mrb[0].mxu0 %v152
    %v614 = vpop.f32.mrb[0].mxu0
    %v615 = vadd.f32 0.0, %v614
    %v616 = vpop.f32.mrb[0].mxu0
    %v617 = vadd.f32 0.0, %v616
    %v618 = vpop.f32.mrb[0].mxu0
    %v619 = vadd.f32 0.0, %v618
    %v620 = vpop.f32.mrb[0].mxu0
    %v621 = vadd.f32 0.0, %v620
    %622 = vmatprep.mubr.bf16.mxu0 %v430
    %623 = vmatmul.mubr.bf16.gmra.mrb[0].mxu0 %v154
    %v624 = vpop.f32.mrb[0].mxu0
    %v625 = vadd.f32 0.0, %v624
    %v626 = vpop.f32.mrb[0].mxu0
    %v627 = vadd.f32 0.0, %v626
    %v628 = vpop.f32.mrb[0].mxu0
    %v629 = vadd.f32 0.0, %v628
    %v630 = vpop.f32.mrb[0].mxu0
    %v631 = vadd.f32 0.0, %v630
    %632 = vmatprep.mubr.bf16.mxu0 %v433
    %633 = vmatmul.mubr.bf16.gmra.mrb[0].mxu0 %v156
    %v634 = vpop.f32.mrb[0].mxu0
    %v635 = vadd.f32 0.0, %v634
    %v636 = vpop.f32.mrb[0].mxu0
    %v637 = vadd.f32 0.0, %v636
    %v638 = vpop.f32.mrb[0].mxu0
    %v639 = vadd.f32 0.0, %v638
    %v640 = vpop.f32.mrb[0].mxu0
    %v641 = vadd.f32 0.0, %v640
    %642 = vdwg.mxu0
    %s643 = scalar_lea.vmem %s0, 48
    %v644 = vld [vmem:[%s643] sm:$0xff]
    %v645 = vld [vmem:[%s643 + $0x8] sm:$0xff]
    %v646 = vld [vmem:[%s643 + $0x10] sm:$0xff]
    %v647 = vld [vmem:[%s643 + $0x18] sm:$0xff]
    %v648 = vld [vmem:[%s643 + $0x20] sm:$0xff]
    %v649 = vld [vmem:[%s643 + $0x28] sm:$0xff]
    %v656 = vunpack.c.l.b16 %v644
    %v657 = vunpack.c.h.b16 %v644
    %v658 = vunpack.c.l.b16 %v645
    %v659 = vunpack.c.h.b16 %v645
    %v660 = vunpack.c.l.b16 %v646
    %v661 = vunpack.c.h.b16 %v646
    %v662 = vunpack.c.l.b16 %v647
    %v663 = vunpack.c.h.b16 %v647
    %v664 = vunpack.c.l.b16 %v648
    %v665 = vunpack.c.h.b16 %v648
    %v666 = vunpack.c.l.b16 %v649
    %v667 = vunpack.c.h.b16 %v649
    %v668 = vpack.c.b16 %v658, %v656
    %v669 = vpack.c.b16 %v659, %v657
    %v670 = vpack.c.b16 %v662, %v660
    %v671 = vpack.c.b16 %v663, %v661
    %v672 = vpack.c.b16 %v666, %v664
    %v673 = vpack.c.b16 %v667, %v665
    %v678 = vsel %vm425, %v669, 0
    %v681 = vsel %vm425, %v671, 0
    %v684 = vsel %vm425, %v673, 0
    %686 = vmatprep.subr.bf16.mxu0 %v324
    %687 = vmatpush1.bf16.msra.mxu0 %v323
    %688 = vmatprep.subr.bf16.mxu0 %v330
    %689 = vmatpush1.bf16.msra.mxu0 %v329
    %690 = vmatprep.subr.bf16.mxu0 %v336
    %691 = vmatpush1.bf16.msra.mxu0 %v335
    %692 = vmatprep.subr.bf16.mxu0 %v342
    %693 = vmatpush1.bf16.msra.mxu0 %v341
    %694 = vmatprep.subr.bf16.mxu0 %v348
    %695 = vmatpush1.bf16.msra.mxu0 %v347
    %696 = vmatprep.subr.bf16.mxu0 %v354
    %697 = vmatpush1.bf16.msra.mxu0 %v353
    %698 = vmatprep.subr.bf16.mxu0 %v360
    %699 = vmatpush1.bf16.msra.mxu0 %v359
    %700 = vmatprep.subr.bf16.mxu0 %v366
    %701 = vmatpush1.bf16.msra.mxu0 %v365
    %702 = vmatprep.subr.bf16.mxu0 %v440
    %703 = vmatpush1.bf16.msra.mxu0 %v437
    %704 = vmatprep.subr.bf16.mxu0 0
    %705 = vmatpush1.bf16.msra.mxu0 0
    %706 = vmatprep.subr.bf16.mxu0 0
    %707 = vmatpush1.bf16.msra.mxu0 0
    %708 = vmatprep.subr.bf16.mxu0 0
    %709 = vmatpush1.bf16.msra.mxu0 0
    %710 = vmatprep.subr.bf16.mxu0 0
    %711 = vmatpush1.bf16.msra.mxu0 0
    %712 = vmatprep.subr.bf16.mxu0 0
    %713 = vmatpush1.bf16.msra.mxu0 0
    %714 = vmatprep.subr.bf16.mxu0 0
    %715 = vmatpush1.bf16.msra.mxu0 0
    %716 = vmatprep.subr.bf16.mxu0 0
    %717 = vmatpush1.bf16.msra.mxu0 0
    %718 = vmatprep.mubr.bf16.mxu0 %v678
    %719 = vmatmul.mubr.bf16.gmra.mrb[0].mxu0 %v668
    %v720 = vpop.f32.mrb[0].mxu0
    %v721 = vadd.f32 0.0, %v720
    %v722 = vpop.f32.mrb[0].mxu0
    %v723 = vadd.f32 0.0, %v722
    %v724 = vpop.f32.mrb[0].mxu0
    %v725 = vadd.f32 0.0, %v724
    %v726 = vpop.f32.mrb[0].mxu0
    %v727 = vadd.f32 0.0, %v726
    %728 = vmatprep.mubr.bf16.mxu0 %v681
    %729 = vmatmul.mubr.bf16.gmra.mrb[0].mxu0 %v670
    %v730 = vpop.f32.mrb[0].mxu0
    %v731 = vadd.f32 0.0, %v730
    %v732 = vpop.f32.mrb[0].mxu0
    %v733 = vadd.f32 0.0, %v732
    %v734 = vpop.f32.mrb[0].mxu0
    %v735 = vadd.f32 0.0, %v734
    %v736 = vpop.f32.mrb[0].mxu0
    %v737 = vadd.f32 0.0, %v736
    %738 = vmatprep.mubr.bf16.mxu0 %v684
    %739 = vmatmul.mubr.bf16.gmra.mrb[0].mxu0 %v672
    %v740 = vpop.f32.mrb[0].mxu0
    %v741 = vadd.f32 0.0, %v740
    %v742 = vpop.f32.mrb[0].mxu0
    %v743 = vadd.f32 0.0, %v742
    %v744 = vpop.f32.mrb[0].mxu0
    %v745 = vadd.f32 0.0, %v744
    %v746 = vpop.f32.mrb[0].mxu0
    %v747 = vadd.f32 0.0, %v746
    %748 = vdwg.mxu0
    %749 = vmatprep.subr.bf16.mxu0 %v326
    %750 = vmatpush1.bf16.msra.mxu0 %v325
    %751 = vmatprep.subr.bf16.mxu0 %v332
    %752 = vmatpush1.bf16.msra.mxu0 %v331
    %753 = vmatprep.subr.bf16.mxu0 %v338
    %754 = vmatpush1.bf16.msra.mxu0 %v337
    %755 = vmatprep.subr.bf16.mxu0 %v344
    %756 = vmatpush1.bf16.msra.mxu0 %v343
    %757 = vmatprep.subr.bf16.mxu0 %v350
    %758 = vmatpush1.bf16.msra.mxu0 %v349
    %759 = vmatprep.subr.bf16.mxu0 %v356
    %760 = vmatpush1.bf16.msra.mxu0 %v355
    %761 = vmatprep.subr.bf16.mxu0 %v362
    %762 = vmatpush1.bf16.msra.mxu0 %v361
    %763 = vmatprep.subr.bf16.mxu0 %v368
    %764 = vmatpush1.bf16.msra.mxu0 %v367
    %765 = vmatprep.subr.bf16.mxu0 %v446
    %766 = vmatpush1.bf16.msra.mxu0 %v443
    %767 = vmatprep.subr.bf16.mxu0 0
    %768 = vmatpush1.bf16.msra.mxu0 0
    %769 = vmatprep.subr.bf16.mxu0 0
    %770 = vmatpush1.bf16.msra.mxu0 0
    %771 = vmatprep.subr.bf16.mxu0 0
    %772 = vmatpush1.bf16.msra.mxu0 0
    %773 = vmatprep.subr.bf16.mxu0 0
    %774 = vmatpush1.bf16.msra.mxu0 0
    %775 = vmatprep.subr.bf16.mxu0 0
    %776 = vmatpush1.bf16.msra.mxu0 0
    %777 = vmatprep.subr.bf16.mxu0 0
    %778 = vmatpush1.bf16.msra.mxu0 0
    %779 = vmatprep.subr.bf16.mxu0 0
    %780 = vmatpush1.bf16.msra.mxu0 0
    %781 = vmatprep.mubr.bf16.mxu0 %v678
    %782 = vmatmul.mubr.bf16.gmra.mrb[0].mxu0 %v668
    %v783 = vpop.f32.mrb[0].mxu0
    %v784 = vadd.f32 0.0, %v783
    %v785 = vpop.f32.mrb[0].mxu0
    %v786 = vadd.f32 0.0, %v785
    %v787 = vpop.f32.mrb[0].mxu0
    %v788 = vadd.f32 0.0, %v787
    %v789 = vpop.f32.mrb[0].mxu0
    %v790 = vadd.f32 0.0, %v789
    %791 = vmatprep.mubr.bf16.mxu0 %v681
    %792 = vmatmul.mubr.bf16.gmra.mrb[0].mxu0 %v670
    %v793 = vpop.f32.mrb[0].mxu0
    %v794 = vadd.f32 0.0, %v793
    %v795 = vpop.f32.mrb[0].mxu0
    %v796 = vadd.f32 0.0, %v795
    %v797 = vpop.f32.mrb[0].mxu0
    %v798 = vadd.f32 0.0, %v797
    %v799 = vpop.f32.mrb[0].mxu0
    %v800 = vadd.f32 0.0, %v799
    %801 = vmatprep.mubr.bf16.mxu0 %v684
    %802 = vmatmul.mubr.bf16.gmra.mrb[0].mxu0 %v672
    %v803 = vpop.f32.mrb[0].mxu0
    %v804 = vadd.f32 0.0, %v803
    %v805 = vpop.f32.mrb[0].mxu0
    %v806 = vadd.f32 0.0, %v805
    %v807 = vpop.f32.mrb[0].mxu0
    %v808 = vadd.f32 0.0, %v807
    %v809 = vpop.f32.mrb[0].mxu0
    %v810 = vadd.f32 0.0, %v809
    %811 = vdwg.mxu0
    %812 = vmatprep.subr.bf16.mxu0 %v328
    %813 = vmatpush1.bf16.msra.mxu0 %v327
    %814 = vmatprep.subr.bf16.mxu0 %v334
    %815 = vmatpush1.bf16.msra.mxu0 %v333
    %816 = vmatprep.subr.bf16.mxu0 %v340
    %817 = vmatpush1.bf16.msra.mxu0 %v339
    %818 = vmatprep.subr.bf16.mxu0 %v346
    %819 = vmatpush1.bf16.msra.mxu0 %v345
    %820 = vmatprep.subr.bf16.mxu0 %v352
    %821 = vmatpush1.bf16.msra.mxu0 %v351
    %822 = vmatprep.subr.bf16.mxu0 %v358
    %823 = vmatpush1.bf16.msra.mxu0 %v357
    %824 = vmatprep.subr.bf16.mxu0 %v364
    %825 = vmatpush1.bf16.msra.mxu0 %v363
    %826 = vmatprep.subr.bf16.mxu0 %v370
    %827 = vmatpush1.bf16.msra.mxu0 %v369
    %828 = vmatprep.subr.bf16.mxu0 %v452
    %829 = vmatpush1.bf16.msra.mxu0 %v449
    %830 = vmatprep.subr.bf16.mxu0 0
    %831 = vmatpush1.bf16.msra.mxu0 0
    %832 = vmatprep.subr.bf16.mxu0 0
    %833 = vmatpush1.bf16.msra.mxu0 0
    %834 = vmatprep.subr.bf16.mxu0 0
    %835 = vmatpush1.bf16.msra.mxu0 0
    %836 = vmatprep.subr.bf16.mxu0 0
    %837 = vmatpush1.bf16.msra.mxu0 0
    %838 = vmatprep.subr.bf16.mxu0 0
    %839 = vmatpush1.bf16.msra.mxu0 0
    %840 = vmatprep.subr.bf16.mxu0 0
    %841 = vmatpush1.bf16.msra.mxu0 0
    %842 = vmatprep.subr.bf16.mxu0 0
    %843 = vmatpush1.bf16.msra.mxu0 0
    %844 = vmatprep.mubr.bf16.mxu0 %v678
    %845 = vmatmul.mubr.bf16.gmra.mrb[0].mxu0 %v668
    %v846 = vpop.f32.mrb[0].mxu0
    %v847 = vadd.f32 0.0, %v846
    %v848 = vpop.f32.mrb[0].mxu0
    %v849 = vadd.f32 0.0, %v848
    %v850 = vpop.f32.mrb[0].mxu0
    %v851 = vadd.f32 0.0, %v850
    %v852 = vpop.f32.mrb[0].mxu0
    %v853 = vadd.f32 0.0, %v852
    %854 = vmatprep.mubr.bf16.mxu0 %v681
    %855 = vmatmul.mubr.bf16.gmra.mrb[0].mxu0 %v670
    %v856 = vpop.f32.mrb[0].mxu0
    %v857 = vadd.f32 0.0, %v856
    %v858 = vpop.f32.mrb[0].mxu0
    %v859 = vadd.f32 0.0, %v858
    %v860 = vpop.f32.mrb[0].mxu0
    %v861 = vadd.f32 0.0, %v860
    %v862 = vpop.f32.mrb[0].mxu0
    %v863 = vadd.f32 0.0, %v862
    %864 = vmatprep.mubr.bf16.mxu0 %v684
    %865 = vmatmul.mubr.bf16.gmra.mrb[0].mxu0 %v672
    %v866 = vpop.f32.mrb[0].mxu0
    %v867 = vadd.f32 0.0, %v866
    %v868 = vpop.f32.mrb[0].mxu0
    %v869 = vadd.f32 0.0, %v868
    %v870 = vpop.f32.mrb[0].mxu0
    %v871 = vadd.f32 0.0, %v870
    %v872 = vpop.f32.mrb[0].mxu0
    %v873 = vadd.f32 0.0, %v872
    %874 = vdwg.mxu0
    %v875 = vmax.f32 %v489, %v721
    %v876 = vmax.f32 %v491, %v723
    %v877 = vmax.f32 %v552, %v784
    %v878 = vmax.f32 %v554, %v786
    %v879 = vmax.f32 %v615, %v847
    %v880 = vmax.f32 %v617, %v849
    %v881 = vmax.f32 %v493, %v725
    %v882 = vmax.f32 %v495, %v727
    %v883 = vmax.f32 %v556, %v788
    %v884 = vmax.f32 %v558, %v790
    %v885 = vmax.f32 %v619, %v851
    %v886 = vmax.f32 %v621, %v853
    %v887 = vmax.f32 %v499, %v731
    %v888 = vmax.f32 %v501, %v733
    %v889 = vmax.f32 %v562, %v794
    %v890 = vmax.f32 %v564, %v796
    %v891 = vmax.f32 %v625, %v857
    %v892 = vmax.f32 %v627, %v859
    %v893 = vmax.f32 %v503, %v735
    %v894 = vmax.f32 %v505, %v737
    %v895 = vmax.f32 %v566, %v798
    %v896 = vmax.f32 %v568, %v800
    %v897 = vmax.f32 %v629, %v861
    %v898 = vmax.f32 %v631, %v863
    %v899 = vmax.f32 %v509, %v741
    %v900 = vmax.f32 %v511, %v743
    %v901 = vmax.f32 %v572, %v804
    %v902 = vmax.f32 %v574, %v806
    %v903 = vmax.f32 %v635, %v867
    %v904 = vmax.f32 %v637, %v869
    %v905 = vmax.f32 %v513, %v745
    %v906 = vmax.f32 %v515, %v747
    %v907 = vmax.f32 %v576, %v808
    %v908 = vmax.f32 %v578, %v810
    %v909 = vmax.f32 %v639, %v871
    %v910 = vmax.f32 %v641, %v873
    %v911 = vmax.f32 %v875, %v878
    %v912 = vmax.f32 %v876, %v879
    %v913 = vmax.f32 %v877, %v880
    %v914 = vmax.f32 %v881, %v884
    %v915 = vmax.f32 %v882, %v885
    %v916 = vmax.f32 %v883, %v886
    %v917 = vmax.f32 %v887, %v890
    %v918 = vmax.f32 %v888, %v891
    %v919 = vmax.f32 %v889, %v892
    %v920 = vmax.f32 %v893, %v896
    %v921 = vmax.f32 %v894, %v897
    %v922 = vmax.f32 %v895, %v898
    %v923 = vmax.f32 %v899, %v902
    %v924 = vmax.f32 %v900, %v903
    %v925 = vmax.f32 %v901, %v904
    %v926 = vmax.f32 %v905, %v908
    %v927 = vmax.f32 %v906, %v909
    %v928 = vmax.f32 %v907, %v910
    %v930 = vlaneseq
    %v931 = vshrl.u32 %v930, 7
    %v932 = vsub.s32 0, %v931
    %v933 = vrot.slane %v126, %v932
    %v934 = vlaneseq
    %v935 = vshrl.u32 %v934, 7
    %v936 = vsub.s32 1, %v935
    %v937 = vrot.slane %v126, %v936
    %v938 = vlaneseq
    %v939 = vshrl.u32 %v938, 7
    %v940 = vsub.s32 2, %v939
    %v941 = vrot.slane %v126, %v940
    %v945 = vadd.f32 %v911, %v933
    %v946 = vadd.f32 %v912, %v937
    %v947 = vadd.f32 %v913, %v941
    %v948 = vadd.f32 %v914, %v933
    %v949 = vadd.f32 %v915, %v937
    %v950 = vadd.f32 %v916, %v941
    %v951 = vadd.f32 %v917, %v933
    %v952 = vadd.f32 %v918, %v937
    %v953 = vadd.f32 %v919, %v941
    %v954 = vadd.f32 %v920, %v933
    %v955 = vadd.f32 %v921, %v937
    %v956 = vadd.f32 %v922, %v941
    %v957 = vadd.f32 %v923, %v933
    %v958 = vadd.f32 %v924, %v937
    %v959 = vadd.f32 %v925, %v941
    %v960 = vadd.f32 %v926, %v933
    %v961 = vadd.f32 %v927, %v937
    %v962 = vadd.f32 %v928, %v941
    %v963 = vpack.c.bf16 %v948, %v945
    %v964 = vpack.c.bf16 %v949, %v946
    %v965 = vpack.c.bf16 %v950, %v947
    %v966 = vpack.c.bf16 %v954, %v951
    %v967 = vpack.c.bf16 %v955, %v952
    %v968 = vpack.c.bf16 %v956, %v953
    %v969 = vpack.c.bf16 %v960, %v957
    %v970 = vpack.c.bf16 %v961, %v958
    %v971 = vpack.c.bf16 %v962, %v959
    %s972 = scalar_lea.vmem %s0, 96
    %v973 = vld [vmem:[%s972] sm:$0xff]
    %v974 = vld [vmem:[%s972 + $0x8] sm:$0xff]
    %v975 = vld [vmem:[%s972 + $0x10] sm:$0xff]
    %v976 = vld [vmem:[%s972 + $0x18] sm:$0xff]
    %v977 = vld [vmem:[%s972 + $0x20] sm:$0xff]
    %v978 = vld [vmem:[%s972 + $0x28] sm:$0xff]
    %v985 = vunpack.c.l.b16 %v973
    %v986 = vunpack.c.h.b16 %v973
    %v987 = vunpack.c.l.b16 %v974
    %v988 = vunpack.c.h.b16 %v974
    %v989 = vunpack.c.l.b16 %v975
    %v990 = vunpack.c.h.b16 %v975
    %v991 = vunpack.c.l.b16 %v976
    %v992 = vunpack.c.h.b16 %v976
    %v993 = vunpack.c.l.b16 %v977
    %v994 = vunpack.c.h.b16 %v977
    %v995 = vunpack.c.l.b16 %v978
    %v996 = vunpack.c.h.b16 %v978
    %v997 = vpack.c.b16 %v987, %v985
    %v998 = vpack.c.b16 %v988, %v986
    %v999 = vpack.c.b16 %v991, %v989
    %v1000 = vpack.c.b16 %v992, %v990
    %v1001 = vpack.c.b16 %v995, %v993
    %v1002 = vpack.c.b16 %v996, %v994
    %v1007 = vsel %vm425, %v998, 0
    %v1010 = vsel %vm425, %v1000, 0
    %v1013 = vsel %vm425, %v1002, 0
    %1015 = vmatprep.subr.bf16.mxu0 %v324
    %1016 = vmatpush1.bf16.msra.mxu0 %v323
    %1017 = vmatprep.subr.bf16.mxu0 %v330
    %1018 = vmatpush1.bf16.msra.mxu0 %v329
    %1019 = vmatprep.subr.bf16.mxu0 %v336
    %1020 = vmatpush1.bf16.msra.mxu0 %v335
    %1021 = vmatprep.subr.bf16.mxu0 %v342
    %1022 = vmatpush1.bf16.msra.mxu0 %v341
    %1023 = vmatprep.subr.bf16.mxu0 %v348
    %1024 = vmatpush1.bf16.msra.mxu0 %v347
    %1025 = vmatprep.subr.bf16.mxu0 %v354
    %1026 = vmatpush1.bf16.msra.mxu0 %v353
    %1027 = vmatprep.subr.bf16.mxu0 %v360
    %1028 = vmatpush1.bf16.msra.mxu0 %v359
    %1029 = vmatprep.subr.bf16.mxu0 %v366
    %1030 = vmatpush1.bf16.msra.mxu0 %v365
    %1031 = vmatprep.subr.bf16.mxu0 %v440
    %1032 = vmatpush1.bf16.msra.mxu0 %v437
    %1033 = vmatprep.subr.bf16.mxu0 0
    %1034 = vmatpush1.bf16.msra.mxu0 0
    %1035 = vmatprep.subr.bf16.mxu0 0
    %1036 = vmatpush1.bf16.msra.mxu0 0
    %1037 = vmatprep.subr.bf16.mxu0 0
    %1038 = vmatpush1.bf16.msra.mxu0 0
    %1039 = vmatprep.subr.bf16.mxu0 0
    %1040 = vmatpush1.bf16.msra.mxu0 0
    %1041 = vmatprep.subr.bf16.mxu0 0
    %1042 = vmatpush1.bf16.msra.mxu0 0
    %1043 = vmatprep.subr.bf16.mxu0 0
    %1044 = vmatpush1.bf16.msra.mxu0 0
    %1045 = vmatprep.subr.bf16.mxu0 0
    %1046 = vmatpush1.bf16.msra.mxu0 0
    %1047 = vmatprep.mubr.bf16.mxu0 %v1007
    %1048 = vmatmul.mubr.bf16.gmra.mrb[0].mxu0 %v997
    %v1049 = vpop.f32.mrb[0].mxu0
    %v1050 = vadd.f32 0.0, %v1049
    %v1051 = vpop.f32.mrb[0].mxu0
    %v1052 = vadd.f32 0.0, %v1051
    %v1053 = vpop.f32.mrb[0].mxu0
    %v1054 = vadd.f32 0.0, %v1053
    %v1055 = vpop.f32.mrb[0].mxu0
    %v1056 = vadd.f32 0.0, %v1055
    %1057 = vmatprep.mubr.bf16.mxu0 %v1010
    %1058 = vmatmul.mubr.bf16.gmra.mrb[0].mxu0 %v999
    %v1059 = vpop.f32.mrb[0].mxu0
    %v1060 = vadd.f32 0.0, %v1059
    %v1061 = vpop.f32.mrb[0].mxu0
    %v1062 = vadd.f32 0.0, %v1061
    %v1063 = vpop.f32.mrb[0].mxu0
    %v1064 = vadd.f32 0.0, %v1063
    %v1065 = vpop.f32.mrb[0].mxu0
    %v1066 = vadd.f32 0.0, %v1065
    %1067 = vmatprep.mubr.bf16.mxu0 %v1013
    %1068 = vmatmul.mubr.bf16.gmra.mrb[0].mxu0 %v1001
    %v1069 = vpop.f32.mrb[0].mxu0
    %v1070 = vadd.f32 0.0, %v1069
    %v1071 = vpop.f32.mrb[0].mxu0
    %v1072 = vadd.f32 0.0, %v1071
    %v1073 = vpop.f32.mrb[0].mxu0
    %v1074 = vadd.f32 0.0, %v1073
    %v1075 = vpop.f32.mrb[0].mxu0
    %v1076 = vadd.f32 0.0, %v1075
    %1077 = vdwg.mxu0
    %1078 = vmatprep.subr.bf16.mxu0 %v326
    %1079 = vmatpush1.bf16.msra.mxu0 %v325
    %1080 = vmatprep.subr.bf16.mxu0 %v332
    %1081 = vmatpush1.bf16.msra.mxu0 %v331
    %1082 = vmatprep.subr.bf16.mxu0 %v338
    %1083 = vmatpush1.bf16.msra.mxu0 %v337
    %1084 = vmatprep.subr.bf16.mxu0 %v344
    %1085 = vmatpush1.bf16.msra.mxu0 %v343
    %1086 = vmatprep.subr.bf16.mxu0 %v350
    %1087 = vmatpush1.bf16.msra.mxu0 %v349
    %1088 = vmatprep.subr.bf16.mxu0 %v356
    %1089 = vmatpush1.bf16.msra.mxu0 %v355
    %1090 = vmatprep.subr.bf16.mxu0 %v362
    %1091 = vmatpush1.bf16.msra.mxu0 %v361
    %1092 = vmatprep.subr.bf16.mxu0 %v368
    %1093 = vmatpush1.bf16.msra.mxu0 %v367
    %1094 = vmatprep.subr.bf16.mxu0 %v446
    %1095 = vmatpush1.bf16.msra.mxu0 %v443
    %1096 = vmatprep.subr.bf16.mxu0 0
    %1097 = vmatpush1.bf16.msra.mxu0 0
    %1098 = vmatprep.subr.bf16.mxu0 0
    %1099 = vmatpush1.bf16.msra.mxu0 0
    %1100 = vmatprep.subr.bf16.mxu0 0
    %1101 = vmatpush1.bf16.msra.mxu0 0
    %1102 = vmatprep.subr.bf16.mxu0 0
    %1103 = vmatpush1.bf16.msra.mxu0 0
    %1104 = vmatprep.subr.bf16.mxu0 0
    %1105 = vmatpush1.bf16.msra.mxu0 0
    %1106 = vmatprep.subr.bf16.mxu0 0
    %1107 = vmatpush1.bf16.msra.mxu0 0
    %1108 = vmatprep.subr.bf16.mxu0 0
    %1109 = vmatpush1.bf16.msra.mxu0 0
    %1110 = vmatprep.mubr.bf16.mxu0 %v1007
    %1111 = vmatmul.mubr.bf16.gmra.mrb[0].mxu0 %v997
    %v1112 = vpop.f32.mrb[0].mxu0
    %v1113 = vadd.f32 0.0, %v1112
    %v1114 = vpop.f32.mrb[0].mxu0
    %v1115 = vadd.f32 0.0, %v1114
    %v1116 = vpop.f32.mrb[0].mxu0
    %v1117 = vadd.f32 0.0, %v1116
    %v1118 = vpop.f32.mrb[0].mxu0
    %v1119 = vadd.f32 0.0, %v1118
    %1120 = vmatprep.mubr.bf16.mxu0 %v1010
    %1121 = vmatmul.mubr.bf16.gmra.mrb[0].mxu0 %v999
    %v1122 = vpop.f32.mrb[0].mxu0
    %v1123 = vadd.f32 0.0, %v1122
    %v1124 = vpop.f32.mrb[0].mxu0
    %v1125 = vadd.f32 0.0, %v1124
    %v1126 = vpop.f32.mrb[0].mxu0
    %v1127 = vadd.f32 0.0, %v1126
    %v1128 = vpop.f32.mrb[0].mxu0
    %v1129 = vadd.f32 0.0, %v1128
    %1130 = vmatprep.mubr.bf16.mxu0 %v1013
    %1131 = vmatmul.mubr.bf16.gmra.mrb[0].mxu0 %v1001
    %v1132 = vpop.f32.mrb[0].mxu0
    %v1133 = vadd.f32 0.0, %v1132
    %v1134 = vpop.f32.mrb[0].mxu0
    %v1135 = vadd.f32 0.0, %v1134
    %v1136 = vpop.f32.mrb[0].mxu0
    %v1137 = vadd.f32 0.0, %v1136
    %v1138 = vpop.f32.mrb[0].mxu0
    %v1139 = vadd.f32 0.0, %v1138
    %1140 = vdwg.mxu0
    %1141 = vmatprep.subr.bf16.mxu0 %v328
    %1142 = vmatpush1.bf16.msra.mxu0 %v327
    %1143 = vmatprep.subr.bf16.mxu0 %v334
    %1144 = vmatpush1.bf16.msra.mxu0 %v333
    %1145 = vmatprep.subr.bf16.mxu0 %v340
    %1146 = vmatpush1.bf16.msra.mxu0 %v339
    %1147 = vmatprep.subr.bf16.mxu0 %v346
    %1148 = vmatpush1.bf16.msra.mxu0 %v345
    %1149 = vmatprep.subr.bf16.mxu0 %v352
    %1150 = vmatpush1.bf16.msra.mxu0 %v351
    %1151 = vmatprep.subr.bf16.mxu0 %v358
    %1152 = vmatpush1.bf16.msra.mxu0 %v357
    %1153 = vmatprep.subr.bf16.mxu0 %v364
    %1154 = vmatpush1.bf16.msra.mxu0 %v363
    %1155 = vmatprep.subr.bf16.mxu0 %v370
    %1156 = vmatpush1.bf16.msra.mxu0 %v369
    %1157 = vmatprep.subr.bf16.mxu0 %v452
    %1158 = vmatpush1.bf16.msra.mxu0 %v449
    %1159 = vmatprep.subr.bf16.mxu0 0
    %1160 = vmatpush1.bf16.msra.mxu0 0
    %1161 = vmatprep.subr.bf16.mxu0 0
    %1162 = vmatpush1.bf16.msra.mxu0 0
    %1163 = vmatprep.subr.bf16.mxu0 0
    %1164 = vmatpush1.bf16.msra.mxu0 0
    %1165 = vmatprep.subr.bf16.mxu0 0
    %1166 = vmatpush1.bf16.msra.mxu0 0
    %1167 = vmatprep.subr.bf16.mxu0 0
    %1168 = vmatpush1.bf16.msra.mxu0 0
    %1169 = vmatprep.subr.bf16.mxu0 0
    %1170 = vmatpush1.bf16.msra.mxu0 0
    %1171 = vmatprep.subr.bf16.mxu0 0
    %1172 = vmatpush1.bf16.msra.mxu0 0
    %1173 = vmatprep.mubr.bf16.mxu0 %v1007
    %1174 = vmatmul.mubr.bf16.gmra.mrb[0].mxu0 %v997
    %v1175 = vpop.f32.mrb[0].mxu0
    %v1176 = vadd.f32 0.0, %v1175
    %v1177 = vpop.f32.mrb[0].mxu0
    %v1178 = vadd.f32 0.0, %v1177
    %v1179 = vpop.f32.mrb[0].mxu0
    %v1180 = vadd.f32 0.0, %v1179
    %v1181 = vpop.f32.mrb[0].mxu0
    %v1182 = vadd.f32 0.0, %v1181
    %1183 = vmatprep.mubr.bf16.mxu0 %v1010
    %1184 = vmatmul.mubr.bf16.gmra.mrb[0].mxu0 %v999
    %v1185 = vpop.f32.mrb[0].mxu0
    %v1186 = vadd.f32 0.0, %v1185
    %v1187 = vpop.f32.mrb[0].mxu0
    %v1188 = vadd.f32 0.0, %v1187
    %v1189 = vpop.f32.mrb[0].mxu0
    %v1190 = vadd.f32 0.0, %v1189
    %v1191 = vpop.f32.mrb[0].mxu0
    %v1192 = vadd.f32 0.0, %v1191
    %1193 = vmatprep.mubr.bf16.mxu0 %v1013
    %1194 = vmatmul.mubr.bf16.gmra.mrb[0].mxu0 %v1001
    %v1195 = vpop.f32.mrb[0].mxu0
    %v1196 = vadd.f32 0.0, %v1195
    %v1197 = vpop.f32.mrb[0].mxu0
    %v1198 = vadd.f32 0.0, %v1197
    %v1199 = vpop.f32.mrb[0].mxu0
    %v1200 = vadd.f32 0.0, %v1199
    %v1201 = vpop.f32.mrb[0].mxu0
    %v1202 = vadd.f32 0.0, %v1201
    %1203 = vdwg.mxu0
    %s1204 = scalar_lea.vmem %s0, 144
    %v1205 = vld [vmem:[%s1204] sm:$0xff]
    %v1206 = vld [vmem:[%s1204 + $0x8] sm:$0xff]
    %v1207 = vld [vmem:[%s1204 + $0x10] sm:$0xff]
    %v1208 = vld [vmem:[%s1204 + $0x18] sm:$0xff]
    %v1209 = vld [vmem:[%s1204 + $0x20] sm:$0xff]
    %v1210 = vld [vmem:[%s1204 + $0x28] sm:$0xff]
    %v1217 = vunpack.c.l.b16 %v1205
    %v1218 = vunpack.c.h.b16 %v1205
    %v1219 = vunpack.c.l.b16 %v1206
    %v1220 = vunpack.c.h.b16 %v1206
    %v1221 = vunpack.c.l.b16 %v1207
    %v1222 = vunpack.c.h.b16 %v1207
    %v1223 = vunpack.c.l.b16 %v1208
    %v1224 = vunpack.c.h.b16 %v1208
    %v1225 = vunpack.c.l.b16 %v1209
    %v1226 = vunpack.c.h.b16 %v1209
    %v1227 = vunpack.c.l.b16 %v1210
    %v1228 = vunpack.c.h.b16 %v1210
    %v1229 = vpack.c.b16 %v1219, %v1217
    %v1230 = vpack.c.b16 %v1220, %v1218
    %v1231 = vpack.c.b16 %v1223, %v1221
    %v1232 = vpack.c.b16 %v1224, %v1222
    %v1233 = vpack.c.b16 %v1227, %v1225
    %v1234 = vpack.c.b16 %v1228, %v1226
    %v1239 = vsel %vm425, %v1230, 0
    %v1242 = vsel %vm425, %v1232, 0
    %v1245 = vsel %vm425, %v1234, 0
    %1247 = vmatprep.subr.bf16.mxu0 %v324
    %1248 = vmatpush1.bf16.msra.mxu0 %v323
    %1249 = vmatprep.subr.bf16.mxu0 %v330
    %1250 = vmatpush1.bf16.msra.mxu0 %v329
    %1251 = vmatprep.subr.bf16.mxu0 %v336
    %1252 = vmatpush1.bf16.msra.mxu0 %v335
    %1253 = vmatprep.subr.bf16.mxu0 %v342
    %1254 = vmatpush1.bf16.msra.mxu0 %v341
    %1255 = vmatprep.subr.bf16.mxu0 %v348
    %1256 = vmatpush1.bf16.msra.mxu0 %v347
    %1257 = vmatprep.subr.bf16.mxu0 %v354
    %1258 = vmatpush1.bf16.msra.mxu0 %v353
    %1259 = vmatprep.subr.bf16.mxu0 %v360
    %1260 = vmatpush1.bf16.msra.mxu0 %v359
    %1261 = vmatprep.subr.bf16.mxu0 %v366
    %1262 = vmatpush1.bf16.msra.mxu0 %v365
    %1263 = vmatprep.subr.bf16.mxu0 %v440
    %1264 = vmatpush1.bf16.msra.mxu0 %v437
    %1265 = vmatprep.subr.bf16.mxu0 0
    %1266 = vmatpush1.bf16.msra.mxu0 0
    %1267 = vmatprep.subr.bf16.mxu0 0
    %1268 = vmatpush1.bf16.msra.mxu0 0
    %1269 = vmatprep.subr.bf16.mxu0 0
    %1270 = vmatpush1.bf16.msra.mxu0 0
    %1271 = vmatprep.subr.bf16.mxu0 0
    %1272 = vmatpush1.bf16.msra.mxu0 0
    %1273 = vmatprep.subr.bf16.mxu0 0
    %1274 = vmatpush1.bf16.msra.mxu0 0
    %1275 = vmatprep.subr.bf16.mxu0 0
    %1276 = vmatpush1.bf16.msra.mxu0 0
    %1277 = vmatprep.subr.bf16.mxu0 0
    %1278 = vmatpush1.bf16.msra.mxu0 0
    %1279 = vmatprep.mubr.bf16.mxu0 %v1239
    %1280 = vmatmul.mubr.bf16.gmra.mrb[0].mxu0 %v1229
    %v1281 = vpop.f32.mrb[0].mxu0
    %v1282 = vadd.f32 0.0, %v1281
    %v1283 = vpop.f32.mrb[0].mxu0
    %v1284 = vadd.f32 0.0, %v1283
    %v1285 = vpop.f32.mrb[0].mxu0
    %v1286 = vadd.f32 0.0, %v1285
    %v1287 = vpop.f32.mrb[0].mxu0
    %v1288 = vadd.f32 0.0, %v1287
    %1289 = vmatprep.mubr.bf16.mxu0 %v1242
    %1290 = vmatmul.mubr.bf16.gmra.mrb[0].mxu0 %v1231
    %v1291 = vpop.f32.mrb[0].mxu0
    %v1292 = vadd.f32 0.0, %v1291
    %v1293 = vpop.f32.mrb[0].mxu0
    %v1294 = vadd.f32 0.0, %v1293
    %v1295 = vpop.f32.mrb[0].mxu0
    %v1296 = vadd.f32 0.0, %v1295
    %v1297 = vpop.f32.mrb[0].mxu0
    %v1298 = vadd.f32 0.0, %v1297
    %1299 = vmatprep.mubr.bf16.mxu0 %v1245
    %1300 = vmatmul.mubr.bf16.gmra.mrb[0].mxu0 %v1233
    %v1301 = vpop.f32.mrb[0].mxu0
    %v1302 = vadd.f32 0.0, %v1301
    %v1303 = vpop.f32.mrb[0].mxu0
    %v1304 = vadd.f32 0.0, %v1303
    %v1305 = vpop.f32.mrb[0].mxu0
    %v1306 = vadd.f32 0.0, %v1305
    %v1307 = vpop.f32.mrb[0].mxu0
    %v1308 = vadd.f32 0.0, %v1307
    %1309 = vdwg.mxu0
    %1310 = vmatprep.subr.bf16.mxu0 %v326
    %1311 = vmatpush1.bf16.msra.mxu0 %v325
    %1312 = vmatprep.subr.bf16.mxu0 %v332
    %1313 = vmatpush1.bf16.msra.mxu0 %v331
    %1314 = vmatprep.subr.bf16.mxu0 %v338
    %1315 = vmatpush1.bf16.msra.mxu0 %v337
    %1316 = vmatprep.subr.bf16.mxu0 %v344
    %1317 = vmatpush1.bf16.msra.mxu0 %v343
    %1318 = vmatprep.subr.bf16.mxu0 %v350
    %1319 = vmatpush1.bf16.msra.mxu0 %v349
    %1320 = vmatprep.subr.bf16.mxu0 %v356
    %1321 = vmatpush1.bf16.msra.mxu0 %v355
    %1322 = vmatprep.subr.bf16.mxu0 %v362
    %1323 = vmatpush1.bf16.msra.mxu0 %v361
    %1324 = vmatprep.subr.bf16.mxu0 %v368
    %1325 = vmatpush1.bf16.msra.mxu0 %v367
    %1326 = vmatprep.subr.bf16.mxu0 %v446
    %1327 = vmatpush1.bf16.msra.mxu0 %v443
    %1328 = vmatprep.subr.bf16.mxu0 0
    %1329 = vmatpush1.bf16.msra.mxu0 0
    %1330 = vmatprep.subr.bf16.mxu0 0
    %1331 = vmatpush1.bf16.msra.mxu0 0
    %1332 = vmatprep.subr.bf16.mxu0 0
    %1333 = vmatpush1.bf16.msra.mxu0 0
    %1334 = vmatprep.subr.bf16.mxu0 0
    %1335 = vmatpush1.bf16.msra.mxu0 0
    %1336 = vmatprep.subr.bf16.mxu0 0
    %1337 = vmatpush1.bf16.msra.mxu0 0
    %1338 = vmatprep.subr.bf16.mxu0 0
    %1339 = vmatpush1.bf16.msra.mxu0 0
    %1340 = vmatprep.subr.bf16.mxu0 0
    %1341 = vmatpush1.bf16.msra.mxu0 0
    %1342 = vmatprep.mubr.bf16.mxu0 %v1239
    %1343 = vmatmul.mubr.bf16.gmra.mrb[0].mxu0 %v1229
    %v1344 = vpop.f32.mrb[0].mxu0
    %v1345 = vadd.f32 0.0, %v1344
    %v1346 = vpop.f32.mrb[0].mxu0
    %v1347 = vadd.f32 0.0, %v1346
    %v1348 = vpop.f32.mrb[0].mxu0
    %v1349 = vadd.f32 0.0, %v1348
    %v1350 = vpop.f32.mrb[0].mxu0
    %v1351 = vadd.f32 0.0, %v1350
    %1352 = vmatprep.mubr.bf16.mxu0 %v1242
    %1353 = vmatmul.mubr.bf16.gmra.mrb[0].mxu0 %v1231
    %v1354 = vpop.f32.mrb[0].mxu0
    %v1355 = vadd.f32 0.0, %v1354
    %v1356 = vpop.f32.mrb[0].mxu0
    %v1357 = vadd.f32 0.0, %v1356
    %v1358 = vpop.f32.mrb[0].mxu0
    %v1359 = vadd.f32 0.0, %v1358
    %v1360 = vpop.f32.mrb[0].mxu0
    %v1361 = vadd.f32 0.0, %v1360
    %1362 = vmatprep.mubr.bf16.mxu0 %v1245
    %1363 = vmatmul.mubr.bf16.gmra.mrb[0].mxu0 %v1233
    %v1364 = vpop.f32.mrb[0].mxu0
    %v1365 = vadd.f32 0.0, %v1364
    %v1366 = vpop.f32.mrb[0].mxu0
    %v1367 = vadd.f32 0.0, %v1366
    %v1368 = vpop.f32.mrb[0].mxu0
    %v1369 = vadd.f32 0.0, %v1368
    %v1370 = vpop.f32.mrb[0].mxu0
    %v1371 = vadd.f32 0.0, %v1370
    %1372 = vdwg.mxu0
    %1373 = vmatprep.subr.bf16.mxu0 %v328
    %1374 = vmatpush1.bf16.msra.mxu0 %v327
    %1375 = vmatprep.subr.bf16.mxu0 %v334
    %1376 = vmatpush1.bf16.msra.mxu0 %v333
    %1377 = vmatprep.subr.bf16.mxu0 %v340
    %1378 = vmatpush1.bf16.msra.mxu0 %v339
    %1379 = vmatprep.subr.bf16.mxu0 %v346
    %1380 = vmatpush1.bf16.msra.mxu0 %v345
    %1381 = vmatprep.subr.bf16.mxu0 %v352
    %1382 = vmatpush1.bf16.msra.mxu0 %v351
    %1383 = vmatprep.subr.bf16.mxu0 %v358
    %1384 = vmatpush1.bf16.msra.mxu0 %v357
    %1385 = vmatprep.subr.bf16.mxu0 %v364
    %1386 = vmatpush1.bf16.msra.mxu0 %v363
    %1387 = vmatprep.subr.bf16.mxu0 %v370
    %1388 = vmatpush1.bf16.msra.mxu0 %v369
    %1389 = vmatprep.subr.bf16.mxu0 %v452
    %1390 = vmatpush1.bf16.msra.mxu0 %v449
    %1391 = vmatprep.subr.bf16.mxu0 0
    %1392 = vmatpush1.bf16.msra.mxu0 0
    %1393 = vmatprep.subr.bf16.mxu0 0
    %1394 = vmatpush1.bf16.msra.mxu0 0
    %1395 = vmatprep.subr.bf16.mxu0 0
    %1396 = vmatpush1.bf16.msra.mxu0 0
    %1397 = vmatprep.subr.bf16.mxu0 0
    %1398 = vmatpush1.bf16.msra.mxu0 0
    %1399 = vmatprep.subr.bf16.mxu0 0
    %1400 = vmatpush1.bf16.msra.mxu0 0
    %1401 = vmatprep.subr.bf16.mxu0 0
    %1402 = vmatpush1.bf16.msra.mxu0 0
    %1403 = vmatprep.subr.bf16.mxu0 0
    %1404 = vmatpush1.bf16.msra.mxu0 0
    %1405 = vmatprep.mubr.bf16.mxu0 %v1239
    %1406 = vmatmul.mubr.bf16.gmra.mrb[0].mxu0 %v1229
    %v1407 = vpop.f32.mrb[0].mxu0
    %v1408 = vadd.f32 0.0, %v1407
    %v1409 = vpop.f32.mrb[0].mxu0
    %v1410 = vadd.f32 0.0, %v1409
    %v1411 = vpop.f32.mrb[0].mxu0
    %v1412 = vadd.f32 0.0, %v1411
    %v1413 = vpop.f32.mrb[0].mxu0
    %v1414 = vadd.f32 0.0, %v1413
    %1415 = vmatprep.mubr.bf16.mxu0 %v1242
    %1416 = vmatmul.mubr.bf16.gmra.mrb[0].mxu0 %v1231
    %v1417 = vpop.f32.mrb[0].mxu0
    %v1418 = vadd.f32 0.0, %v1417
    %v1419 = vpop.f32.mrb[0].mxu0
    %v1420 = vadd.f32 0.0, %v1419
    %v1421 = vpop.f32.mrb[0].mxu0
    %v1422 = vadd.f32 0.0, %v1421
    %v1423 = vpop.f32.mrb[0].mxu0
    %v1424 = vadd.f32 0.0, %v1423
    %1425 = vmatprep.mubr.bf16.mxu0 %v1245
    %1426 = vmatmul.mubr.bf16.gmra.mrb[0].mxu0 %v1233
    %v1427 = vpop.f32.mrb[0].mxu0
    %v1428 = vadd.f32 0.0, %v1427
    %v1429 = vpop.f32.mrb[0].mxu0
    %v1430 = vadd.f32 0.0, %v1429
    %v1431 = vpop.f32.mrb[0].mxu0
    %v1432 = vadd.f32 0.0, %v1431
    %v1433 = vpop.f32.mrb[0].mxu0
    %v1434 = vadd.f32 0.0, %v1433
    %1435 = vdwg.mxu0
    %v1436 = vmax.f32 %v1050, %v1282
    %v1437 = vmax.f32 %v1052, %v1284
    %v1438 = vmax.f32 %v1113, %v1345
    %v1439 = vmax.f32 %v1115, %v1347
    %v1440 = vmax.f32 %v1176, %v1408
    %v1441 = vmax.f32 %v1178, %v1410
    %v1442 = vmax.f32 %v1054, %v1286
    %v1443 = vmax.f32 %v1056, %v1288
    %v1444 = vmax.f32 %v1117, %v1349
    %v1445 = vmax.f32 %v1119, %v1351
    %v1446 = vmax.f32 %v1180, %v1412
    %v1447 = vmax.f32 %v1182, %v1414
    %v1448 = vmax.f32 %v1060, %v1292
    %v1449 = vmax.f32 %v1062, %v1294
    %v1450 = vmax.f32 %v1123, %v1355
    %v1451 = vmax.f32 %v1125, %v1357
    %v1452 = vmax.f32 %v1186, %v1418
    %v1453 = vmax.f32 %v1188, %v1420
    %v1454 = vmax.f32 %v1064, %v1296
    %v1455 = vmax.f32 %v1066, %v1298
    %v1456 = vmax.f32 %v1127, %v1359
    %v1457 = vmax.f32 %v1129, %v1361
    %v1458 = vmax.f32 %v1190, %v1422
    %v1459 = vmax.f32 %v1192, %v1424
    %v1460 = vmax.f32 %v1070, %v1302
    %v1461 = vmax.f32 %v1072, %v1304
    %v1462 = vmax.f32 %v1133, %v1365
    %v1463 = vmax.f32 %v1135, %v1367
    %v1464 = vmax.f32 %v1196, %v1428
    %v1465 = vmax.f32 %v1198, %v1430
    %v1466 = vmax.f32 %v1074, %v1306
    %v1467 = vmax.f32 %v1076, %v1308
    %v1468 = vmax.f32 %v1137, %v1369
    %v1469 = vmax.f32 %v1139, %v1371
    %v1470 = vmax.f32 %v1200, %v1432
    %v1471 = vmax.f32 %v1202, %v1434
    %v1472 = vmax.f32 %v1436, %v1439
    %v1473 = vmax.f32 %v1437, %v1440
    %v1474 = vmax.f32 %v1438, %v1441
    %v1475 = vmax.f32 %v1442, %v1445
    %v1476 = vmax.f32 %v1443, %v1446
    %v1477 = vmax.f32 %v1444, %v1447
    %v1478 = vmax.f32 %v1448, %v1451
    %v1479 = vmax.f32 %v1449, %v1452
    %v1480 = vmax.f32 %v1450, %v1453
    %v1481 = vmax.f32 %v1454, %v1457
    %v1482 = vmax.f32 %v1455, %v1458
    %v1483 = vmax.f32 %v1456, %v1459
    %v1484 = vmax.f32 %v1460, %v1463
    %v1485 = vmax.f32 %v1461, %v1464
    %v1486 = vmax.f32 %v1462, %v1465
    %v1487 = vmax.f32 %v1466, %v1469
    %v1488 = vmax.f32 %v1467, %v1470
    %v1489 = vmax.f32 %v1468, %v1471
    %v1490 = vadd.f32 %v1472, %v933
    %v1491 = vadd.f32 %v1473, %v937
    %v1492 = vadd.f32 %v1474, %v941
    %v1493 = vadd.f32 %v1475, %v933
    %v1494 = vadd.f32 %v1476, %v937
    %v1495 = vadd.f32 %v1477, %v941
    %v1496 = vadd.f32 %v1478, %v933
    %v1497 = vadd.f32 %v1479, %v937
    %v1498 = vadd.f32 %v1480, %v941
    %v1499 = vadd.f32 %v1481, %v933
    %v1500 = vadd.f32 %v1482, %v937
    %v1501 = vadd.f32 %v1483, %v941
    %v1502 = vadd.f32 %v1484, %v933
    %v1503 = vadd.f32 %v1485, %v937
    %v1504 = vadd.f32 %v1486, %v941
    %v1505 = vadd.f32 %v1487, %v933
    %v1506 = vadd.f32 %v1488, %v937
    %v1507 = vadd.f32 %v1489, %v941
    %v1508 = vpack.c.bf16 %v1493, %v1490
    %v1509 = vpack.c.bf16 %v1494, %v1491
    %v1510 = vpack.c.bf16 %v1495, %v1492
    %v1511 = vpack.c.bf16 %v1499, %v1496
    %v1512 = vpack.c.bf16 %v1500, %v1497
    %v1513 = vpack.c.bf16 %v1501, %v1498
    %v1514 = vpack.c.bf16 %v1505, %v1502
    %v1515 = vpack.c.bf16 %v1506, %v1503
    %v1516 = vpack.c.bf16 %v1507, %v1504
    %v1517 = vld [vmem:[#allocation6] sm:$0xff]
    %v1518 = vld [vmem:[#allocation6 + $0x8] sm:$0xff]
    %v1519 = vld [vmem:[#allocation6 + $0x10] sm:$0xff]
    %v1520 = vld [vmem:[#allocation6 + $0x18] sm:$0xff]
    %v1521 = vld [vmem:[#allocation6 + $0x20] sm:$0xff]
    %v1522 = vld [vmem:[#allocation6 + $0x28] sm:$0xff]
    %v1523 = vld [vmem:[#allocation6 + $0x30] sm:$0xff]
    %v1524 = vld [vmem:[#allocation6 + $0x38] sm:$0xff]
    %v1525 = vld [vmem:[#allocation6 + $0x40] sm:$0xff]
    %v1526 = vld [vmem:[#allocation6 + $0x48] sm:$0xff]
    %v1527 = vld [vmem:[#allocation6 + $0x50] sm:$0xff]
    %v1528 = vld [vmem:[#allocation6 + $0x58] sm:$0xff]
    %v1529 = vld [vmem:[#allocation6 + $0x60] sm:$0xff]
    %v1530 = vld [vmem:[#allocation6 + $0x68] sm:$0xff]
    %v1531 = vld [vmem:[#allocation6 + $0x70] sm:$0xff]
    %v1532 = vld [vmem:[#allocation6 + $0x78] sm:$0xff]
    %v1533 = vld [vmem:[#allocation6 + $0x80] sm:$0xff]
    %v1534 = vld [vmem:[#allocation6 + $0x88] sm:$0xff]
    %v1535 = vld [vmem:[#allocation6 + $0x90] sm:$0xff]
    %v1536 = vld [vmem:[#allocation6 + $0x98] sm:$0xff]
    %v1537 = vld [vmem:[#allocation6 + $0xa0] sm:$0xff]
    %v1538 = vld [vmem:[#allocation6 + $0xa8] sm:$0xff]
    %v1539 = vld [vmem:[#allocation6 + $0xb0] sm:$0xff]
    %v1540 = vld [vmem:[#allocation6 + $0xb8] sm:$0xff]
    %v1541 = vld [vmem:[#allocation6 + $0xc0] sm:$0xff]
    %v1542 = vld [vmem:[#allocation6 + $0xc8] sm:$0xff]
    %v1543 = vld [vmem:[#allocation6 + $0xd0] sm:$0xff]
    %v1544 = vld [vmem:[#allocation6 + $0xd8] sm:$0xff]
    %v1545 = vld [vmem:[#allocation6 + $0xe0] sm:$0xff]
    %v1546 = vld [vmem:[#allocation6 + $0xe8] sm:$0xff]
    %v1547 = vld [vmem:[#allocation6 + $0xf0] sm:$0xff]
    %v1548 = vld [vmem:[#allocation6 + $0xf8] sm:$0xff]
    %v1549 = vld [vmem:[#allocation6 + $0x100] sm:$0xff]
    %v1550 = vld [vmem:[#allocation6 + $0x108] sm:$0xff]
    %v1551 = vld [vmem:[#allocation6 + $0x110] sm:$0xff]
    %v1552 = vld [vmem:[#allocation6 + $0x118] sm:$0xff]
    %v1553 = vld [vmem:[#allocation6 + $0x120] sm:$0xff]
    %v1554 = vld [vmem:[#allocation6 + $0x128] sm:$0xff]
    %v1555 = vld [vmem:[#allocation6 + $0x130] sm:$0xff]
    %v1556 = vld [vmem:[#allocation6 + $0x138] sm:$0xff]
    %v1557 = vld [vmem:[#allocation6 + $0x140] sm:$0xff]
    %v1558 = vld [vmem:[#allocation6 + $0x148] sm:$0xff]
    %v1559 = vld [vmem:[#allocation6 + $0x150] sm:$0xff]
    %v1560 = vld [vmem:[#allocation6 + $0x158] sm:$0xff]
    %v1561 = vld [vmem:[#allocation6 + $0x160] sm:$0xff]
    %v1562 = vld [vmem:[#allocation6 + $0x168] sm:$0xff]
    %v1563 = vld [vmem:[#allocation6 + $0x170] sm:$0xff]
    %v1564 = vld [vmem:[#allocation6 + $0x178] sm:$0xff]
    %v1565 = vld [vmem:[#allocation6 + $0x180] sm:$0xff]
    %v1566 = vld [vmem:[#allocation6 + $0x188] sm:$0xff]
    %v1567 = vld [vmem:[#allocation6 + $0x190] sm:$0xff]
    %v1568 = vld [vmem:[#allocation6 + $0x198] sm:$0xff]
    %v1569 = vld [vmem:[#allocation6 + $0x1a0] sm:$0xff]
    %v1570 = vld [vmem:[#allocation6 + $0x1a8] sm:$0xff]
    %v1571 = vld [vmem:[#allocation6 + $0x1b0] sm:$0xff]
    %v1572 = vld [vmem:[#allocation6 + $0x1b8] sm:$0xff]
    %v1573 = vld [vmem:[#allocation6 + $0x1c0] sm:$0xff]
    %v1574 = vld [vmem:[#allocation6 + $0x1c8] sm:$0xff]
    %v1575 = vld [vmem:[#allocation6 + $0x1d0] sm:$0xff]
    %v1576 = vld [vmem:[#allocation6 + $0x1d8] sm:$0xff]
    %v1577 = vld [vmem:[#allocation6 + $0x1e0] sm:$0xff]
    %v1578 = vld [vmem:[#allocation6 + $0x1e8] sm:$0xff]
    %v1579 = vld [vmem:[#allocation6 + $0x1f0] sm:$0xff]
    %v1580 = vld [vmem:[#allocation6 + $0x1f8] sm:$0xff]
    %v1581 = vld [vmem:[#allocation6 + $0x200] sm:$0xff]
    %v1582 = vld [vmem:[#allocation6 + $0x208] sm:$0xff]
    %v1583 = vld [vmem:[#allocation6 + $0x210] sm:$0xff]
    %v1584 = vld [vmem:[#allocation6 + $0x218] sm:$0xff]
    %v1585 = vld [vmem:[#allocation6 + $0x220] sm:$0xff]
    %v1586 = vld [vmem:[#allocation6 + $0x228] sm:$0xff]
    %v1587 = vld [vmem:[#allocation6 + $0x230] sm:$0xff]
    %v1588 = vld [vmem:[#allocation6 + $0x238] sm:$0xff]
    %v1589 = vld [vmem:[#allocation6 + $0x240] sm:$0xff]
    %v1590 = vld [vmem:[#allocation6 + $0x248] sm:$0xff]
    %v1591 = vld [vmem:[#allocation6 + $0x250] sm:$0xff]
    %v1592 = vld [vmem:[#allocation6 + $0x258] sm:$0xff]
    %v1593 = vld [vmem:[#allocation6 + $0x260] sm:$0xff]
    %v1594 = vld [vmem:[#allocation6 + $0x268] sm:$0xff]
    %v1595 = vld [vmem:[#allocation6 + $0x270] sm:$0xff]
    %v1596 = vld [vmem:[#allocation6 + $0x278] sm:$0xff]
    %v1597 = vld [vmem:[#allocation6 + $0x280] sm:$0xff]
    %v1598 = vld [vmem:[#allocation6 + $0x288] sm:$0xff]
    %v1599 = vld [vmem:[#allocation6 + $0x290] sm:$0xff]
    %v1600 = vld [vmem:[#allocation6 + $0x298] sm:$0xff]
    %v1601 = vld [vmem:[#allocation6 + $0x2a0] sm:$0xff]
    %v1602 = vld [vmem:[#allocation6 + $0x2a8] sm:$0xff]
    %v1603 = vld [vmem:[#allocation6 + $0x2b0] sm:$0xff]
    %v1604 = vld [vmem:[#allocation6 + $0x2b8] sm:$0xff]
    %v1605 = vld [vmem:[#allocation6 + $0x2c0] sm:$0xff]
    %v1606 = vld [vmem:[#allocation6 + $0x2c8] sm:$0xff]
    %v1607 = vld [vmem:[#allocation6 + $0x2d0] sm:$0xff]
    %v1608 = vld [vmem:[#allocation6 + $0x2d8] sm:$0xff]
    %v1609 = vld [vmem:[#allocation6 + $0x2e0] sm:$0xff]
    %v1610 = vld [vmem:[#allocation6 + $0x2e8] sm:$0xff]
    %v1611 = vld [vmem:[#allocation6 + $0x2f0] sm:$0xff]
    %v1612 = vld [vmem:[#allocation6 + $0x2f8] sm:$0xff]
    %s1613 = scalar_lea.vmem [#allocation6], 768
    %v1614 = vld [vmem:[%s1613] sm:$0xff]
    %v1615 = vld [vmem:[%s1613 + $0x8] sm:$0xff]
    %v1616 = vld [vmem:[%s1613 + $0x10] sm:$0xff]
    %v1617 = vld [vmem:[%s1613 + $0x18] sm:$0xff]
    %v1618 = vld [vmem:[%s1613 + $0x20] sm:$0xff]
    %v1619 = vld [vmem:[%s1613 + $0x28] sm:$0xff]
    %v1620 = vld [vmem:[%s1613 + $0x30] sm:$0xff]
    %v1621 = vld [vmem:[%s1613 + $0x38] sm:$0xff]
    %v1622 = vld [vmem:[%s1613 + $0x40] sm:$0xff]
    %v1623 = vld [vmem:[%s1613 + $0x48] sm:$0xff]
    %v1624 = vld [vmem:[%s1613 + $0x50] sm:$0xff]
    %v1625 = vld [vmem:[%s1613 + $0x58] sm:$0xff]
    %v1626 = vld [vmem:[%s1613 + $0x60] sm:$0xff]
    %v1627 = vld [vmem:[%s1613 + $0x68] sm:$0xff]
    %v1628 = vld [vmem:[%s1613 + $0x70] sm:$0xff]
    %v1629 = vld [vmem:[%s1613 + $0x78] sm:$0xff]
    %v1630 = vld [vmem:[%s1613 + $0x80] sm:$0xff]
    %v1631 = vld [vmem:[%s1613 + $0x88] sm:$0xff]
    %v1632 = vld [vmem:[%s1613 + $0x90] sm:$0xff]
    %v1633 = vld [vmem:[%s1613 + $0x98] sm:$0xff]
    %v1634 = vld [vmem:[%s1613 + $0xa0] sm:$0xff]
    %v1635 = vld [vmem:[%s1613 + $0xa8] sm:$0xff]
    %v1636 = vld [vmem:[%s1613 + $0xb0] sm:$0xff]
    %v1637 = vld [vmem:[%s1613 + $0xb8] sm:$0xff]
    %v1638 = vld [vmem:[%s1613 + $0xc0] sm:$0xff]
    %v1639 = vld [vmem:[%s1613 + $0xc8] sm:$0xff]
    %v1640 = vld [vmem:[%s1613 + $0xd0] sm:$0xff]
    %v1641 = vld [vmem:[%s1613 + $0xd8] sm:$0xff]
    %v1642 = vld [vmem:[%s1613 + $0xe0] sm:$0xff]
    %v1643 = vld [vmem:[%s1613 + $0xe8] sm:$0xff]
    %v1644 = vld [vmem:[%s1613 + $0xf0] sm:$0xff]
    %v1645 = vld [vmem:[%s1613 + $0xf8] sm:$0xff]
    %v1646 = vld [vmem:[%s1613 + $0x100] sm:$0xff]
    %v1647 = vld [vmem:[%s1613 + $0x108] sm:$0xff]
    %v1648 = vld [vmem:[%s1613 + $0x110] sm:$0xff]
    %v1649 = vld [vmem:[%s1613 + $0x118] sm:$0xff]
    %v1650 = vld [vmem:[%s1613 + $0x120] sm:$0xff]
    %v1651 = vld [vmem:[%s1613 + $0x128] sm:$0xff]
    %v1652 = vld [vmem:[%s1613 + $0x130] sm:$0xff]
    %v1653 = vld [vmem:[%s1613 + $0x138] sm:$0xff]
    %v1654 = vld [vmem:[%s1613 + $0x140] sm:$0xff]
    %v1655 = vld [vmem:[%s1613 + $0x148] sm:$0xff]
    %v1656 = vld [vmem:[%s1613 + $0x150] sm:$0xff]
    %v1657 = vld [vmem:[%s1613 + $0x158] sm:$0xff]
    %v1658 = vld [vmem:[%s1613 + $0x160] sm:$0xff]
    %v1659 = vld [vmem:[%s1613 + $0x168] sm:$0xff]
    %v1660 = vld [vmem:[%s1613 + $0x170] sm:$0xff]
    %v1661 = vld [vmem:[%s1613 + $0x178] sm:$0xff]
    %v1662 = vld [vmem:[%s1613 + $0x180] sm:$0xff]
    %v1663 = vld [vmem:[%s1613 + $0x188] sm:$0xff]
    %v1664 = vld [vmem:[%s1613 + $0x190] sm:$0xff]
    %v1665 = vld [vmem:[%s1613 + $0x198] sm:$0xff]
    %v1666 = vld [vmem:[%s1613 + $0x1a0] sm:$0xff]
    %v1667 = vld [vmem:[%s1613 + $0x1a8] sm:$0xff]
    %v1668 = vld [vmem:[%s1613 + $0x1b0] sm:$0xff]
    %v1669 = vld [vmem:[%s1613 + $0x1b8] sm:$0xff]
    %v1670 = vld [vmem:[%s1613 + $0x1c0] sm:$0xff]
    %v1671 = vld [vmem:[%s1613 + $0x1c8] sm:$0xff]
    %v1672 = vld [vmem:[%s1613 + $0x1d0] sm:$0xff]
    %v1673 = vld [vmem:[%s1613 + $0x1d8] sm:$0xff]
    %v1674 = vld [vmem:[%s1613 + $0x1e0] sm:$0xff]
    %v1675 = vld [vmem:[%s1613 + $0x1e8] sm:$0xff]
    %v1676 = vld [vmem:[%s1613 + $0x1f0] sm:$0xff]
    %v1677 = vld [vmem:[%s1613 + $0x1f8] sm:$0xff]
    %v1678 = vld [vmem:[%s1613 + $0x200] sm:$0xff]
    %v1679 = vld [vmem:[%s1613 + $0x208] sm:$0xff]
    %v1680 = vld [vmem:[%s1613 + $0x210] sm:$0xff]
    %v1681 = vld [vmem:[%s1613 + $0x218] sm:$0xff]
    %v1682 = vld [vmem:[%s1613 + $0x220] sm:$0xff]
    %v1683 = vld [vmem:[%s1613 + $0x228] sm:$0xff]
    %v1684 = vld [vmem:[%s1613 + $0x230] sm:$0xff]
    %v1685 = vld [vmem:[%s1613 + $0x238] sm:$0xff]
    %v1686 = vld [vmem:[%s1613 + $0x240] sm:$0xff]
    %v1687 = vld [vmem:[%s1613 + $0x248] sm:$0xff]
    %v1688 = vld [vmem:[%s1613 + $0x250] sm:$0xff]
    %v1689 = vld [vmem:[%s1613 + $0x258] sm:$0xff]
    %v1690 = vld [vmem:[%s1613 + $0x260] sm:$0xff]
    %v1691 = vld [vmem:[%s1613 + $0x268] sm:$0xff]
    %v1692 = vld [vmem:[%s1613 + $0x270] sm:$0xff]
    %v1693 = vld [vmem:[%s1613 + $0x278] sm:$0xff]
    %v1694 = vld [vmem:[%s1613 + $0x280] sm:$0xff]
    %v1695 = vld [vmem:[%s1613 + $0x288] sm:$0xff]
    %v1696 = vld [vmem:[%s1613 + $0x290] sm:$0xff]
    %v1697 = vld [vmem:[%s1613 + $0x298] sm:$0xff]
    %v1698 = vld [vmem:[%s1613 + $0x2a0] sm:$0xff]
    %v1699 = vld [vmem:[%s1613 + $0x2a8] sm:$0xff]
    %v1700 = vld [vmem:[%s1613 + $0x2b0] sm:$0xff]
    %v1701 = vld [vmem:[%s1613 + $0x2b8] sm:$0xff]
    %v1702 = vld [vmem:[%s1613 + $0x2c0] sm:$0xff]
    %v1703 = vld [vmem:[%s1613 + $0x2c8] sm:$0xff]
    %v1704 = vld [vmem:[%s1613 + $0x2d0] sm:$0xff]
    %v1705 = vld [vmem:[%s1613 + $0x2d8] sm:$0xff]
    %v1706 = vld [vmem:[%s1613 + $0x2e0] sm:$0xff]
    %v1707 = vld [vmem:[%s1613 + $0x2e8] sm:$0xff]
    %v1708 = vld [vmem:[%s1613 + $0x2f0] sm:$0xff]
    %v1709 = vld [vmem:[%s1613 + $0x2f8] sm:$0xff]
    %v1806 = vunpack.c.l.b16 %v1614
    %v1807 = vunpack.c.h.b16 %v1614
    %v1808 = vunpack.c.l.b16 %v1615
    %v1809 = vunpack.c.h.b16 %v1615
    %v1810 = vunpack.c.l.b16 %v1616
    %v1811 = vunpack.c.h.b16 %v1616
    %v1812 = vunpack.c.l.b16 %v1617
    %v1813 = vunpack.c.h.b16 %v1617
    %v1814 = vunpack.c.l.b16 %v1618
    %v1815 = vunpack.c.h.b16 %v1618
    %v1816 = vunpack.c.l.b16 %v1619
    %v1817 = vunpack.c.h.b16 %v1619
    %v1818 = vunpack.c.l.b16 %v1620
    %v1819 = vunpack.c.h.b16 %v1620
    %v1820 = vunpack.c.l.b16 %v1621
    %v1821 = vunpack.c.h.b16 %v1621
    %v1822 = vunpack.c.l.b16 %v1622
    %v1823 = vunpack.c.h.b16 %v1622
    %v1824 = vunpack.c.l.b16 %v1623
    %v1825 = vunpack.c.h.b16 %v1623
    %v1826 = vunpack.c.l.b16 %v1624
    %v1827 = vunpack.c.h.b16 %v1624
    %v1828 = vunpack.c.l.b16 %v1625
    %v1829 = vunpack.c.h.b16 %v1625
    %v1830 = vunpack.c.l.b16 %v1626
    %v1831 = vunpack.c.h.b16 %v1626
    %v1832 = vunpack.c.l.b16 %v1627
    %v1833 = vunpack.c.h.b16 %v1627
    %v1834 = vunpack.c.l.b16 %v1628
    %v1835 = vunpack.c.h.b16 %v1628
    %v1836 = vunpack.c.l.b16 %v1629
    %v1837 = vunpack.c.h.b16 %v1629
    %v1838 = vunpack.c.l.b16 %v1630
    %v1839 = vunpack.c.h.b16 %v1630
    %v1840 = vunpack.c.l.b16 %v1631
    %v1841 = vunpack.c.h.b16 %v1631
    %v1842 = vunpack.c.l.b16 %v1632
    %v1843 = vunpack.c.h.b16 %v1632
    %v1844 = vunpack.c.l.b16 %v1633
    %v1845 = vunpack.c.h.b16 %v1633
    %v1846 = vunpack.c.l.b16 %v1634
    %v1847 = vunpack.c.h.b16 %v1634
    %v1848 = vunpack.c.l.b16 %v1635
    %v1849 = vunpack.c.h.b16 %v1635
    %v1850 = vunpack.c.l.b16 %v1636
    %v1851 = vunpack.c.h.b16 %v1636
    %v1852 = vunpack.c.l.b16 %v1637
    %v1853 = vunpack.c.h.b16 %v1637
    %v1854 = vunpack.c.l.b16 %v1638
    %v1855 = vunpack.c.h.b16 %v1638
    %v1856 = vunpack.c.l.b16 %v1639
    %v1857 = vunpack.c.h.b16 %v1639
    %v1858 = vunpack.c.l.b16 %v1640
    %v1859 = vunpack.c.h.b16 %v1640
    %v1860 = vunpack.c.l.b16 %v1641
    %v1861 = vunpack.c.h.b16 %v1641
    %v1862 = vunpack.c.l.b16 %v1642
    %v1863 = vunpack.c.h.b16 %v1642
    %v1864 = vunpack.c.l.b16 %v1643
    %v1865 = vunpack.c.h.b16 %v1643
    %v1866 = vunpack.c.l.b16 %v1644
    %v1867 = vunpack.c.h.b16 %v1644
    %v1868 = vunpack.c.l.b16 %v1645
    %v1869 = vunpack.c.h.b16 %v1645
    %v1870 = vunpack.c.l.b16 %v1646
    %v1871 = vunpack.c.h.b16 %v1646
    %v1872 = vunpack.c.l.b16 %v1647
    %v1873 = vunpack.c.h.b16 %v1647
    %v1874 = vunpack.c.l.b16 %v1648
    %v1875 = vunpack.c.h.b16 %v1648
    %v1876 = vunpack.c.l.b16 %v1649
    %v1877 = vunpack.c.h.b16 %v1649
    %v1878 = vunpack.c.l.b16 %v1650
    %v1879 = vunpack.c.h.b16 %v1650
    %v1880 = vunpack.c.l.b16 %v1651
    %v1881 = vunpack.c.h.b16 %v1651
    %v1882 = vunpack.c.l.b16 %v1652
    %v1883 = vunpack.c.h.b16 %v1652
    %v1884 = vunpack.c.l.b16 %v1653
    %v1885 = vunpack.c.h.b16 %v1653
    %v1886 = vunpack.c.l.b16 %v1654
    %v1887 = vunpack.c.h.b16 %v1654
    %v1888 = vunpack.c.l.b16 %v1655
    %v1889 = vunpack.c.h.b16 %v1655
    %v1890 = vunpack.c.l.b16 %v1656
    %v1891 = vunpack.c.h.b16 %v1656
    %v1892 = vunpack.c.l.b16 %v1657
    %v1893 = vunpack.c.h.b16 %v1657
    %v1894 = vunpack.c.l.b16 %v1658
    %v1895 = vunpack.c.h.b16 %v1658
    %v1896 = vunpack.c.l.b16 %v1659
    %v1897 = vunpack.c.h.b16 %v1659
    %v1898 = vunpack.c.l.b16 %v1660
    %v1899 = vunpack.c.h.b16 %v1660
    %v1900 = vunpack.c.l.b16 %v1661
    %v1901 = vunpack.c.h.b16 %v1661
    %v1902 = vunpack.c.l.b16 %v1662
    %v1903 = vunpack.c.h.b16 %v1662
    %v1904 = vunpack.c.l.b16 %v1663
    %v1905 = vunpack.c.h.b16 %v1663
    %v1906 = vunpack.c.l.b16 %v1664
    %v1907 = vunpack.c.h.b16 %v1664
    %v1908 = vunpack.c.l.b16 %v1665
    %v1909 = vunpack.c.h.b16 %v1665
    %v1910 = vunpack.c.l.b16 %v1666
    %v1911 = vunpack.c.h.b16 %v1666
    %v1912 = vunpack.c.l.b16 %v1667
    %v1913 = vunpack.c.h.b16 %v1667
    %v1914 = vunpack.c.l.b16 %v1668
    %v1915 = vunpack.c.h.b16 %v1668
    %v1916 = vunpack.c.l.b16 %v1669
    %v1917 = vunpack.c.h.b16 %v1669
    %v1918 = vunpack.c.l.b16 %v1670
    %v1919 = vunpack.c.h.b16 %v1670
    %v1920 = vunpack.c.l.b16 %v1671
    %v1921 = vunpack.c.h.b16 %v1671
    %v1922 = vunpack.c.l.b16 %v1672
    %v1923 = vunpack.c.h.b16 %v1672
    %v1924 = vunpack.c.l.b16 %v1673
    %v1925 = vunpack.c.h.b16 %v1673
    %v1926 = vunpack.c.l.b16 %v1674
    %v1927 = vunpack.c.h.b16 %v1674
    %v1928 = vunpack.c.l.b16 %v1675
    %v1929 = vunpack.c.h.b16 %v1675
    %v1930 = vunpack.c.l.b16 %v1676
    %v1931 = vunpack.c.h.b16 %v1676
    %v1932 = vunpack.c.l.b16 %v1677
    %v1933 = vunpack.c.h.b16 %v1677
    %v1934 = vunpack.c.l.b16 %v1678
    %v1935 = vunpack.c.h.b16 %v1678
    %v1936 = vunpack.c.l.b16 %v1679
    %v1937 = vunpack.c.h.b16 %v1679
    %v1938 = vunpack.c.l.b16 %v1680
    %v1939 = vunpack.c.h.b16 %v1680
    %v1940 = vunpack.c.l.b16 %v1681
    %v1941 = vunpack.c.h.b16 %v1681
    %v1942 = vunpack.c.l.b16 %v1682
    %v1943 = vunpack.c.h.b16 %v1682
    %v1944 = vunpack.c.l.b16 %v1683
    %v1945 = vunpack.c.h.b16 %v1683
    %v1946 = vunpack.c.l.b16 %v1684
    %v1947 = vunpack.c.h.b16 %v1684
    %v1948 = vunpack.c.l.b16 %v1685
    %v1949 = vunpack.c.h.b16 %v1685
    %v1950 = vunpack.c.l.b16 %v1686
    %v1951 = vunpack.c.h.b16 %v1686
    %v1952 = vunpack.c.l.b16 %v1687
    %v1953 = vunpack.c.h.b16 %v1687
    %v1954 = vunpack.c.l.b16 %v1688
    %v1955 = vunpack.c.h.b16 %v1688
    %v1956 = vunpack.c.l.b16 %v1689
    %v1957 = vunpack.c.h.b16 %v1689
    %v1958 = vunpack.c.l.b16 %v1690
    %v1959 = vunpack.c.h.b16 %v1690
    %v1960 = vunpack.c.l.b16 %v1691
    %v1961 = vunpack.c.h.b16 %v1691
    %v1962 = vunpack.c.l.b16 %v1692
    %v1963 = vunpack.c.h.b16 %v1692
    %v1964 = vunpack.c.l.b16 %v1693
    %v1965 = vunpack.c.h.b16 %v1693
    %v1966 = vunpack.c.l.b16 %v1694
    %v1967 = vunpack.c.h.b16 %v1694
    %v1968 = vunpack.c.l.b16 %v1695
    %v1969 = vunpack.c.h.b16 %v1695
    %v1970 = vunpack.c.l.b16 %v1696
    %v1971 = vunpack.c.h.b16 %v1696
    %v1972 = vunpack.c.l.b16 %v1697
    %v1973 = vunpack.c.h.b16 %v1697
    %v1974 = vunpack.c.l.b16 %v1698
    %v1975 = vunpack.c.h.b16 %v1698
    %v1976 = vunpack.c.l.b16 %v1699
    %v1977 = vunpack.c.h.b16 %v1699
    %v1978 = vunpack.c.l.b16 %v1700
    %v1979 = vunpack.c.h.b16 %v1700
    %v1980 = vunpack.c.l.b16 %v1701
    %v1981 = vunpack.c.h.b16 %v1701
    %v1982 = vunpack.c.l.b16 %v1702
    %v1983 = vunpack.c.h.b16 %v1702
    %v1984 = vunpack.c.l.b16 %v1703
    %v1985 = vunpack.c.h.b16 %v1703
    %v1986 = vunpack.c.l.b16 %v1704
    %v1987 = vunpack.c.h.b16 %v1704
    %v1988 = vunpack.c.l.b16 %v1705
    %v1989 = vunpack.c.h.b16 %v1705
    %v1990 = vunpack.c.l.b16 %v1706
    %v1991 = vunpack.c.h.b16 %v1706
    %v1992 = vunpack.c.l.b16 %v1707
    %v1993 = vunpack.c.h.b16 %v1707
    %v1994 = vunpack.c.l.b16 %v1708
    %v1995 = vunpack.c.h.b16 %v1708
    %v1996 = vunpack.c.l.b16 %v1709
    %v1997 = vunpack.c.h.b16 %v1709
    %v1998 = vpack.c.b16 %v1810, %v1806
    %v1999 = vpack.c.b16 %v1811, %v1807
    %v2000 = vpack.c.b16 %v1812, %v1808
    %v2001 = vpack.c.b16 %v1813, %v1809
    %v2002 = vpack.c.b16 %v1818, %v1814
    %v2003 = vpack.c.b16 %v1819, %v1815
    %v2004 = vpack.c.b16 %v1820, %v1816
    %v2005 = vpack.c.b16 %v1821, %v1817
    %v2006 = vpack.c.b16 %v1826, %v1822
    %v2007 = vpack.c.b16 %v1827, %v1823
    %v2008 = vpack.c.b16 %v1828, %v1824
    %v2009 = vpack.c.b16 %v1829, %v1825
    %v2010 = vpack.c.b16 %v1834, %v1830
    %v2011 = vpack.c.b16 %v1835, %v1831
    %v2012 = vpack.c.b16 %v1836, %v1832
    %v2013 = vpack.c.b16 %v1837, %v1833
    %v2014 = vpack.c.b16 %v1842, %v1838
    %v2015 = vpack.c.b16 %v1843, %v1839
    %v2016 = vpack.c.b16 %v1844, %v1840
    %v2017 = vpack.c.b16 %v1845, %v1841
    %v2018 = vpack.c.b16 %v1850, %v1846
    %v2019 = vpack.c.b16 %v1851, %v1847
    %v2020 = vpack.c.b16 %v1852, %v1848
    %v2021 = vpack.c.b16 %v1853, %v1849
    %v2022 = vpack.c.b16 %v1858, %v1854
    %v2023 = vpack.c.b16 %v1859, %v1855
    %v2024 = vpack.c.b16 %v1860, %v1856
    %v2025 = vpack.c.b16 %v1861, %v1857
    %v2026 = vpack.c.b16 %v1866, %v1862
    %v2027 = vpack.c.b16 %v1867, %v1863
    %v2028 = vpack.c.b16 %v1868, %v1864
    %v2029 = vpack.c.b16 %v1869, %v1865
    %v2030 = vpack.c.b16 %v1874, %v1870
    %v2031 = vpack.c.b16 %v1875, %v1871
    %v2032 = vpack.c.b16 %v1876, %v1872
    %v2033 = vpack.c.b16 %v1877, %v1873
    %v2034 = vpack.c.b16 %v1882, %v1878
    %v2035 = vpack.c.b16 %v1883, %v1879
    %v2036 = vpack.c.b16 %v1884, %v1880
    %v2037 = vpack.c.b16 %v1885, %v1881
    %v2038 = vpack.c.b16 %v1890, %v1886
    %v2039 = vpack.c.b16 %v1891, %v1887
    %v2040 = vpack.c.b16 %v1892, %v1888
    %v2041 = vpack.c.b16 %v1893, %v1889
    %v2042 = vpack.c.b16 %v1898, %v1894
    %v2043 = vpack.c.b16 %v1899, %v1895
    %v2044 = vpack.c.b16 %v1900, %v1896
    %v2045 = vpack.c.b16 %v1901, %v1897
    %v2046 = vpack.c.b16 %v1906, %v1902
    %v2047 = vpack.c.b16 %v1907, %v1903
    %v2048 = vpack.c.b16 %v1908, %v1904
    %v2049 = vpack.c.b16 %v1909, %v1905
    %v2050 = vpack.c.b16 %v1914, %v1910
    %v2051 = vpack.c.b16 %v1915, %v1911
    %v2052 = vpack.c.b16 %v1916, %v1912
    %v2053 = vpack.c.b16 %v1917, %v1913
    %v2054 = vpack.c.b16 %v1922, %v1918
    %v2055 = vpack.c.b16 %v1923, %v1919
    %v2056 = vpack.c.b16 %v1924, %v1920
    %v2057 = vpack.c.b16 %v1925, %v1921
    %v2058 = vpack.c.b16 %v1930, %v1926
    %v2059 = vpack.c.b16 %v1931, %v1927
    %v2060 = vpack.c.b16 %v1932, %v1928
    %v2061 = vpack.c.b16 %v1933, %v1929
    %v2062 = vpack.c.b16 %v1938, %v1934
    %v2063 = vpack.c.b16 %v1939, %v1935
    %v2064 = vpack.c.b16 %v1940, %v1936
    %v2065 = vpack.c.b16 %v1941, %v1937
    %v2066 = vpack.c.b16 %v1946, %v1942
    %v2067 = vpack.c.b16 %v1947, %v1943
    %v2068 = vpack.c.b16 %v1948, %v1944
    %v2069 = vpack.c.b16 %v1949, %v1945
    %v2070 = vpack.c.b16 %v1954, %v1950
    %v2071 = vpack.c.b16 %v1955, %v1951
    %v2072 = vpack.c.b16 %v1956, %v1952
    %v2073 = vpack.c.b16 %v1957, %v1953
    %v2074 = vpack.c.b16 %v1962, %v1958
    %v2075 = vpack.c.b16 %v1963, %v1959
    %v2076 = vpack.c.b16 %v1964, %v1960
    %v2077 = vpack.c.b16 %v1965, %v1961
    %v2078 = vpack.c.b16 %v1970, %v1966
    %v2079 = vpack.c.b16 %v1971, %v1967
    %v2080 = vpack.c.b16 %v1972, %v1968
    %v2081 = vpack.c.b16 %v1973, %v1969
    %v2082 = vpack.c.b16 %v1978, %v1974
    %v2083 = vpack.c.b16 %v1979, %v1975
    %v2084 = vpack.c.b16 %v1980, %v1976
    %v2085 = vpack.c.b16 %v1981, %v1977
    %v2086 = vpack.c.b16 %v1986, %v1982
    %v2087 = vpack.c.b16 %v1987, %v1983
    %v2088 = vpack.c.b16 %v1988, %v1984
    %v2089 = vpack.c.b16 %v1989, %v1985
    %v2090 = vpack.c.b16 %v1994, %v1990
    %v2091 = vpack.c.b16 %v1995, %v1991
    %v2092 = vpack.c.b16 %v1996, %v1992
    %v2093 = vpack.c.b16 %v1997, %v1993
    %2190 = vmatprep.subr.bf16.mxu0 %v1999
    %2191 = vmatpush1.bf16.msra.mxu0 %v1998
    %2192 = vmatprep.subr.bf16.mxu0 %v2003
    %2193 = vmatpush1.bf16.msra.mxu0 %v2002
    %2194 = vmatprep.subr.bf16.mxu0 %v2007
    %2195 = vmatpush1.bf16.msra.mxu0 %v2006
    %2196 = vmatprep.subr.bf16.mxu0 %v2011
    %2197 = vmatpush1.bf16.msra.mxu0 %v2010
    %2198 = vmatprep.subr.bf16.mxu0 %v2015
    %2199 = vmatpush1.bf16.msra.mxu0 %v2014
    %2200 = vmatprep.subr.bf16.mxu0 %v2019
    %2201 = vmatpush1.bf16.msra.mxu0 %v2018
    %2202 = vmatprep.subr.bf16.mxu0 %v2023
    %2203 = vmatpush1.bf16.msra.mxu0 %v2022
    %2204 = vmatprep.subr.bf16.mxu0 %v2027
    %2205 = vmatpush1.bf16.msra.mxu0 %v2026
    %2206 = vmatprep.subr.bf16.mxu0 %v2031
    %2207 = vmatpush1.bf16.msra.mxu0 %v2030
    %2208 = vmatprep.subr.bf16.mxu0 %v2035
    %2209 = vmatpush1.bf16.msra.mxu0 %v2034
    %2210 = vmatprep.subr.bf16.mxu0 %v2039
    %2211 = vmatpush1.bf16.msra.mxu0 %v2038
    %2212 = vmatprep.subr.bf16.mxu0 %v2043
    %2213 = vmatpush1.bf16.msra.mxu0 %v2042
    %2214 = vmatprep.subr.bf16.mxu0 %v2047
    %2215 = vmatpush1.bf16.msra.mxu0 %v2046
    %2216 = vmatprep.subr.bf16.mxu0 %v2051
    %2217 = vmatpush1.bf16.msra.mxu0 %v2050
    %2218 = vmatprep.subr.bf16.mxu0 %v2055
    %2219 = vmatpush1.bf16.msra.mxu0 %v2054
    %2220 = vmatprep.subr.bf16.mxu0 %v2059
    %2221 = vmatpush1.bf16.msra.mxu0 %v2058
    %2222 = vmatprep.mubr.bf16.mxu0 %v1509
    %2223 = vmatmul.mubr.bf16.gmra.mrb[0].mxu0 %v1508
    %v2224 = vpop.f32.mrb[0].mxu0
    %v2225 = vadd.f32 0.0, %v2224
    %v2226 = vpop.f32.mrb[0].mxu0
    %v2227 = vadd.f32 0.0, %v2226
    %v2228 = vpop.f32.mrb[0].mxu0
    %v2229 = vadd.f32 0.0, %v2228
    %v2230 = vpop.f32.mrb[0].mxu0
    %v2231 = vadd.f32 0.0, %v2230
    %2232 = vmatprep.mubr.bf16.mxu0 %v1512
    %2233 = vmatmul.mubr.bf16.gmra.mrb[0].mxu0 %v1511
    %v2234 = vpop.f32.mrb[0].mxu0
    %v2235 = vadd.f32 0.0, %v2234
    %v2236 = vpop.f32.mrb[0].mxu0
    %v2237 = vadd.f32 0.0, %v2236
    %v2238 = vpop.f32.mrb[0].mxu0
    %v2239 = vadd.f32 0.0, %v2238
    %v2240 = vpop.f32.mrb[0].mxu0
    %v2241 = vadd.f32 0.0, %v2240
    %2242 = vdwg.mxu0
    %2243 = vmatprep.subr.bf16.mxu0 %v2063
    %2244 = vmatpush1.bf16.msra.mxu0 %v2062
    %2245 = vmatprep.subr.bf16.mxu0 %v2067
    %2246 = vmatpush1.bf16.msra.mxu0 %v2066
    %2247 = vmatprep.subr.bf16.mxu0 %v2071
    %2248 = vmatpush1.bf16.msra.mxu0 %v2070
    %2249 = vmatprep.subr.bf16.mxu0 %v2075
    %2250 = vmatpush1.bf16.msra.mxu0 %v2074
    %2251 = vmatprep.subr.bf16.mxu0 %v2079
    %2252 = vmatpush1.bf16.msra.mxu0 %v2078
    %2253 = vmatprep.subr.bf16.mxu0 %v2083
    %2254 = vmatpush1.bf16.msra.mxu0 %v2082
    %2255 = vmatprep.subr.bf16.mxu0 %v2087
    %2256 = vmatpush1.bf16.msra.mxu0 %v2086
    %2257 = vmatprep.subr.bf16.mxu0 %v2091
    %2258 = vmatpush1.bf16.msra.mxu0 %v2090
    %2259 = vmatprep.subr.bf16.mxu0 0
    %2260 = vmatpush1.bf16.msra.mxu0 0
    %2261 = vmatprep.subr.bf16.mxu0 0
    %2262 = vmatpush1.bf16.msra.mxu0 0
    %2263 = vmatprep.subr.bf16.mxu0 0
    %2264 = vmatpush1.bf16.msra.mxu0 0
    %2265 = vmatprep.subr.bf16.mxu0 0
    %2266 = vmatpush1.bf16.msra.mxu0 0
    %2267 = vmatprep.subr.bf16.mxu0 0
    %2268 = vmatpush1.bf16.msra.mxu0 0
    %2269 = vmatprep.subr.bf16.mxu0 0
    %2270 = vmatpush1.bf16.msra.mxu0 0
    %2271 = vmatprep.subr.bf16.mxu0 0
    %2272 = vmatpush1.bf16.msra.mxu0 0
    %2273 = vmatprep.subr.bf16.mxu0 0
    %2274 = vmatpush1.bf16.msra.mxu0 0
    %2275 = vmatprep.mubr.bf16.mxu0 0
    %2276 = vmatmul.mubr.bf16.gmra.mrb[0].mxu0 %v1510
    %v2277 = vpop.f32.mrb[0].mxu0
    %v2278 = vadd.f32 %v2225, %v2277
    %v2279 = vpop.f32.mrb[0].mxu0
    %v2280 = vadd.f32 %v2227, %v2279
    %v2281 = vpop.f32.mrb[0].mxu0
    %v2282 = vadd.f32 %v2229, %v2281
    %v2283 = vpop.f32.mrb[0].mxu0
    %v2284 = vadd.f32 %v2231, %v2283
    %2285 = vmatprep.mubr.bf16.mxu0 0
    %2286 = vmatmul.mubr.bf16.gmra.mrb[0].mxu0 %v1513
    %v2287 = vpop.f32.mrb[0].mxu0
    %v2288 = vadd.f32 %v2235, %v2287
    %v2289 = vpop.f32.mrb[0].mxu0
    %v2290 = vadd.f32 %v2237, %v2289
    %v2291 = vpop.f32.mrb[0].mxu0
    %v2292 = vadd.f32 %v2239, %v2291
    %v2293 = vpop.f32.mrb[0].mxu0
    %v2294 = vadd.f32 %v2241, %v2293
    %2295 = vdwg.mxu0
    %2296 = vmatprep.subr.bf16.mxu0 %v2001
    %2297 = vmatpush1.bf16.msra.mxu0 %v2000
    %2298 = vmatprep.subr.bf16.mxu0 %v2005
    %2299 = vmatpush1.bf16.msra.mxu0 %v2004
    %2300 = vmatprep.subr.bf16.mxu0 %v2009
    %2301 = vmatpush1.bf16.msra.mxu0 %v2008
    %2302 = vmatprep.subr.bf16.mxu0 %v2013
    %2303 = vmatpush1.bf16.msra.mxu0 %v2012
    %2304 = vmatprep.subr.bf16.mxu0 %v2017
    %2305 = vmatpush1.bf16.msra.mxu0 %v2016
    %2306 = vmatprep.subr.bf16.mxu0 %v2021
    %2307 = vmatpush1.bf16.msra.mxu0 %v2020
    %2308 = vmatprep.subr.bf16.mxu0 %v2025
    %2309 = vmatpush1.bf16.msra.mxu0 %v2024
    %2310 = vmatprep.subr.bf16.mxu0 %v2029
    %2311 = vmatpush1.bf16.msra.mxu0 %v2028
    %2312 = vmatprep.subr.bf16.mxu0 %v2033
    %2313 = vmatpush1.bf16.msra.mxu0 %v2032
    %2314 = vmatprep.subr.bf16.mxu0 %v2037
    %2315 = vmatpush1.bf16.msra.mxu0 %v2036
    %2316 = vmatprep.subr.bf16.mxu0 %v2041
    %2317 = vmatpush1.bf16.msra.mxu0 %v2040
    %2318 = vmatprep.subr.bf16.mxu0 %v2045
    %2319 = vmatpush1.bf16.msra.mxu0 %v2044
    %2320 = vmatprep.subr.bf16.mxu0 %v2049
    %2321 = vmatpush1.bf16.msra.mxu0 %v2048
    %2322 = vmatprep.subr.bf16.mxu0 %v2053
    %2323 = vmatpush1.bf16.msra.mxu0 %v2052
    %2324 = vmatprep.subr.bf16.mxu0 %v2057
    %2325 = vmatpush1.bf16.msra.mxu0 %v2056
    %2326 = vmatprep.subr.bf16.mxu0 %v2061
    %2327 = vmatpush1.bf16.msra.mxu0 %v2060
    %2328 = vmatprep.mubr.bf16.mxu0 %v1509
    %2329 = vmatmul.mubr.bf16.gmra.mrb[0].mxu0 %v1508
    %v2330 = vpop.f32.mrb[0].mxu0
    %v2331 = vadd.f32 0.0, %v2330
    %v2332 = vpop.f32.mrb[0].mxu0
    %v2333 = vadd.f32 0.0, %v2332
    %v2334 = vpop.f32.mrb[0].mxu0
    %v2335 = vadd.f32 0.0, %v2334
    %v2336 = vpop.f32.mrb[0].mxu0
    %v2337 = vadd.f32 0.0, %v2336
    %2338 = vmatprep.mubr.bf16.mxu0 %v1512
    %2339 = vmatmul.mubr.bf16.gmra.mrb[0].mxu0 %v1511
    %v2340 = vpop.f32.mrb[0].mxu0
    %v2341 = vadd.f32 0.0, %v2340
    %v2342 = vpop.f32.mrb[0].mxu0
    %v2343 = vadd.f32 0.0, %v2342
    %v2344 = vpop.f32.mrb[0].mxu0
    %v2345 = vadd.f32 0.0, %v2344
    %v2346 = vpop.f32.mrb[0].mxu0
    %v2347 = vadd.f32 0.0, %v2346
    %2348 = vdwg.mxu0
    %2349 = vmatprep.subr.bf16.mxu0 %v2065
    %2350 = vmatpush1.bf16.msra.mxu0 %v2064
    %2351 = vmatprep.subr.bf16.mxu0 %v2069
    %2352 = vmatpush1.bf16.msra.mxu0 %v2068
    %2353 = vmatprep.subr.bf16.mxu0 %v2073
    %2354 = vmatpush1.bf16.msra.mxu0 %v2072
    %2355 = vmatprep.subr.bf16.mxu0 %v2077
    %2356 = vmatpush1.bf16.msra.mxu0 %v2076
    %2357 = vmatprep.subr.bf16.mxu0 %v2081
    %2358 = vmatpush1.bf16.msra.mxu0 %v2080
    %2359 = vmatprep.subr.bf16.mxu0 %v2085
    %2360 = vmatpush1.bf16.msra.mxu0 %v2084
    %2361 = vmatprep.subr.bf16.mxu0 %v2089
    %2362 = vmatpush1.bf16.msra.mxu0 %v2088
    %2363 = vmatprep.subr.bf16.mxu0 %v2093
    %2364 = vmatpush1.bf16.msra.mxu0 %v2092
    %2365 = vmatprep.subr.bf16.mxu0 0
    %2366 = vmatpush1.bf16.msra.mxu0 0
    %2367 = vmatprep.subr.bf16.mxu0 0
    %2368 = vmatpush1.bf16.msra.mxu0 0
    %2369 = vmatprep.subr.bf16.mxu0 0
    %2370 = vmatpush1.bf16.msra.mxu0 0
    %2371 = vmatprep.subr.bf16.mxu0 0
    %2372 = vmatpush1.bf16.msra.mxu0 0
    %2373 = vmatprep.subr.bf16.mxu0 0
    %2374 = vmatpush1.bf16.msra.mxu0 0
    %2375 = vmatprep.subr.bf16.mxu0 0
    %2376 = vmatpush1.bf16.msra.mxu0 0
    %2377 = vmatprep.subr.bf16.mxu0 0
    %2378 = vmatpush1.bf16.msra.mxu0 0
    %2379 = vmatprep.subr.bf16.mxu0 0
    %2380 = vmatpush1.bf16.msra.mxu0 0
    %2381 = vmatprep.mubr.bf16.mxu0 0
    %2382 = vmatmul.mubr.bf16.gmra.mrb[0].mxu0 %v1510
    %v2383 = vpop.f32.mrb[0].mxu0
    %v2384 = vadd.f32 %v2331, %v2383
    %v2385 = vpop.f32.mrb[0].mxu0
    %v2386 = vadd.f32 %v2333, %v2385
    %v2387 = vpop.f32.mrb[0].mxu0
    %v2388 = vadd.f32 %v2335, %v2387
    %v2389 = vpop.f32.mrb[0].mxu0
    %v2390 = vadd.f32 %v2337, %v2389
    %2391 = vmatprep.mubr.bf16.mxu0 0
    %2392 = vmatmul.mubr.bf16.gmra.mrb[0].mxu0 %v1513
    %v2393 = vpop.f32.mrb[0].mxu0
    %v2394 = vadd.f32 %v2341, %v2393
    %v2395 = vpop.f32.mrb[0].mxu0
    %v2396 = vadd.f32 %v2343, %v2395
    %v2397 = vpop.f32.mrb[0].mxu0
    %v2398 = vadd.f32 %v2345, %v2397
    %v2399 = vpop.f32.mrb[0].mxu0
    %v2400 = vadd.f32 %v2347, %v2399
    %2401 = vdwg.mxu0
    %vm2411 = vcmask 1043456
    %v2412 = vrot.slane %v963, 4
    %v2413 = vrot.slane %v966, 4
    %v2414 = vsel %vm2411, %v2412, %v2413
    %v2415 = vrot.slane %v964, 4
    %v2416 = vrot.slane %v967, 4
    %v2417 = vsel %vm2411, %v2415, %v2416
    %v2418 = vrot.slane %v965, 4
    %v2419 = vrot.slane %v968, 4
    %v2420 = vsel %vm2411, %v2418, %v2419
    %v2421 = vrot.slane %v969, 4
    %v2422 = vsel %vm2411, %v2413, %v2421
    %v2423 = vrot.slane %v970, 4
    %v2424 = vsel %vm2411, %v2416, %v2423
    %v2425 = vrot.slane %v971, 4
    %v2426 = vsel %vm2411, %v2419, %v2425
    %2433 = vmatprep.subr.bf16.mxu0 %v1999
    %2434 = vmatpush1.bf16.msra.mxu0 %v1998
    %2435 = vmatprep.subr.bf16.mxu0 %v2003
    %2436 = vmatpush1.bf16.msra.mxu0 %v2002
    %2437 = vmatprep.subr.bf16.mxu0 %v2007
    %2438 = vmatpush1.bf16.msra.mxu0 %v2006
    %2439 = vmatprep.subr.bf16.mxu0 %v2011
    %2440 = vmatpush1.bf16.msra.mxu0 %v2010
    %2441 = vmatprep.subr.bf16.mxu0 %v2015
    %2442 = vmatpush1.bf16.msra.mxu0 %v2014
    %2443 = vmatprep.subr.bf16.mxu0 %v2019
    %2444 = vmatpush1.bf16.msra.mxu0 %v2018
    %2445 = vmatprep.subr.bf16.mxu0 %v2023
    %2446 = vmatpush1.bf16.msra.mxu0 %v2022
    %2447 = vmatprep.subr.bf16.mxu0 %v2027
    %2448 = vmatpush1.bf16.msra.mxu0 %v2026
    %2449 = vmatprep.subr.bf16.mxu0 %v2031
    %2450 = vmatpush1.bf16.msra.mxu0 %v2030
    %2451 = vmatprep.subr.bf16.mxu0 %v2035
    %2452 = vmatpush1.bf16.msra.mxu0 %v2034
    %2453 = vmatprep.subr.bf16.mxu0 %v2039
    %2454 = vmatpush1.bf16.msra.mxu0 %v2038
    %2455 = vmatprep.subr.bf16.mxu0 %v2043
    %2456 = vmatpush1.bf16.msra.mxu0 %v2042
    %2457 = vmatprep.subr.bf16.mxu0 %v2047
    %2458 = vmatpush1.bf16.msra.mxu0 %v2046
    %2459 = vmatprep.subr.bf16.mxu0 %v2051
    %2460 = vmatpush1.bf16.msra.mxu0 %v2050
    %2461 = vmatprep.subr.bf16.mxu0 %v2055
    %2462 = vmatpush1.bf16.msra.mxu0 %v2054
    %2463 = vmatprep.subr.bf16.mxu0 %v2059
    %2464 = vmatpush1.bf16.msra.mxu0 %v2058
    %2465 = vmatprep.mubr.bf16.mxu0 %v2417
    %2466 = vmatmul.mubr.bf16.gmra.mrb[0].mxu0 %v2414
    %v2467 = vpop.f32.mrb[0].mxu0
    %v2468 = vadd.f32 0.0, %v2467
    %v2469 = vpop.f32.mrb[0].mxu0
    %v2470 = vadd.f32 0.0, %v2469
    %v2471 = vpop.f32.mrb[0].mxu0
    %v2472 = vadd.f32 0.0, %v2471
    %v2473 = vpop.f32.mrb[0].mxu0
    %v2474 = vadd.f32 0.0, %v2473
    %2475 = vmatprep.mubr.bf16.mxu0 %v2424
    %2476 = vmatmul.mubr.bf16.gmra.mrb[0].mxu0 %v2422
    %v2477 = vpop.f32.mrb[0].mxu0
    %v2478 = vadd.f32 0.0, %v2477
    %v2479 = vpop.f32.mrb[0].mxu0
    %v2480 = vadd.f32 0.0, %v2479
    %v2481 = vpop.f32.mrb[0].mxu0
    %v2482 = vadd.f32 0.0, %v2481
    %v2483 = vpop.f32.mrb[0].mxu0
    %v2484 = vadd.f32 0.0, %v2483
    %2485 = vdwg.mxu0
    %2486 = vmatprep.subr.bf16.mxu0 %v2063
    %2487 = vmatpush1.bf16.msra.mxu0 %v2062
    %2488 = vmatprep.subr.bf16.mxu0 %v2067
    %2489 = vmatpush1.bf16.msra.mxu0 %v2066
    %2490 = vmatprep.subr.bf16.mxu0 %v2071
    %2491 = vmatpush1.bf16.msra.mxu0 %v2070
    %2492 = vmatprep.subr.bf16.mxu0 %v2075
    %2493 = vmatpush1.bf16.msra.mxu0 %v2074
    %2494 = vmatprep.subr.bf16.mxu0 %v2079
    %2495 = vmatpush1.bf16.msra.mxu0 %v2078
    %2496 = vmatprep.subr.bf16.mxu0 %v2083
    %2497 = vmatpush1.bf16.msra.mxu0 %v2082
    %2498 = vmatprep.subr.bf16.mxu0 %v2087
    %2499 = vmatpush1.bf16.msra.mxu0 %v2086
    %2500 = vmatprep.subr.bf16.mxu0 %v2091
    %2501 = vmatpush1.bf16.msra.mxu0 %v2090
    %2502 = vmatprep.subr.bf16.mxu0 0
    %2503 = vmatpush1.bf16.msra.mxu0 0
    %2504 = vmatprep.subr.bf16.mxu0 0
    %2505 = vmatpush1.bf16.msra.mxu0 0
    %2506 = vmatprep.subr.bf16.mxu0 0
    %2507 = vmatpush1.bf16.msra.mxu0 0
    %2508 = vmatprep.subr.bf16.mxu0 0
    %2509 = vmatpush1.bf16.msra.mxu0 0
    %2510 = vmatprep.subr.bf16.mxu0 0
    %2511 = vmatpush1.bf16.msra.mxu0 0
    %2512 = vmatprep.subr.bf16.mxu0 0
    %2513 = vmatpush1.bf16.msra.mxu0 0
    %2514 = vmatprep.subr.bf16.mxu0 0
    %2515 = vmatpush1.bf16.msra.mxu0 0
    %2516 = vmatprep.subr.bf16.mxu0 0
    %2517 = vmatpush1.bf16.msra.mxu0 0
    %2518 = vmatprep.mubr.bf16.mxu0 0
    %2519 = vmatmul.mubr.bf16.gmra.mrb[0].mxu0 %v2420
    %v2520 = vpop.f32.mrb[0].mxu0
    %v2521 = vadd.f32 %v2468, %v2520
    %v2522 = vpop.f32.mrb[0].mxu0
    %v2523 = vadd.f32 %v2470, %v2522
    %v2524 = vpop.f32.mrb[0].mxu0
    %v2525 = vadd.f32 %v2472, %v2524
    %v2526 = vpop.f32.mrb[0].mxu0
    %v2527 = vadd.f32 %v2474, %v2526
    %2528 = vmatprep.mubr.bf16.mxu0 0
    %2529 = vmatmul.mubr.bf16.gmra.mrb[0].mxu0 %v2426
    %v2530 = vpop.f32.mrb[0].mxu0
    %v2531 = vadd.f32 %v2478, %v2530
    %v2532 = vpop.f32.mrb[0].mxu0
    %v2533 = vadd.f32 %v2480, %v2532
    %v2534 = vpop.f32.mrb[0].mxu0
    %v2535 = vadd.f32 %v2482, %v2534
    %v2536 = vpop.f32.mrb[0].mxu0
    %v2537 = vadd.f32 %v2484, %v2536
    %2538 = vdwg.mxu0
    %2539 = vmatprep.subr.bf16.mxu0 %v2001
    %2540 = vmatpush1.bf16.msra.mxu0 %v2000
    %2541 = vmatprep.subr.bf16.mxu0 %v2005
    %2542 = vmatpush1.bf16.msra.mxu0 %v2004
    %2543 = vmatprep.subr.bf16.mxu0 %v2009
    %2544 = vmatpush1.bf16.msra.mxu0 %v2008
    %2545 = vmatprep.subr.bf16.mxu0 %v2013
    %2546 = vmatpush1.bf16.msra.mxu0 %v2012
    %2547 = vmatprep.subr.bf16.mxu0 %v2017
    %2548 = vmatpush1.bf16.msra.mxu0 %v2016
    %2549 = vmatprep.subr.bf16.mxu0 %v2021
    %2550 = vmatpush1.bf16.msra.mxu0 %v2020
    %2551 = vmatprep.subr.bf16.mxu0 %v2025
    %2552 = vmatpush1.bf16.msra.mxu0 %v2024
    %2553 = vmatprep.subr.bf16.mxu0 %v2029
    %2554 = vmatpush1.bf16.msra.mxu0 %v2028
    %2555 = vmatprep.subr.bf16.mxu0 %v2033
    %2556 = vmatpush1.bf16.msra.mxu0 %v2032
    %2557 = vmatprep.subr.bf16.mxu0 %v2037
    %2558 = vmatpush1.bf16.msra.mxu0 %v2036
    %2559 = vmatprep.subr.bf16.mxu0 %v2041
    %2560 = vmatpush1.bf16.msra.mxu0 %v2040
    %2561 = vmatprep.subr.bf16.mxu0 %v2045
    %2562 = vmatpush1.bf16.msra.mxu0 %v2044
    %2563 = vmatprep.subr.bf16.mxu0 %v2049
    %2564 = vmatpush1.bf16.msra.mxu0 %v2048
    %2565 = vmatprep.subr.bf16.mxu0 %v2053
    %2566 = vmatpush1.bf16.msra.mxu0 %v2052
    %2567 = vmatprep.subr.bf16.mxu0 %v2057
    %2568 = vmatpush1.bf16.msra.mxu0 %v2056
    %2569 = vmatprep.subr.bf16.mxu0 %v2061
    %2570 = vmatpush1.bf16.msra.mxu0 %v2060
    %2571 = vmatprep.mubr.bf16.mxu0 %v2417
    %2572 = vmatmul.mubr.bf16.gmra.mrb[0].mxu0 %v2414
    %v2573 = vpop.f32.mrb[0].mxu0
    %v2574 = vadd.f32 0.0, %v2573
    %v2575 = vpop.f32.mrb[0].mxu0
    %v2576 = vadd.f32 0.0, %v2575
    %v2577 = vpop.f32.mrb[0].mxu0
    %v2578 = vadd.f32 0.0, %v2577
    %v2579 = vpop.f32.mrb[0].mxu0
    %v2580 = vadd.f32 0.0, %v2579
    %2581 = vmatprep.mubr.bf16.mxu0 %v2424
    %2582 = vmatmul.mubr.bf16.gmra.mrb[0].mxu0 %v2422
    %v2583 = vpop.f32.mrb[0].mxu0
    %v2584 = vadd.f32 0.0, %v2583
    %v2585 = vpop.f32.mrb[0].mxu0
    %v2586 = vadd.f32 0.0, %v2585
    %v2587 = vpop.f32.mrb[0].mxu0
    %v2588 = vadd.f32 0.0, %v2587
    %v2589 = vpop.f32.mrb[0].mxu0
    %v2590 = vadd.f32 0.0, %v2589
    %2591 = vdwg.mxu0
    %2592 = vmatprep.subr.bf16.mxu0 %v2065
    %2593 = vmatpush1.bf16.msra.mxu0 %v2064
    %2594 = vmatprep.subr.bf16.mxu0 %v2069
    %2595 = vmatpush1.bf16.msra.mxu0 %v2068
    %2596 = vmatprep.subr.bf16.mxu0 %v2073
    %2597 = vmatpush1.bf16.msra.mxu0 %v2072
    %2598 = vmatprep.subr.bf16.mxu0 %v2077
    %2599 = vmatpush1.bf16.msra.mxu0 %v2076
    %2600 = vmatprep.subr.bf16.mxu0 %v2081
    %2601 = vmatpush1.bf16.msra.mxu0 %v2080
    %2602 = vmatprep.subr.bf16.mxu0 %v2085
    %2603 = vmatpush1.bf16.msra.mxu0 %v2084
    %2604 = vmatprep.subr.bf16.mxu0 %v2089
    %2605 = vmatpush1.bf16.msra.mxu0 %v2088
    %2606 = vmatprep.subr.bf16.mxu0 %v2093
    %2607 = vmatpush1.bf16.msra.mxu0 %v2092
    %2608 = vmatprep.subr.bf16.mxu0 0
    %2609 = vmatpush1.bf16.msra.mxu0 0
    %2610 = vmatprep.subr.bf16.mxu0 0
    %2611 = vmatpush1.bf16.msra.mxu0 0
    %2612 = vmatprep.subr.bf16.mxu0 0
    %2613 = vmatpush1.bf16.msra.mxu0 0
    %2614 = vmatprep.subr.bf16.mxu0 0
    %2615 = vmatpush1.bf16.msra.mxu0 0
    %2616 = vmatprep.subr.bf16.mxu0 0
    %2617 = vmatpush1.bf16.msra.mxu0 0
    %2618 = vmatprep.subr.bf16.mxu0 0
    %2619 = vmatpush1.bf16.msra.mxu0 0
    %2620 = vmatprep.subr.bf16.mxu0 0
    %2621 = vmatpush1.bf16.msra.mxu0 0
    %2622 = vmatprep.subr.bf16.mxu0 0
    %2623 = vmatpush1.bf16.msra.mxu0 0
    %2624 = vmatprep.mubr.bf16.mxu0 0
    %2625 = vmatmul.mubr.bf16.gmra.mrb[0].mxu0 %v2420
    %v2626 = vpop.f32.mrb[0].mxu0
    %v2627 = vadd.f32 %v2574, %v2626
    %v2628 = vpop.f32.mrb[0].mxu0
    %v2629 = vadd.f32 %v2576, %v2628
    %v2630 = vpop.f32.mrb[0].mxu0
    %v2631 = vadd.f32 %v2578, %v2630
    %v2632 = vpop.f32.mrb[0].mxu0
    %v2633 = vadd.f32 %v2580, %v2632
    %2634 = vmatprep.mubr.bf16.mxu0 0
    %2635 = vmatmul.mubr.bf16.gmra.mrb[0].mxu0 %v2426
    %v2636 = vpop.f32.mrb[0].mxu0
    %v2637 = vadd.f32 %v2584, %v2636
    %v2638 = vpop.f32.mrb[0].mxu0
    %v2639 = vadd.f32 %v2586, %v2638
    %v2640 = vpop.f32.mrb[0].mxu0
    %v2641 = vadd.f32 %v2588, %v2640
    %v2642 = vpop.f32.mrb[0].mxu0
    %v2643 = vadd.f32 %v2590, %v2642
    %2644 = vdwg.mxu0
    %v2741 = vunpack.c.l.b16 %v1517
    %v2742 = vunpack.c.h.b16 %v1517
    %v2743 = vunpack.c.l.b16 %v1518
    %v2744 = vunpack.c.h.b16 %v1518
    %v2745 = vunpack.c.l.b16 %v1519
    %v2746 = vunpack.c.h.b16 %v1519
    %v2747 = vunpack.c.l.b16 %v1520
    %v2748 = vunpack.c.h.b16 %v1520
    %v2749 = vunpack.c.l.b16 %v1521
    %v2750 = vunpack.c.h.b16 %v1521
    %v2751 = vunpack.c.l.b16 %v1522
    %v2752 = vunpack.c.h.b16 %v1522
    %v2753 = vunpack.c.l.b16 %v1523
    %v2754 = vunpack.c.h.b16 %v1523
    %v2755 = vunpack.c.l.b16 %v1524
    %v2756 = vunpack.c.h.b16 %v1524
    %v2757 = vunpack.c.l.b16 %v1525
    %v2758 = vunpack.c.h.b16 %v1525
    %v2759 = vunpack.c.l.b16 %v1526
    %v2760 = vunpack.c.h.b16 %v1526
    %v2761 = vunpack.c.l.b16 %v1527
    %v2762 = vunpack.c.h.b16 %v1527
    %v2763 = vunpack.c.l.b16 %v1528
    %v2764 = vunpack.c.h.b16 %v1528
    %v2765 = vunpack.c.l.b16 %v1529
    %v2766 = vunpack.c.h.b16 %v1529
    %v2767 = vunpack.c.l.b16 %v1530
    %v2768 = vunpack.c.h.b16 %v1530
    %v2769 = vunpack.c.l.b16 %v1531
    %v2770 = vunpack.c.h.b16 %v1531
    %v2771 = vunpack.c.l.b16 %v1532
    %v2772 = vunpack.c.h.b16 %v1532
    %v2773 = vunpack.c.l.b16 %v1533
    %v2774 = vunpack.c.h.b16 %v1533
    %v2775 = vunpack.c.l.b16 %v1534
    %v2776 = vunpack.c.h.b16 %v1534
    %v2777 = vunpack.c.l.b16 %v1535
    %v2778 = vunpack.c.h.b16 %v1535
    %v2779 = vunpack.c.l.b16 %v1536
    %v2780 = vunpack.c.h.b16 %v1536
    %v2781 = vunpack.c.l.b16 %v1537
    %v2782 = vunpack.c.h.b16 %v1537
    %v2783 = vunpack.c.l.b16 %v1538
    %v2784 = vunpack.c.h.b16 %v1538
    %v2785 = vunpack.c.l.b16 %v1539
    %v2786 = vunpack.c.h.b16 %v1539
    %v2787 = vunpack.c.l.b16 %v1540
    %v2788 = vunpack.c.h.b16 %v1540
    %v2789 = vunpack.c.l.b16 %v1541
    %v2790 = vunpack.c.h.b16 %v1541
    %v2791 = vunpack.c.l.b16 %v1542
    %v2792 = vunpack.c.h.b16 %v1542
    %v2793 = vunpack.c.l.b16 %v1543
    %v2794 = vunpack.c.h.b16 %v1543
    %v2795 = vunpack.c.l.b16 %v1544
    %v2796 = vunpack.c.h.b16 %v1544
    %v2797 = vunpack.c.l.b16 %v1545
    %v2798 = vunpack.c.h.b16 %v1545
    %v2799 = vunpack.c.l.b16 %v1546
    %v2800 = vunpack.c.h.b16 %v1546
    %v2801 = vunpack.c.l.b16 %v1547
    %v2802 = vunpack.c.h.b16 %v1547
    %v2803 = vunpack.c.l.b16 %v1548
    %v2804 = vunpack.c.h.b16 %v1548
    %v2805 = vunpack.c.l.b16 %v1549
    %v2806 = vunpack.c.h.b16 %v1549
    %v2807 = vunpack.c.l.b16 %v1550
    %v2808 = vunpack.c.h.b16 %v1550
    %v2809 = vunpack.c.l.b16 %v1551
    %v2810 = vunpack.c.h.b16 %v1551
    %v2811 = vunpack.c.l.b16 %v1552
    %v2812 = vunpack.c.h.b16 %v1552
    %v2813 = vunpack.c.l.b16 %v1553
    %v2814 = vunpack.c.h.b16 %v1553
    %v2815 = vunpack.c.l.b16 %v1554
    %v2816 = vunpack.c.h.b16 %v1554
    %v2817 = vunpack.c.l.b16 %v1555
    %v2818 = vunpack.c.h.b16 %v1555
    %v2819 = vunpack.c.l.b16 %v1556
    %v2820 = vunpack.c.h.b16 %v1556
    %v2821 = vunpack.c.l.b16 %v1557
    %v2822 = vunpack.c.h.b16 %v1557
    %v2823 = vunpack.c.l.b16 %v1558
    %v2824 = vunpack.c.h.b16 %v1558
    %v2825 = vunpack.c.l.b16 %v1559
    %v2826 = vunpack.c.h.b16 %v1559
    %v2827 = vunpack.c.l.b16 %v1560
    %v2828 = vunpack.c.h.b16 %v1560
    %v2829 = vunpack.c.l.b16 %v1561
    %v2830 = vunpack.c.h.b16 %v1561
    %v2831 = vunpack.c.l.b16 %v1562
    %v2832 = vunpack.c.h.b16 %v1562
    %v2833 = vunpack.c.l.b16 %v1563
    %v2834 = vunpack.c.h.b16 %v1563
    %v2835 = vunpack.c.l.b16 %v1564
    %v2836 = vunpack.c.h.b16 %v1564
    %v2837 = vunpack.c.l.b16 %v1565
    %v2838 = vunpack.c.h.b16 %v1565
    %v2839 = vunpack.c.l.b16 %v1566
    %v2840 = vunpack.c.h.b16 %v1566
    %v2841 = vunpack.c.l.b16 %v1567
    %v2842 = vunpack.c.h.b16 %v1567
    %v2843 = vunpack.c.l.b16 %v1568
    %v2844 = vunpack.c.h.b16 %v1568
    %v2845 = vunpack.c.l.b16 %v1569
    %v2846 = vunpack.c.h.b16 %v1569
    %v2847 = vunpack.c.l.b16 %v1570
    %v2848 = vunpack.c.h.b16 %v1570
    %v2849 = vunpack.c.l.b16 %v1571
    %v2850 = vunpack.c.h.b16 %v1571
    %v2851 = vunpack.c.l.b16 %v1572
    %v2852 = vunpack.c.h.b16 %v1572
    %v2853 = vunpack.c.l.b16 %v1573
    %v2854 = vunpack.c.h.b16 %v1573
    %v2855 = vunpack.c.l.b16 %v1574
    %v2856 = vunpack.c.h.b16 %v1574
    %v2857 = vunpack.c.l.b16 %v1575
    %v2858 = vunpack.c.h.b16 %v1575
    %v2859 = vunpack.c.l.b16 %v1576
    %v2860 = vunpack.c.h.b16 %v1576
    %v2861 = vunpack.c.l.b16 %v1577
    %v2862 = vunpack.c.h.b16 %v1577
    %v2863 = vunpack.c.l.b16 %v1578
    %v2864 = vunpack.c.h.b16 %v1578
    %v2865 = vunpack.c.l.b16 %v1579
    %v2866 = vunpack.c.h.b16 %v1579
    %v2867 = vunpack.c.l.b16 %v1580
    %v2868 = vunpack.c.h.b16 %v1580
    %v2869 = vunpack.c.l.b16 %v1581
    %v2870 = vunpack.c.h.b16 %v1581
    %v2871 = vunpack.c.l.b16 %v1582
    %v2872 = vunpack.c.h.b16 %v1582
    %v2873 = vunpack.c.l.b16 %v1583
    %v2874 = vunpack.c.h.b16 %v1583
    %v2875 = vunpack.c.l.b16 %v1584
    %v2876 = vunpack.c.h.b16 %v1584
    %v2877 = vunpack.c.l.b16 %v1585
    %v2878 = vunpack.c.h.b16 %v1585
    %v2879 = vunpack.c.l.b16 %v1586
    %v2880 = vunpack.c.h.b16 %v1586
    %v2881 = vunpack.c.l.b16 %v1587
    %v2882 = vunpack.c.h.b16 %v1587
    %v2883 = vunpack.c.l.b16 %v1588
    %v2884 = vunpack.c.h.b16 %v1588
    %v2885 = vunpack.c.l.b16 %v1589
    %v2886 = vunpack.c.h.b16 %v1589
    %v2887 = vunpack.c.l.b16 %v1590
    %v2888 = vunpack.c.h.b16 %v1590
    %v2889 = vunpack.c.l.b16 %v1591
    %v2890 = vunpack.c.h.b16 %v1591
    %v2891 = vunpack.c.l.b16 %v1592
    %v2892 = vunpack.c.h.b16 %v1592
    %v2893 = vunpack.c.l.b16 %v1593
    %v2894 = vunpack.c.h.b16 %v1593
    %v2895 = vunpack.c.l.b16 %v1594
    %v2896 = vunpack.c.h.b16 %v1594
    %v2897 = vunpack.c.l.b16 %v1595
    %v2898 = vunpack.c.h.b16 %v1595
    %v2899 = vunpack.c.l.b16 %v1596
    %v2900 = vunpack.c.h.b16 %v1596
    %v2901 = vunpack.c.l.b16 %v1597
    %v2902 = vunpack.c.h.b16 %v1597
    %v2903 = vunpack.c.l.b16 %v1598
    %v2904 = vunpack.c.h.b16 %v1598
    %v2905 = vunpack.c.l.b16 %v1599
    %v2906 = vunpack.c.h.b16 %v1599
    %v2907 = vunpack.c.l.b16 %v1600
    %v2908 = vunpack.c.h.b16 %v1600
    %v2909 = vunpack.c.l.b16 %v1601
    %v2910 = vunpack.c.h.b16 %v1601
    %v2911 = vunpack.c.l.b16 %v1602
    %v2912 = vunpack.c.h.b16 %v1602
    %v2913 = vunpack.c.l.b16 %v1603
    %v2914 = vunpack.c.h.b16 %v1603
    %v2915 = vunpack.c.l.b16 %v1604
    %v2916 = vunpack.c.h.b16 %v1604
    %v2917 = vunpack.c.l.b16 %v1605
    %v2918 = vunpack.c.h.b16 %v1605
    %v2919 = vunpack.c.l.b16 %v1606
    %v2920 = vunpack.c.h.b16 %v1606
    %v2921 = vunpack.c.l.b16 %v1607
    %v2922 = vunpack.c.h.b16 %v1607
    %v2923 = vunpack.c.l.b16 %v1608
    %v2924 = vunpack.c.h.b16 %v1608
    %v2925 = vunpack.c.l.b16 %v1609
    %v2926 = vunpack.c.h.b16 %v1609
    %v2927 = vunpack.c.l.b16 %v1610
    %v2928 = vunpack.c.h.b16 %v1610
    %v2929 = vunpack.c.l.b16 %v1611
    %v2930 = vunpack.c.h.b16 %v1611
    %v2931 = vunpack.c.l.b16 %v1612
    %v2932 = vunpack.c.h.b16 %v1612
    %v2933 = vpack.c.b16 %v2745, %v2741
    %v2934 = vpack.c.b16 %v2746, %v2742
    %v2935 = vpack.c.b16 %v2747, %v2743
    %v2936 = vpack.c.b16 %v2748, %v2744
    %v2937 = vpack.c.b16 %v2753, %v2749
    %v2938 = vpack.c.b16 %v2754, %v2750
    %v2939 = vpack.c.b16 %v2755, %v2751
    %v2940 = vpack.c.b16 %v2756, %v2752
    %v2941 = vpack.c.b16 %v2761, %v2757
    %v2942 = vpack.c.b16 %v2762, %v2758
    %v2943 = vpack.c.b16 %v2763, %v2759
    %v2944 = vpack.c.b16 %v2764, %v2760
    %v2945 = vpack.c.b16 %v2769, %v2765
    %v2946 = vpack.c.b16 %v2770, %v2766
    %v2947 = vpack.c.b16 %v2771, %v2767
    %v2948 = vpack.c.b16 %v2772, %v2768
    %v2949 = vpack.c.b16 %v2777, %v2773
    %v2950 = vpack.c.b16 %v2778, %v2774
    %v2951 = vpack.c.b16 %v2779, %v2775
    %v2952 = vpack.c.b16 %v2780, %v2776
    %v2953 = vpack.c.b16 %v2785, %v2781
    %v2954 = vpack.c.b16 %v2786, %v2782
    %v2955 = vpack.c.b16 %v2787, %v2783
    %v2956 = vpack.c.b16 %v2788, %v2784
    %v2957 = vpack.c.b16 %v2793, %v2789
    %v2958 = vpack.c.b16 %v2794, %v2790
    %v2959 = vpack.c.b16 %v2795, %v2791
    %v2960 = vpack.c.b16 %v2796, %v2792
    %v2961 = vpack.c.b16 %v2801, %v2797
    %v2962 = vpack.c.b16 %v2802, %v2798
    %v2963 = vpack.c.b16 %v2803, %v2799
    %v2964 = vpack.c.b16 %v2804, %v2800
    %v2965 = vpack.c.b16 %v2809, %v2805
    %v2966 = vpack.c.b16 %v2810, %v2806
    %v2967 = vpack.c.b16 %v2811, %v2807
    %v2968 = vpack.c.b16 %v2812, %v2808
    %v2969 = vpack.c.b16 %v2817, %v2813
    %v2970 = vpack.c.b16 %v2818, %v2814
    %v2971 = vpack.c.b16 %v2819, %v2815
    %v2972 = vpack.c.b16 %v2820, %v2816
    %v2973 = vpack.c.b16 %v2825, %v2821
    %v2974 = vpack.c.b16 %v2826, %v2822
    %v2975 = vpack.c.b16 %v2827, %v2823
    %v2976 = vpack.c.b16 %v2828, %v2824
    %v2977 = vpack.c.b16 %v2833, %v2829
    %v2978 = vpack.c.b16 %v2834, %v2830
    %v2979 = vpack.c.b16 %v2835, %v2831
    %v2980 = vpack.c.b16 %v2836, %v2832
    %v2981 = vpack.c.b16 %v2841, %v2837
    %v2982 = vpack.c.b16 %v2842, %v2838
    %v2983 = vpack.c.b16 %v2843, %v2839
    %v2984 = vpack.c.b16 %v2844, %v2840
    %v2985 = vpack.c.b16 %v2849, %v2845
    %v2986 = vpack.c.b16 %v2850, %v2846
    %v2987 = vpack.c.b16 %v2851, %v2847
    %v2988 = vpack.c.b16 %v2852, %v2848
    %v2989 = vpack.c.b16 %v2857, %v2853
    %v2990 = vpack.c.b16 %v2858, %v2854
    %v2991 = vpack.c.b16 %v2859, %v2855
    %v2992 = vpack.c.b16 %v2860, %v2856
    %v2993 = vpack.c.b16 %v2865, %v2861
    %v2994 = vpack.c.b16 %v2866, %v2862
    %v2995 = vpack.c.b16 %v2867, %v2863
    %v2996 = vpack.c.b16 %v2868, %v2864
    %v2997 = vpack.c.b16 %v2873, %v2869
    %v2998 = vpack.c.b16 %v2874, %v2870
    %v2999 = vpack.c.b16 %v2875, %v2871
    %v3000 = vpack.c.b16 %v2876, %v2872
    %v3001 = vpack.c.b16 %v2881, %v2877
    %v3002 = vpack.c.b16 %v2882, %v2878
    %v3003 = vpack.c.b16 %v2883, %v2879
    %v3004 = vpack.c.b16 %v2884, %v2880
    %v3005 = vpack.c.b16 %v2889, %v2885
    %v3006 = vpack.c.b16 %v2890, %v2886
    %v3007 = vpack.c.b16 %v2891, %v2887
    %v3008 = vpack.c.b16 %v2892, %v2888
    %v3009 = vpack.c.b16 %v2897, %v2893
    %v3010 = vpack.c.b16 %v2898, %v2894
    %v3011 = vpack.c.b16 %v2899, %v2895
    %v3012 = vpack.c.b16 %v2900, %v2896
    %v3013 = vpack.c.b16 %v2905, %v2901
    %v3014 = vpack.c.b16 %v2906, %v2902
    %v3015 = vpack.c.b16 %v2907, %v2903
    %v3016 = vpack.c.b16 %v2908, %v2904
    %v3017 = vpack.c.b16 %v2913, %v2909
    %v3018 = vpack.c.b16 %v2914, %v2910
    %v3019 = vpack.c.b16 %v2915, %v2911
    %v3020 = vpack.c.b16 %v2916, %v2912
    %v3021 = vpack.c.b16 %v2921, %v2917
    %v3022 = vpack.c.b16 %v2922, %v2918
    %v3023 = vpack.c.b16 %v2923, %v2919
    %v3024 = vpack.c.b16 %v2924, %v2920
    %v3025 = vpack.c.b16 %v2929, %v2925
    %v3026 = vpack.c.b16 %v2930, %v2926
    %v3027 = vpack.c.b16 %v2931, %v2927
    %v3028 = vpack.c.b16 %v2932, %v2928
    %3125 = vmatprep.subr.bf16.mxu0 %v2934
    %3126 = vmatpush1.bf16.msra.mxu0 %v2933
    %3127 = vmatprep.subr.bf16.mxu0 %v2938
    %3128 = vmatpush1.bf16.msra.mxu0 %v2937
    %3129 = vmatprep.subr.bf16.mxu0 %v2942
    %3130 = vmatpush1.bf16.msra.mxu0 %v2941
    %3131 = vmatprep.subr.bf16.mxu0 %v2946
    %3132 = vmatpush1.bf16.msra.mxu0 %v2945
    %3133 = vmatprep.subr.bf16.mxu0 %v2950
    %3134 = vmatpush1.bf16.msra.mxu0 %v2949
    %3135 = vmatprep.subr.bf16.mxu0 %v2954
    %3136 = vmatpush1.bf16.msra.mxu0 %v2953
    %3137 = vmatprep.subr.bf16.mxu0 %v2958
    %3138 = vmatpush1.bf16.msra.mxu0 %v2957
    %3139 = vmatprep.subr.bf16.mxu0 %v2962
    %3140 = vmatpush1.bf16.msra.mxu0 %v2961
    %3141 = vmatprep.subr.bf16.mxu0 %v2966
    %3142 = vmatpush1.bf16.msra.mxu0 %v2965
    %3143 = vmatprep.subr.bf16.mxu0 %v2970
    %3144 = vmatpush1.bf16.msra.mxu0 %v2969
    %3145 = vmatprep.subr.bf16.mxu0 %v2974
    %3146 = vmatpush1.bf16.msra.mxu0 %v2973
    %3147 = vmatprep.subr.bf16.mxu0 %v2978
    %3148 = vmatpush1.bf16.msra.mxu0 %v2977
    %3149 = vmatprep.subr.bf16.mxu0 %v2982
    %3150 = vmatpush1.bf16.msra.mxu0 %v2981
    %3151 = vmatprep.subr.bf16.mxu0 %v2986
    %3152 = vmatpush1.bf16.msra.mxu0 %v2985
    %3153 = vmatprep.subr.bf16.mxu0 %v2990
    %3154 = vmatpush1.bf16.msra.mxu0 %v2989
    %3155 = vmatprep.subr.bf16.mxu0 %v2994
    %3156 = vmatpush1.bf16.msra.mxu0 %v2993
    %3157 = vmatprep.mubr.bf16.mxu0 %v964
    %3158 = vmatmul.mubr.bf16.gmra.mrb[0].mxu0 %v963
    %v3159 = vpop.f32.mrb[0].mxu0
    %v3160 = vadd.f32 %v2278, %v3159
    %v3161 = vpop.f32.mrb[0].mxu0
    %v3162 = vadd.f32 %v2280, %v3161
    %v3163 = vpop.f32.mrb[0].mxu0
    %v3164 = vadd.f32 %v2282, %v3163
    %v3165 = vpop.f32.mrb[0].mxu0
    %v3166 = vadd.f32 %v2284, %v3165
    %3167 = vmatprep.mubr.bf16.mxu0 %v967
    %3168 = vmatmul.mubr.bf16.gmra.mrb[0].mxu0 %v966
    %v3169 = vpop.f32.mrb[0].mxu0
    %v3170 = vadd.f32 %v2288, %v3169
    %v3171 = vpop.f32.mrb[0].mxu0
    %v3172 = vadd.f32 %v2290, %v3171
    %v3173 = vpop.f32.mrb[0].mxu0
    %v3174 = vadd.f32 %v2292, %v3173
    %v3175 = vpop.f32.mrb[0].mxu0
    %v3176 = vadd.f32 %v2294, %v3175
    %3177 = vdwg.mxu0
    %3178 = vmatprep.subr.bf16.mxu0 %v2998
    %3179 = vmatpush1.bf16.msra.mxu0 %v2997
    %3180 = vmatprep.subr.bf16.mxu0 %v3002
    %3181 = vmatpush1.bf16.msra.mxu0 %v3001
    %3182 = vmatprep.subr.bf16.mxu0 %v3006
    %3183 = vmatpush1.bf16.msra.mxu0 %v3005
    %3184 = vmatprep.subr.bf16.mxu0 %v3010
    %3185 = vmatpush1.bf16.msra.mxu0 %v3009
    %3186 = vmatprep.subr.bf16.mxu0 %v3014
    %3187 = vmatpush1.bf16.msra.mxu0 %v3013
    %3188 = vmatprep.subr.bf16.mxu0 %v3018
    %3189 = vmatpush1.bf16.msra.mxu0 %v3017
    %3190 = vmatprep.subr.bf16.mxu0 %v3022
    %3191 = vmatpush1.bf16.msra.mxu0 %v3021
    %3192 = vmatprep.subr.bf16.mxu0 %v3026
    %3193 = vmatpush1.bf16.msra.mxu0 %v3025
    %3194 = vmatprep.subr.bf16.mxu0 0
    %3195 = vmatpush1.bf16.msra.mxu0 0
    %3196 = vmatprep.subr.bf16.mxu0 0
    %3197 = vmatpush1.bf16.msra.mxu0 0
    %3198 = vmatprep.subr.bf16.mxu0 0
    %3199 = vmatpush1.bf16.msra.mxu0 0
    %3200 = vmatprep.subr.bf16.mxu0 0
    %3201 = vmatpush1.bf16.msra.mxu0 0
    %3202 = vmatprep.subr.bf16.mxu0 0
    %3203 = vmatpush1.bf16.msra.mxu0 0
    %3204 = vmatprep.subr.bf16.mxu0 0
    %3205 = vmatpush1.bf16.msra.mxu0 0
    %3206 = vmatprep.subr.bf16.mxu0 0
    %3207 = vmatpush1.bf16.msra.mxu0 0
    %3208 = vmatprep.subr.bf16.mxu0 0
    %3209 = vmatpush1.bf16.msra.mxu0 0
    %3210 = vmatprep.mubr.bf16.mxu0 0
    %3211 = vmatmul.mubr.bf16.gmra.mrb[0].mxu0 %v965
    %v3212 = vpop.f32.mrb[0].mxu0
    %v3213 = vadd.f32 %v3160, %v3212
    %v3214 = vpop.f32.mrb[0].mxu0
    %v3215 = vadd.f32 %v3162, %v3214
    %v3216 = vpop.f32.mrb[0].mxu0
    %v3217 = vadd.f32 %v3164, %v3216
    %v3218 = vpop.f32.mrb[0].mxu0
    %v3219 = vadd.f32 %v3166, %v3218
    %3220 = vmatprep.mubr.bf16.mxu0 0
    %3221 = vmatmul.mubr.bf16.gmra.mrb[0].mxu0 %v968
    %v3222 = vpop.f32.mrb[0].mxu0
    %v3223 = vadd.f32 %v3170, %v3222
    %v3224 = vpop.f32.mrb[0].mxu0
    %v3225 = vadd.f32 %v3172, %v3224
    %v3226 = vpop.f32.mrb[0].mxu0
    %v3227 = vadd.f32 %v3174, %v3226
    %v3228 = vpop.f32.mrb[0].mxu0
    %v3229 = vadd.f32 %v3176, %v3228
    %3230 = vdwg.mxu0
    %3231 = vmatprep.subr.bf16.mxu0 %v2936
    %3232 = vmatpush1.bf16.msra.mxu0 %v2935
    %3233 = vmatprep.subr.bf16.mxu0 %v2940
    %3234 = vmatpush1.bf16.msra.mxu0 %v2939
    %3235 = vmatprep.subr.bf16.mxu0 %v2944
    %3236 = vmatpush1.bf16.msra.mxu0 %v2943
    %3237 = vmatprep.subr.bf16.mxu0 %v2948
    %3238 = vmatpush1.bf16.msra.mxu0 %v2947
    %3239 = vmatprep.subr.bf16.mxu0 %v2952
    %3240 = vmatpush1.bf16.msra.mxu0 %v2951
    %3241 = vmatprep.subr.bf16.mxu0 %v2956
    %3242 = vmatpush1.bf16.msra.mxu0 %v2955
    %3243 = vmatprep.subr.bf16.mxu0 %v2960
    %3244 = vmatpush1.bf16.msra.mxu0 %v2959
    %3245 = vmatprep.subr.bf16.mxu0 %v2964
    %3246 = vmatpush1.bf16.msra.mxu0 %v2963
    %3247 = vmatprep.subr.bf16.mxu0 %v2968
    %3248 = vmatpush1.bf16.msra.mxu0 %v2967
    %3249 = vmatprep.subr.bf16.mxu0 %v2972
    %3250 = vmatpush1.bf16.msra.mxu0 %v2971
    %3251 = vmatprep.subr.bf16.mxu0 %v2976
    %3252 = vmatpush1.bf16.msra.mxu0 %v2975
    %3253 = vmatprep.subr.bf16.mxu0 %v2980
    %3254 = vmatpush1.bf16.msra.mxu0 %v2979
    %3255 = vmatprep.subr.bf16.mxu0 %v2984
    %3256 = vmatpush1.bf16.msra.mxu0 %v2983
    %3257 = vmatprep.subr.bf16.mxu0 %v2988
    %3258 = vmatpush1.bf16.msra.mxu0 %v2987
    %3259 = vmatprep.subr.bf16.mxu0 %v2992
    %3260 = vmatpush1.bf16.msra.mxu0 %v2991
    %3261 = vmatprep.subr.bf16.mxu0 %v2996
    %3262 = vmatpush1.bf16.msra.mxu0 %v2995
    %3263 = vmatprep.mubr.bf16.mxu0 %v964
    %3264 = vmatmul.mubr.bf16.gmra.mrb[0].mxu0 %v963
    %v3265 = vpop.f32.mrb[0].mxu0
    %v3266 = vadd.f32 %v2384, %v3265
    %v3267 = vpop.f32.mrb[0].mxu0
    %v3268 = vadd.f32 %v2386, %v3267
    %v3269 = vpop.f32.mrb[0].mxu0
    %v3270 = vadd.f32 %v2388, %v3269
    %v3271 = vpop.f32.mrb[0].mxu0
    %v3272 = vadd.f32 %v2390, %v3271
    %3273 = vmatprep.mubr.bf16.mxu0 %v967
    %3274 = vmatmul.mubr.bf16.gmra.mrb[0].mxu0 %v966
    %v3275 = vpop.f32.mrb[0].mxu0
    %v3276 = vadd.f32 %v2394, %v3275
    %v3277 = vpop.f32.mrb[0].mxu0
    %v3278 = vadd.f32 %v2396, %v3277
    %v3279 = vpop.f32.mrb[0].mxu0
    %v3280 = vadd.f32 %v2398, %v3279
    %v3281 = vpop.f32.mrb[0].mxu0
    %v3282 = vadd.f32 %v2400, %v3281
    %3283 = vdwg.mxu0
    %3284 = vmatprep.subr.bf16.mxu0 %v3000
    %3285 = vmatpush1.bf16.msra.mxu0 %v2999
    %3286 = vmatprep.subr.bf16.mxu0 %v3004
    %3287 = vmatpush1.bf16.msra.mxu0 %v3003
    %3288 = vmatprep.subr.bf16.mxu0 %v3008
    %3289 = vmatpush1.bf16.msra.mxu0 %v3007
    %3290 = vmatprep.subr.bf16.mxu0 %v3012
    %3291 = vmatpush1.bf16.msra.mxu0 %v3011
    %3292 = vmatprep.subr.bf16.mxu0 %v3016
    %3293 = vmatpush1.bf16.msra.mxu0 %v3015
    %3294 = vmatprep.subr.bf16.mxu0 %v3020
    %3295 = vmatpush1.bf16.msra.mxu0 %v3019
    %3296 = vmatprep.subr.bf16.mxu0 %v3024
    %3297 = vmatpush1.bf16.msra.mxu0 %v3023
    %3298 = vmatprep.subr.bf16.mxu0 %v3028
    %3299 = vmatpush1.bf16.msra.mxu0 %v3027
    %3300 = vmatprep.subr.bf16.mxu0 0
    %3301 = vmatpush1.bf16.msra.mxu0 0
    %3302 = vmatprep.subr.bf16.mxu0 0
    %3303 = vmatpush1.bf16.msra.mxu0 0
    %3304 = vmatprep.subr.bf16.mxu0 0
    %3305 = vmatpush1.bf16.msra.mxu0 0
    %3306 = vmatprep.subr.bf16.mxu0 0
    %3307 = vmatpush1.bf16.msra.mxu0 0
    %3308 = vmatprep.subr.bf16.mxu0 0
    %3309 = vmatpush1.bf16.msra.mxu0 0
    %3310 = vmatprep.subr.bf16.mxu0 0
    %3311 = vmatpush1.bf16.msra.mxu0 0
    %3312 = vmatprep.subr.bf16.mxu0 0
    %3313 = vmatpush1.bf16.msra.mxu0 0
    %3314 = vmatprep.subr.bf16.mxu0 0
    %3315 = vmatpush1.bf16.msra.mxu0 0
    %3316 = vmatprep.mubr.bf16.mxu0 0
    %3317 = vmatmul.mubr.bf16.gmra.mrb[0].mxu0 %v965
    %v3318 = vpop.f32.mrb[0].mxu0
    %v3319 = vadd.f32 %v3266, %v3318
    %v3320 = vpop.f32.mrb[0].mxu0
    %v3321 = vadd.f32 %v3268, %v3320
    %v3322 = vpop.f32.mrb[0].mxu0
    %v3323 = vadd.f32 %v3270, %v3322
    %v3324 = vpop.f32.mrb[0].mxu0
    %v3325 = vadd.f32 %v3272, %v3324
    %3326 = vmatprep.mubr.bf16.mxu0 0
    %3327 = vmatmul.mubr.bf16.gmra.mrb[0].mxu0 %v968
    %v3328 = vpop.f32.mrb[0].mxu0
    %v3329 = vadd.f32 %v3276, %v3328
    %v3330 = vpop.f32.mrb[0].mxu0
    %v3331 = vadd.f32 %v3278, %v3330
    %v3332 = vpop.f32.mrb[0].mxu0
    %v3333 = vadd.f32 %v3280, %v3332
    %v3334 = vpop.f32.mrb[0].mxu0
    %v3335 = vadd.f32 %v3282, %v3334
    %3336 = vdwg.mxu0
    %3337 = vmatprep.subr.bf16.mxu0 %v2934
    %3338 = vmatpush1.bf16.msra.mxu0 %v2933
    %3339 = vmatprep.subr.bf16.mxu0 %v2938
    %3340 = vmatpush1.bf16.msra.mxu0 %v2937
    %3341 = vmatprep.subr.bf16.mxu0 %v2942
    %3342 = vmatpush1.bf16.msra.mxu0 %v2941
    %3343 = vmatprep.subr.bf16.mxu0 %v2946
    %3344 = vmatpush1.bf16.msra.mxu0 %v2945
    %3345 = vmatprep.subr.bf16.mxu0 %v2950
    %3346 = vmatpush1.bf16.msra.mxu0 %v2949
    %3347 = vmatprep.subr.bf16.mxu0 %v2954
    %3348 = vmatpush1.bf16.msra.mxu0 %v2953
    %3349 = vmatprep.subr.bf16.mxu0 %v2958
    %3350 = vmatpush1.bf16.msra.mxu0 %v2957
    %3351 = vmatprep.subr.bf16.mxu0 %v2962
    %3352 = vmatpush1.bf16.msra.mxu0 %v2961
    %3353 = vmatprep.subr.bf16.mxu0 %v2966
    %3354 = vmatpush1.bf16.msra.mxu0 %v2965
    %3355 = vmatprep.subr.bf16.mxu0 %v2970
    %3356 = vmatpush1.bf16.msra.mxu0 %v2969
    %3357 = vmatprep.subr.bf16.mxu0 %v2974
    %3358 = vmatpush1.bf16.msra.mxu0 %v2973
    %3359 = vmatprep.subr.bf16.mxu0 %v2978
    %3360 = vmatpush1.bf16.msra.mxu0 %v2977
    %3361 = vmatprep.subr.bf16.mxu0 %v2982
    %3362 = vmatpush1.bf16.msra.mxu0 %v2981
    %3363 = vmatprep.subr.bf16.mxu0 %v2986
    %3364 = vmatpush1.bf16.msra.mxu0 %v2985
    %3365 = vmatprep.subr.bf16.mxu0 %v2990
    %3366 = vmatpush1.bf16.msra.mxu0 %v2989
    %3367 = vmatprep.subr.bf16.mxu0 %v2994
    %3368 = vmatpush1.bf16.msra.mxu0 %v2993
    %3369 = vmatprep.mubr.bf16.mxu0 %v1509
    %3370 = vmatmul.mubr.bf16.gmra.mrb[0].mxu0 %v1508
    %v3371 = vpop.f32.mrb[0].mxu0
    %v3372 = vadd.f32 %v2521, %v3371
    %v3373 = vpop.f32.mrb[0].mxu0
    %v3374 = vadd.f32 %v2523, %v3373
    %v3375 = vpop.f32.mrb[0].mxu0
    %v3376 = vadd.f32 %v2525, %v3375
    %v3377 = vpop.f32.mrb[0].mxu0
    %v3378 = vadd.f32 %v2527, %v3377
    %3379 = vmatprep.mubr.bf16.mxu0 %v1512
    %3380 = vmatmul.mubr.bf16.gmra.mrb[0].mxu0 %v1511
    %v3381 = vpop.f32.mrb[0].mxu0
    %v3382 = vadd.f32 %v2531, %v3381
    %v3383 = vpop.f32.mrb[0].mxu0
    %v3384 = vadd.f32 %v2533, %v3383
    %v3385 = vpop.f32.mrb[0].mxu0
    %v3386 = vadd.f32 %v2535, %v3385
    %v3387 = vpop.f32.mrb[0].mxu0
    %v3388 = vadd.f32 %v2537, %v3387
    %3389 = vdwg.mxu0
    %3390 = vmatprep.subr.bf16.mxu0 %v2998
    %3391 = vmatpush1.bf16.msra.mxu0 %v2997
    %3392 = vmatprep.subr.bf16.mxu0 %v3002
    %3393 = vmatpush1.bf16.msra.mxu0 %v3001
    %3394 = vmatprep.subr.bf16.mxu0 %v3006
    %3395 = vmatpush1.bf16.msra.mxu0 %v3005
    %3396 = vmatprep.subr.bf16.mxu0 %v3010
    %3397 = vmatpush1.bf16.msra.mxu0 %v3009
    %3398 = vmatprep.subr.bf16.mxu0 %v3014
    %3399 = vmatpush1.bf16.msra.mxu0 %v3013
    %3400 = vmatprep.subr.bf16.mxu0 %v3018
    %3401 = vmatpush1.bf16.msra.mxu0 %v3017
    %3402 = vmatprep.subr.bf16.mxu0 %v3022
    %3403 = vmatpush1.bf16.msra.mxu0 %v3021
    %3404 = vmatprep.subr.bf16.mxu0 %v3026
    %3405 = vmatpush1.bf16.msra.mxu0 %v3025
    %3406 = vmatprep.subr.bf16.mxu0 0
    %3407 = vmatpush1.bf16.msra.mxu0 0
    %3408 = vmatprep.subr.bf16.mxu0 0
    %3409 = vmatpush1.bf16.msra.mxu0 0
    %3410 = vmatprep.subr.bf16.mxu0 0
    %3411 = vmatpush1.bf16.msra.mxu0 0
    %3412 = vmatprep.subr.bf16.mxu0 0
    %3413 = vmatpush1.bf16.msra.mxu0 0
    %3414 = vmatprep.subr.bf16.mxu0 0
    %3415 = vmatpush1.bf16.msra.mxu0 0
    %3416 = vmatprep.subr.bf16.mxu0 0
    %3417 = vmatpush1.bf16.msra.mxu0 0
    %3418 = vmatprep.subr.bf16.mxu0 0
    %3419 = vmatpush1.bf16.msra.mxu0 0
    %3420 = vmatprep.subr.bf16.mxu0 0
    %3421 = vmatpush1.bf16.msra.mxu0 0
    %3422 = vmatprep.mubr.bf16.mxu0 0
    %3423 = vmatmul.mubr.bf16.gmra.mrb[0].mxu0 %v1510
    %v3424 = vpop.f32.mrb[0].mxu0
    %v3425 = vadd.f32 %v3372, %v3424
    %v3426 = vpop.f32.mrb[0].mxu0
    %v3427 = vadd.f32 %v3374, %v3426
    %v3428 = vpop.f32.mrb[0].mxu0
    %v3429 = vadd.f32 %v3376, %v3428
    %v3430 = vpop.f32.mrb[0].mxu0
    %v3431 = vadd.f32 %v3378, %v3430
    %3432 = vmatprep.mubr.bf16.mxu0 0
    %3433 = vmatmul.mubr.bf16.gmra.mrb[0].mxu0 %v1513
    %v3434 = vpop.f32.mrb[0].mxu0
    %v3435 = vadd.f32 %v3382, %v3434
    %v3436 = vpop.f32.mrb[0].mxu0
    %v3437 = vadd.f32 %v3384, %v3436
    %v3438 = vpop.f32.mrb[0].mxu0
    %v3439 = vadd.f32 %v3386, %v3438
    %v3440 = vpop.f32.mrb[0].mxu0
    %v3441 = vadd.f32 %v3388, %v3440
    %3442 = vdwg.mxu0
    %3443 = vmatprep.subr.bf16.mxu0 %v2936
    %3444 = vmatpush1.bf16.msra.mxu0 %v2935
    %3445 = vmatprep.subr.bf16.mxu0 %v2940
    %3446 = vmatpush1.bf16.msra.mxu0 %v2939
    %3447 = vmatprep.subr.bf16.mxu0 %v2944
    %3448 = vmatpush1.bf16.msra.mxu0 %v2943
    %3449 = vmatprep.subr.bf16.mxu0 %v2948
    %3450 = vmatpush1.bf16.msra.mxu0 %v2947
    %3451 = vmatprep.subr.bf16.mxu0 %v2952
    %3452 = vmatpush1.bf16.msra.mxu0 %v2951
    %3453 = vmatprep.subr.bf16.mxu0 %v2956
    %3454 = vmatpush1.bf16.msra.mxu0 %v2955
    %3455 = vmatprep.subr.bf16.mxu0 %v2960
    %3456 = vmatpush1.bf16.msra.mxu0 %v2959
    %3457 = vmatprep.subr.bf16.mxu0 %v2964
    %3458 = vmatpush1.bf16.msra.mxu0 %v2963
    %3459 = vmatprep.subr.bf16.mxu0 %v2968
    %3460 = vmatpush1.bf16.msra.mxu0 %v2967
    %3461 = vmatprep.subr.bf16.mxu0 %v2972
    %3462 = vmatpush1.bf16.msra.mxu0 %v2971
    %3463 = vmatprep.subr.bf16.mxu0 %v2976
    %3464 = vmatpush1.bf16.msra.mxu0 %v2975
    %3465 = vmatprep.subr.bf16.mxu0 %v2980
    %3466 = vmatpush1.bf16.msra.mxu0 %v2979
    %3467 = vmatprep.subr.bf16.mxu0 %v2984
    %3468 = vmatpush1.bf16.msra.mxu0 %v2983
    %3469 = vmatprep.subr.bf16.mxu0 %v2988
    %3470 = vmatpush1.bf16.msra.mxu0 %v2987
    %3471 = vmatprep.subr.bf16.mxu0 %v2992
    %3472 = vmatpush1.bf16.msra.mxu0 %v2991
    %3473 = vmatprep.subr.bf16.mxu0 %v2996
    %3474 = vmatpush1.bf16.msra.mxu0 %v2995
    %3475 = vmatprep.mubr.bf16.mxu0 %v1509
    %3476 = vmatmul.mubr.bf16.gmra.mrb[0].mxu0 %v1508
    %v3477 = vpop.f32.mrb[0].mxu0
    %v3478 = vadd.f32 %v2627, %v3477
    %v3479 = vpop.f32.mrb[0].mxu0
    %v3480 = vadd.f32 %v2629, %v3479
    %v3481 = vpop.f32.mrb[0].mxu0
    %v3482 = vadd.f32 %v2631, %v3481
    %v3483 = vpop.f32.mrb[0].mxu0
    %v3484 = vadd.f32 %v2633, %v3483
    %3485 = vmatprep.mubr.bf16.mxu0 %v1512
    %3486 = vmatmul.mubr.bf16.gmra.mrb[0].mxu0 %v1511
    %v3487 = vpop.f32.mrb[0].mxu0
    %v3488 = vadd.f32 %v2637, %v3487
    %v3489 = vpop.f32.mrb[0].mxu0
    %v3490 = vadd.f32 %v2639, %v3489
    %v3491 = vpop.f32.mrb[0].mxu0
    %v3492 = vadd.f32 %v2641, %v3491
    %v3493 = vpop.f32.mrb[0].mxu0
    %v3494 = vadd.f32 %v2643, %v3493
    %3495 = vdwg.mxu0
    %3496 = vmatprep.subr.bf16.mxu0 %v3000
    %3497 = vmatpush1.bf16.msra.mxu0 %v2999
    %3498 = vmatprep.subr.bf16.mxu0 %v3004
    %3499 = vmatpush1.bf16.msra.mxu0 %v3003
    %3500 = vmatprep.subr.bf16.mxu0 %v3008
    %3501 = vmatpush1.bf16.msra.mxu0 %v3007
    %3502 = vmatprep.subr.bf16.mxu0 %v3012
    %3503 = vmatpush1.bf16.msra.mxu0 %v3011
    %3504 = vmatprep.subr.bf16.mxu0 %v3016
    %3505 = vmatpush1.bf16.msra.mxu0 %v3015
    %3506 = vmatprep.subr.bf16.mxu0 %v3020
    %3507 = vmatpush1.bf16.msra.mxu0 %v3019
    %3508 = vmatprep.subr.bf16.mxu0 %v3024
    %3509 = vmatpush1.bf16.msra.mxu0 %v3023
    %3510 = vmatprep.subr.bf16.mxu0 %v3028
    %3511 = vmatpush1.bf16.msra.mxu0 %v3027
    %3512 = vmatprep.subr.bf16.mxu0 0
    %3513 = vmatpush1.bf16.msra.mxu0 0
    %3514 = vmatprep.subr.bf16.mxu0 0
    %3515 = vmatpush1.bf16.msra.mxu0 0
    %3516 = vmatprep.subr.bf16.mxu0 0
    %3517 = vmatpush1.bf16.msra.mxu0 0
    %3518 = vmatprep.subr.bf16.mxu0 0
    %3519 = vmatpush1.bf16.msra.mxu0 0
    %3520 = vmatprep.subr.bf16.mxu0 0
    %3521 = vmatpush1.bf16.msra.mxu0 0
    %3522 = vmatprep.subr.bf16.mxu0 0
    %3523 = vmatpush1.bf16.msra.mxu0 0
    %3524 = vmatprep.subr.bf16.mxu0 0
    %3525 = vmatpush1.bf16.msra.mxu0 0
    %3526 = vmatprep.subr.bf16.mxu0 0
    %3527 = vmatpush1.bf16.msra.mxu0 0
    %3528 = vmatprep.mubr.bf16.mxu0 0
    %3529 = vmatmul.mubr.bf16.gmra.mrb[0].mxu0 %v1510
    %v3530 = vpop.f32.mrb[0].mxu0
    %v3531 = vadd.f32 %v3478, %v3530
    %v3532 = vpop.f32.mrb[0].mxu0
    %v3533 = vadd.f32 %v3480, %v3532
    %v3534 = vpop.f32.mrb[0].mxu0
    %v3535 = vadd.f32 %v3482, %v3534
    %v3536 = vpop.f32.mrb[0].mxu0
    %v3537 = vadd.f32 %v3484, %v3536
    %3538 = vmatprep.mubr.bf16.mxu0 0
    %3539 = vmatmul.mubr.bf16.gmra.mrb[0].mxu0 %v1513
    %v3540 = vpop.f32.mrb[0].mxu0
    %v3541 = vadd.f32 %v3488, %v3540
    %v3542 = vpop.f32.mrb[0].mxu0
    %v3543 = vadd.f32 %v3490, %v3542
    %v3544 = vpop.f32.mrb[0].mxu0
    %v3545 = vadd.f32 %v3492, %v3544
    %v3546 = vpop.f32.mrb[0].mxu0
    %v3547 = vadd.f32 %v3494, %v3546
    %3548 = vdwg.mxu0
    %s3549 = scalar_lea.vmem [#allocation6], 1536
    %v3550 = vld [vmem:[%s3549] sm:$0xff]
    %v3551 = vld [vmem:[%s3549 + $0x8] sm:$0xff]
    %v3552 = vld [vmem:[%s3549 + $0x10] sm:$0xff]
    %v3553 = vld [vmem:[%s3549 + $0x18] sm:$0xff]
    %v3554 = vld [vmem:[%s3549 + $0x20] sm:$0xff]
    %v3555 = vld [vmem:[%s3549 + $0x28] sm:$0xff]
    %v3556 = vld [vmem:[%s3549 + $0x30] sm:$0xff]
    %v3557 = vld [vmem:[%s3549 + $0x38] sm:$0xff]
    %v3558 = vld [vmem:[%s3549 + $0x40] sm:$0xff]
    %v3559 = vld [vmem:[%s3549 + $0x48] sm:$0xff]
    %v3560 = vld [vmem:[%s3549 + $0x50] sm:$0xff]
    %v3561 = vld [vmem:[%s3549 + $0x58] sm:$0xff]
    %v3562 = vld [vmem:[%s3549 + $0x60] sm:$0xff]
    %v3563 = vld [vmem:[%s3549 + $0x68] sm:$0xff]
    %v3564 = vld [vmem:[%s3549 + $0x70] sm:$0xff]
    %v3565 = vld [vmem:[%s3549 + $0x78] sm:$0xff]
    %v3566 = vld [vmem:[%s3549 + $0x80] sm:$0xff]
    %v3567 = vld [vmem:[%s3549 + $0x88] sm:$0xff]
    %v3568 = vld [vmem:[%s3549 + $0x90] sm:$0xff]
    %v3569 = vld [vmem:[%s3549 + $0x98] sm:$0xff]
    %v3570 = vld [vmem:[%s3549 + $0xa0] sm:$0xff]
    %v3571 = vld [vmem:[%s3549 + $0xa8] sm:$0xff]
    %v3572 = vld [vmem:[%s3549 + $0xb0] sm:$0xff]
    %v3573 = vld [vmem:[%s3549 + $0xb8] sm:$0xff]
    %v3574 = vld [vmem:[%s3549 + $0xc0] sm:$0xff]
    %v3575 = vld [vmem:[%s3549 + $0xc8] sm:$0xff]
    %v3576 = vld [vmem:[%s3549 + $0xd0] sm:$0xff]
    %v3577 = vld [vmem:[%s3549 + $0xd8] sm:$0xff]
    %v3578 = vld [vmem:[%s3549 + $0xe0] sm:$0xff]
    %v3579 = vld [vmem:[%s3549 + $0xe8] sm:$0xff]
    %v3580 = vld [vmem:[%s3549 + $0xf0] sm:$0xff]
    %v3581 = vld [vmem:[%s3549 + $0xf8] sm:$0xff]
    %v3582 = vld [vmem:[%s3549 + $0x100] sm:$0xff]
    %v3583 = vld [vmem:[%s3549 + $0x108] sm:$0xff]
    %v3584 = vld [vmem:[%s3549 + $0x110] sm:$0xff]
    %v3585 = vld [vmem:[%s3549 + $0x118] sm:$0xff]
    %v3586 = vld [vmem:[%s3549 + $0x120] sm:$0xff]
    %v3587 = vld [vmem:[%s3549 + $0x128] sm:$0xff]
    %v3588 = vld [vmem:[%s3549 + $0x130] sm:$0xff]
    %v3589 = vld [vmem:[%s3549 + $0x138] sm:$0xff]
    %v3590 = vld [vmem:[%s3549 + $0x140] sm:$0xff]
    %v3591 = vld [vmem:[%s3549 + $0x148] sm:$0xff]
    %v3592 = vld [vmem:[%s3549 + $0x150] sm:$0xff]
    %v3593 = vld [vmem:[%s3549 + $0x158] sm:$0xff]
    %v3594 = vld [vmem:[%s3549 + $0x160] sm:$0xff]
    %v3595 = vld [vmem:[%s3549 + $0x168] sm:$0xff]
    %v3596 = vld [vmem:[%s3549 + $0x170] sm:$0xff]
    %v3597 = vld [vmem:[%s3549 + $0x178] sm:$0xff]
    %v3598 = vld [vmem:[%s3549 + $0x180] sm:$0xff]
    %v3599 = vld [vmem:[%s3549 + $0x188] sm:$0xff]
    %v3600 = vld [vmem:[%s3549 + $0x190] sm:$0xff]
    %v3601 = vld [vmem:[%s3549 + $0x198] sm:$0xff]
    %v3602 = vld [vmem:[%s3549 + $0x1a0] sm:$0xff]
    %v3603 = vld [vmem:[%s3549 + $0x1a8] sm:$0xff]
    %v3604 = vld [vmem:[%s3549 + $0x1b0] sm:$0xff]
    %v3605 = vld [vmem:[%s3549 + $0x1b8] sm:$0xff]
    %v3606 = vld [vmem:[%s3549 + $0x1c0] sm:$0xff]
    %v3607 = vld [vmem:[%s3549 + $0x1c8] sm:$0xff]
    %v3608 = vld [vmem:[%s3549 + $0x1d0] sm:$0xff]
    %v3609 = vld [vmem:[%s3549 + $0x1d8] sm:$0xff]
    %v3610 = vld [vmem:[%s3549 + $0x1e0] sm:$0xff]
    %v3611 = vld [vmem:[%s3549 + $0x1e8] sm:$0xff]
    %v3612 = vld [vmem:[%s3549 + $0x1f0] sm:$0xff]
    %v3613 = vld [vmem:[%s3549 + $0x1f8] sm:$0xff]
    %v3614 = vld [vmem:[%s3549 + $0x200] sm:$0xff]
    %v3615 = vld [vmem:[%s3549 + $0x208] sm:$0xff]
    %v3616 = vld [vmem:[%s3549 + $0x210] sm:$0xff]
    %v3617 = vld [vmem:[%s3549 + $0x218] sm:$0xff]
    %v3618 = vld [vmem:[%s3549 + $0x220] sm:$0xff]
    %v3619 = vld [vmem:[%s3549 + $0x228] sm:$0xff]
    %v3620 = vld [vmem:[%s3549 + $0x230] sm:$0xff]
    %v3621 = vld [vmem:[%s3549 + $0x238] sm:$0xff]
    %v3622 = vld [vmem:[%s3549 + $0x240] sm:$0xff]
    %v3623 = vld [vmem:[%s3549 + $0x248] sm:$0xff]
    %v3624 = vld [vmem:[%s3549 + $0x250] sm:$0xff]
    %v3625 = vld [vmem:[%s3549 + $0x258] sm:$0xff]
    %v3626 = vld [vmem:[%s3549 + $0x260] sm:$0xff]
    %v3627 = vld [vmem:[%s3549 + $0x268] sm:$0xff]
    %v3628 = vld [vmem:[%s3549 + $0x270] sm:$0xff]
    %v3629 = vld [vmem:[%s3549 + $0x278] sm:$0xff]
    %v3630 = vld [vmem:[%s3549 + $0x280] sm:$0xff]
    %v3631 = vld [vmem:[%s3549 + $0x288] sm:$0xff]
    %v3632 = vld [vmem:[%s3549 + $0x290] sm:$0xff]
    %v3633 = vld [vmem:[%s3549 + $0x298] sm:$0xff]
    %v3634 = vld [vmem:[%s3549 + $0x2a0] sm:$0xff]
    %v3635 = vld [vmem:[%s3549 + $0x2a8] sm:$0xff]
    %v3636 = vld [vmem:[%s3549 + $0x2b0] sm:$0xff]
    %v3637 = vld [vmem:[%s3549 + $0x2b8] sm:$0xff]
    %v3638 = vld [vmem:[%s3549 + $0x2c0] sm:$0xff]
    %v3639 = vld [vmem:[%s3549 + $0x2c8] sm:$0xff]
    %v3640 = vld [vmem:[%s3549 + $0x2d0] sm:$0xff]
    %v3641 = vld [vmem:[%s3549 + $0x2d8] sm:$0xff]
    %v3642 = vld [vmem:[%s3549 + $0x2e0] sm:$0xff]
    %v3643 = vld [vmem:[%s3549 + $0x2e8] sm:$0xff]
    %v3644 = vld [vmem:[%s3549 + $0x2f0] sm:$0xff]
    %v3645 = vld [vmem:[%s3549 + $0x2f8] sm:$0xff]
    %v3742 = vunpack.c.l.b16 %v3550
    %v3743 = vunpack.c.h.b16 %v3550
    %v3744 = vunpack.c.l.b16 %v3551
    %v3745 = vunpack.c.h.b16 %v3551
    %v3746 = vunpack.c.l.b16 %v3552
    %v3747 = vunpack.c.h.b16 %v3552
    %v3748 = vunpack.c.l.b16 %v3553
    %v3749 = vunpack.c.h.b16 %v3553
    %v3750 = vunpack.c.l.b16 %v3554
    %v3751 = vunpack.c.h.b16 %v3554
    %v3752 = vunpack.c.l.b16 %v3555
    %v3753 = vunpack.c.h.b16 %v3555
    %v3754 = vunpack.c.l.b16 %v3556
    %v3755 = vunpack.c.h.b16 %v3556
    %v3756 = vunpack.c.l.b16 %v3557
    %v3757 = vunpack.c.h.b16 %v3557
    %v3758 = vunpack.c.l.b16 %v3558
    %v3759 = vunpack.c.h.b16 %v3558
    %v3760 = vunpack.c.l.b16 %v3559
    %v3761 = vunpack.c.h.b16 %v3559
    %v3762 = vunpack.c.l.b16 %v3560
    %v3763 = vunpack.c.h.b16 %v3560
    %v3764 = vunpack.c.l.b16 %v3561
    %v3765 = vunpack.c.h.b16 %v3561
    %v3766 = vunpack.c.l.b16 %v3562
    %v3767 = vunpack.c.h.b16 %v3562
    %v3768 = vunpack.c.l.b16 %v3563
    %v3769 = vunpack.c.h.b16 %v3563
    %v3770 = vunpack.c.l.b16 %v3564
    %v3771 = vunpack.c.h.b16 %v3564
    %v3772 = vunpack.c.l.b16 %v3565
    %v3773 = vunpack.c.h.b16 %v3565
    %v3774 = vunpack.c.l.b16 %v3566
    %v3775 = vunpack.c.h.b16 %v3566
    %v3776 = vunpack.c.l.b16 %v3567
    %v3777 = vunpack.c.h.b16 %v3567
    %v3778 = vunpack.c.l.b16 %v3568
    %v3779 = vunpack.c.h.b16 %v3568
    %v3780 = vunpack.c.l.b16 %v3569
    %v3781 = vunpack.c.h.b16 %v3569
    %v3782 = vunpack.c.l.b16 %v3570
    %v3783 = vunpack.c.h.b16 %v3570
    %v3784 = vunpack.c.l.b16 %v3571
    %v3785 = vunpack.c.h.b16 %v3571
    %v3786 = vunpack.c.l.b16 %v3572
    %v3787 = vunpack.c.h.b16 %v3572
    %v3788 = vunpack.c.l.b16 %v3573
    %v3789 = vunpack.c.h.b16 %v3573
    %v3790 = vunpack.c.l.b16 %v3574
    %v3791 = vunpack.c.h.b16 %v3574
    %v3792 = vunpack.c.l.b16 %v3575
    %v3793 = vunpack.c.h.b16 %v3575
    %v3794 = vunpack.c.l.b16 %v3576
    %v3795 = vunpack.c.h.b16 %v3576
    %v3796 = vunpack.c.l.b16 %v3577
    %v3797 = vunpack.c.h.b16 %v3577
    %v3798 = vunpack.c.l.b16 %v3578
    %v3799 = vunpack.c.h.b16 %v3578
    %v3800 = vunpack.c.l.b16 %v3579
    %v3801 = vunpack.c.h.b16 %v3579
    %v3802 = vunpack.c.l.b16 %v3580
    %v3803 = vunpack.c.h.b16 %v3580
    %v3804 = vunpack.c.l.b16 %v3581
    %v3805 = vunpack.c.h.b16 %v3581
    %v3806 = vunpack.c.l.b16 %v3582
    %v3807 = vunpack.c.h.b16 %v3582
    %v3808 = vunpack.c.l.b16 %v3583
    %v3809 = vunpack.c.h.b16 %v3583
    %v3810 = vunpack.c.l.b16 %v3584
    %v3811 = vunpack.c.h.b16 %v3584
    %v3812 = vunpack.c.l.b16 %v3585
    %v3813 = vunpack.c.h.b16 %v3585
    %v3814 = vunpack.c.l.b16 %v3586
    %v3815 = vunpack.c.h.b16 %v3586
    %v3816 = vunpack.c.l.b16 %v3587
    %v3817 = vunpack.c.h.b16 %v3587
    %v3818 = vunpack.c.l.b16 %v3588
    %v3819 = vunpack.c.h.b16 %v3588
    %v3820 = vunpack.c.l.b16 %v3589
    %v3821 = vunpack.c.h.b16 %v3589
    %v3822 = vunpack.c.l.b16 %v3590
    %v3823 = vunpack.c.h.b16 %v3590
    %v3824 = vunpack.c.l.b16 %v3591
    %v3825 = vunpack.c.h.b16 %v3591
    %v3826 = vunpack.c.l.b16 %v3592
    %v3827 = vunpack.c.h.b16 %v3592
    %v3828 = vunpack.c.l.b16 %v3593
    %v3829 = vunpack.c.h.b16 %v3593
    %v3830 = vunpack.c.l.b16 %v3594
    %v3831 = vunpack.c.h.b16 %v3594
    %v3832 = vunpack.c.l.b16 %v3595
    %v3833 = vunpack.c.h.b16 %v3595
    %v3834 = vunpack.c.l.b16 %v3596
    %v3835 = vunpack.c.h.b16 %v3596
    %v3836 = vunpack.c.l.b16 %v3597
    %v3837 = vunpack.c.h.b16 %v3597
    %v3838 = vunpack.c.l.b16 %v3598
    %v3839 = vunpack.c.h.b16 %v3598
    %v3840 = vunpack.c.l.b16 %v3599
    %v3841 = vunpack.c.h.b16 %v3599
    %v3842 = vunpack.c.l.b16 %v3600
    %v3843 = vunpack.c.h.b16 %v3600
    %v3844 = vunpack.c.l.b16 %v3601
    %v3845 = vunpack.c.h.b16 %v3601
    %v3846 = vunpack.c.l.b16 %v3602
    %v3847 = vunpack.c.h.b16 %v3602
    %v3848 = vunpack.c.l.b16 %v3603
    %v3849 = vunpack.c.h.b16 %v3603
    %v3850 = vunpack.c.l.b16 %v3604
    %v3851 = vunpack.c.h.b16 %v3604
    %v3852 = vunpack.c.l.b16 %v3605
    %v3853 = vunpack.c.h.b16 %v3605
    %v3854 = vunpack.c.l.b16 %v3606
    %v3855 = vunpack.c.h.b16 %v3606
    %v3856 = vunpack.c.l.b16 %v3607
    %v3857 = vunpack.c.h.b16 %v3607
    %v3858 = vunpack.c.l.b16 %v3608
    %v3859 = vunpack.c.h.b16 %v3608
    %v3860 = vunpack.c.l.b16 %v3609
    %v3861 = vunpack.c.h.b16 %v3609
    %v3862 = vunpack.c.l.b16 %v3610
    %v3863 = vunpack.c.h.b16 %v3610
    %v3864 = vunpack.c.l.b16 %v3611
    %v3865 = vunpack.c.h.b16 %v3611
    %v3866 = vunpack.c.l.b16 %v3612
    %v3867 = vunpack.c.h.b16 %v3612
    %v3868 = vunpack.c.l.b16 %v3613
    %v3869 = vunpack.c.h.b16 %v3613
    %v3870 = vunpack.c.l.b16 %v3614
    %v3871 = vunpack.c.h.b16 %v3614
    %v3872 = vunpack.c.l.b16 %v3615
    %v3873 = vunpack.c.h.b16 %v3615
    %v3874 = vunpack.c.l.b16 %v3616
    %v3875 = vunpack.c.h.b16 %v3616
    %v3876 = vunpack.c.l.b16 %v3617
    %v3877 = vunpack.c.h.b16 %v3617
    %v3878 = vunpack.c.l.b16 %v3618
    %v3879 = vunpack.c.h.b16 %v3618
    %v3880 = vunpack.c.l.b16 %v3619
    %v3881 = vunpack.c.h.b16 %v3619
    %v3882 = vunpack.c.l.b16 %v3620
    %v3883 = vunpack.c.h.b16 %v3620
    %v3884 = vunpack.c.l.b16 %v3621
    %v3885 = vunpack.c.h.b16 %v3621
    %v3886 = vunpack.c.l.b16 %v3622
    %v3887 = vunpack.c.h.b16 %v3622
    %v3888 = vunpack.c.l.b16 %v3623
    %v3889 = vunpack.c.h.b16 %v3623
    %v3890 = vunpack.c.l.b16 %v3624
    %v3891 = vunpack.c.h.b16 %v3624
    %v3892 = vunpack.c.l.b16 %v3625
    %v3893 = vunpack.c.h.b16 %v3625
    %v3894 = vunpack.c.l.b16 %v3626
    %v3895 = vunpack.c.h.b16 %v3626
    %v3896 = vunpack.c.l.b16 %v3627
    %v3897 = vunpack.c.h.b16 %v3627
    %v3898 = vunpack.c.l.b16 %v3628
    %v3899 = vunpack.c.h.b16 %v3628
    %v3900 = vunpack.c.l.b16 %v3629
    %v3901 = vunpack.c.h.b16 %v3629
    %v3902 = vunpack.c.l.b16 %v3630
    %v3903 = vunpack.c.h.b16 %v3630
    %v3904 = vunpack.c.l.b16 %v3631
    %v3905 = vunpack.c.h.b16 %v3631
    %v3906 = vunpack.c.l.b16 %v3632
    %v3907 = vunpack.c.h.b16 %v3632
    %v3908 = vunpack.c.l.b16 %v3633
    %v3909 = vunpack.c.h.b16 %v3633
    %v3910 = vunpack.c.l.b16 %v3634
    %v3911 = vunpack.c.h.b16 %v3634
    %v3912 = vunpack.c.l.b16 %v3635
    %v3913 = vunpack.c.h.b16 %v3635
    %v3914 = vunpack.c.l.b16 %v3636
    %v3915 = vunpack.c.h.b16 %v3636
    %v3916 = vunpack.c.l.b16 %v3637
    %v3917 = vunpack.c.h.b16 %v3637
    %v3918 = vunpack.c.l.b16 %v3638
    %v3919 = vunpack.c.h.b16 %v3638
    %v3920 = vunpack.c.l.b16 %v3639
    %v3921 = vunpack.c.h.b16 %v3639
    %v3922 = vunpack.c.l.b16 %v3640
    %v3923 = vunpack.c.h.b16 %v3640
    %v3924 = vunpack.c.l.b16 %v3641
    %v3925 = vunpack.c.h.b16 %v3641
    %v3926 = vunpack.c.l.b16 %v3642
    %v3927 = vunpack.c.h.b16 %v3642
    %v3928 = vunpack.c.l.b16 %v3643
    %v3929 = vunpack.c.h.b16 %v3643
    %v3930 = vunpack.c.l.b16 %v3644
    %v3931 = vunpack.c.h.b16 %v3644
    %v3932 = vunpack.c.l.b16 %v3645
    %v3933 = vunpack.c.h.b16 %v3645
    %v3934 = vpack.c.b16 %v3746, %v3742
    %v3935 = vpack.c.b16 %v3747, %v3743
    %v3936 = vpack.c.b16 %v3748, %v3744
    %v3937 = vpack.c.b16 %v3749, %v3745
    %v3938 = vpack.c.b16 %v3754, %v3750
    %v3939 = vpack.c.b16 %v3755, %v3751
    %v3940 = vpack.c.b16 %v3756, %v3752
    %v3941 = vpack.c.b16 %v3757, %v3753
    %v3942 = vpack.c.b16 %v3762, %v3758
    %v3943 = vpack.c.b16 %v3763, %v3759
    %v3944 = vpack.c.b16 %v3764, %v3760
    %v3945 = vpack.c.b16 %v3765, %v3761
    %v3946 = vpack.c.b16 %v3770, %v3766
    %v3947 = vpack.c.b16 %v3771, %v3767
    %v3948 = vpack.c.b16 %v3772, %v3768
    %v3949 = vpack.c.b16 %v3773, %v3769
    %v3950 = vpack.c.b16 %v3778, %v3774
    %v3951 = vpack.c.b16 %v3779, %v3775
    %v3952 = vpack.c.b16 %v3780, %v3776
    %v3953 = vpack.c.b16 %v3781, %v3777
    %v3954 = vpack.c.b16 %v3786, %v3782
    %v3955 = vpack.c.b16 %v3787, %v3783
    %v3956 = vpack.c.b16 %v3788, %v3784
    %v3957 = vpack.c.b16 %v3789, %v3785
    %v3958 = vpack.c.b16 %v3794, %v3790
    %v3959 = vpack.c.b16 %v3795, %v3791
    %v3960 = vpack.c.b16 %v3796, %v3792
    %v3961 = vpack.c.b16 %v3797, %v3793
    %v3962 = vpack.c.b16 %v3802, %v3798
    %v3963 = vpack.c.b16 %v3803, %v3799
    %v3964 = vpack.c.b16 %v3804, %v3800
    %v3965 = vpack.c.b16 %v3805, %v3801
    %v3966 = vpack.c.b16 %v3810, %v3806
    %v3967 = vpack.c.b16 %v3811, %v3807
    %v3968 = vpack.c.b16 %v3812, %v3808
    %v3969 = vpack.c.b16 %v3813, %v3809
    %v3970 = vpack.c.b16 %v3818, %v3814
    %v3971 = vpack.c.b16 %v3819, %v3815
    %v3972 = vpack.c.b16 %v3820, %v3816
    %v3973 = vpack.c.b16 %v3821, %v3817
    %v3974 = vpack.c.b16 %v3826, %v3822
    %v3975 = vpack.c.b16 %v3827, %v3823
    %v3976 = vpack.c.b16 %v3828, %v3824
    %v3977 = vpack.c.b16 %v3829, %v3825
    %v3978 = vpack.c.b16 %v3834, %v3830
    %v3979 = vpack.c.b16 %v3835, %v3831
    %v3980 = vpack.c.b16 %v3836, %v3832
    %v3981 = vpack.c.b16 %v3837, %v3833
    %v3982 = vpack.c.b16 %v3842, %v3838
    %v3983 = vpack.c.b16 %v3843, %v3839
    %v3984 = vpack.c.b16 %v3844, %v3840
    %v3985 = vpack.c.b16 %v3845, %v3841
    %v3986 = vpack.c.b16 %v3850, %v3846
    %v3987 = vpack.c.b16 %v3851, %v3847
    %v3988 = vpack.c.b16 %v3852, %v3848
    %v3989 = vpack.c.b16 %v3853, %v3849
    %v3990 = vpack.c.b16 %v3858, %v3854
    %v3991 = vpack.c.b16 %v3859, %v3855
    %v3992 = vpack.c.b16 %v3860, %v3856
    %v3993 = vpack.c.b16 %v3861, %v3857
    %v3994 = vpack.c.b16 %v3866, %v3862
    %v3995 = vpack.c.b16 %v3867, %v3863
    %v3996 = vpack.c.b16 %v3868, %v3864
    %v3997 = vpack.c.b16 %v3869, %v3865
    %v3998 = vpack.c.b16 %v3874, %v3870
    %v3999 = vpack.c.b16 %v3875, %v3871
    %v4000 = vpack.c.b16 %v3876, %v3872
    %v4001 = vpack.c.b16 %v3877, %v3873
    %v4002 = vpack.c.b16 %v3882, %v3878
    %v4003 = vpack.c.b16 %v3883, %v3879
    %v4004 = vpack.c.b16 %v3884, %v3880
    %v4005 = vpack.c.b16 %v3885, %v3881
    %v4006 = vpack.c.b16 %v3890, %v3886
    %v4007 = vpack.c.b16 %v3891, %v3887
    %v4008 = vpack.c.b16 %v3892, %v3888
    %v4009 = vpack.c.b16 %v3893, %v3889
    %v4010 = vpack.c.b16 %v3898, %v3894
    %v4011 = vpack.c.b16 %v3899, %v3895
    %v4012 = vpack.c.b16 %v3900, %v3896
    %v4013 = vpack.c.b16 %v3901, %v3897
    %v4014 = vpack.c.b16 %v3906, %v3902
    %v4015 = vpack.c.b16 %v3907, %v3903
    %v4016 = vpack.c.b16 %v3908, %v3904
    %v4017 = vpack.c.b16 %v3909, %v3905
    %v4018 = vpack.c.b16 %v3914, %v3910
    %v4019 = vpack.c.b16 %v3915, %v3911
    %v4020 = vpack.c.b16 %v3916, %v3912
    %v4021 = vpack.c.b16 %v3917, %v3913
    %v4022 = vpack.c.b16 %v3922, %v3918
    %v4023 = vpack.c.b16 %v3923, %v3919
    %v4024 = vpack.c.b16 %v3924, %v3920
    %v4025 = vpack.c.b16 %v3925, %v3921
    %v4026 = vpack.c.b16 %v3930, %v3926
    %v4027 = vpack.c.b16 %v3931, %v3927
    %v4028 = vpack.c.b16 %v3932, %v3928
    %v4029 = vpack.c.b16 %v3933, %v3929
    %4126 = vmatprep.subr.bf16.mxu0 %v3935
    %4127 = vmatpush1.bf16.msra.mxu0 %v3934
    %4128 = vmatprep.subr.bf16.mxu0 %v3939
    %4129 = vmatpush1.bf16.msra.mxu0 %v3938
    %4130 = vmatprep.subr.bf16.mxu0 %v3943
    %4131 = vmatpush1.bf16.msra.mxu0 %v3942
    %4132 = vmatprep.subr.bf16.mxu0 %v3947
    %4133 = vmatpush1.bf16.msra.mxu0 %v3946
    %4134 = vmatprep.subr.bf16.mxu0 %v3951
    %4135 = vmatpush1.bf16.msra.mxu0 %v3950
    %4136 = vmatprep.subr.bf16.mxu0 %v3955
    %4137 = vmatpush1.bf16.msra.mxu0 %v3954
    %4138 = vmatprep.subr.bf16.mxu0 %v3959
    %4139 = vmatpush1.bf16.msra.mxu0 %v3958
    %4140 = vmatprep.subr.bf16.mxu0 %v3963
    %4141 = vmatpush1.bf16.msra.mxu0 %v3962
    %4142 = vmatprep.subr.bf16.mxu0 %v3967
    %4143 = vmatpush1.bf16.msra.mxu0 %v3966
    %4144 = vmatprep.subr.bf16.mxu0 %v3971
    %4145 = vmatpush1.bf16.msra.mxu0 %v3970
    %4146 = vmatprep.subr.bf16.mxu0 %v3975
    %4147 = vmatpush1.bf16.msra.mxu0 %v3974
    %4148 = vmatprep.subr.bf16.mxu0 %v3979
    %4149 = vmatpush1.bf16.msra.mxu0 %v3978
    %4150 = vmatprep.subr.bf16.mxu0 %v3983
    %4151 = vmatpush1.bf16.msra.mxu0 %v3982
    %4152 = vmatprep.subr.bf16.mxu0 %v3987
    %4153 = vmatpush1.bf16.msra.mxu0 %v3986
    %4154 = vmatprep.subr.bf16.mxu0 %v3991
    %4155 = vmatpush1.bf16.msra.mxu0 %v3990
    %4156 = vmatprep.subr.bf16.mxu0 %v3995
    %4157 = vmatpush1.bf16.msra.mxu0 %v3994
    %4158 = vmatprep.mubr.bf16.mxu0 %v2417
    %4159 = vmatmul.mubr.bf16.gmra.mrb[0].mxu0 %v2414
    %v4160 = vpop.f32.mrb[0].mxu0
    %v4161 = vadd.f32 0.0, %v4160
    %v4162 = vpop.f32.mrb[0].mxu0
    %v4163 = vadd.f32 0.0, %v4162
    %v4164 = vpop.f32.mrb[0].mxu0
    %v4165 = vadd.f32 0.0, %v4164
    %v4166 = vpop.f32.mrb[0].mxu0
    %v4167 = vadd.f32 0.0, %v4166
    %4168 = vmatprep.mubr.bf16.mxu0 %v2424
    %4169 = vmatmul.mubr.bf16.gmra.mrb[0].mxu0 %v2422
    %v4170 = vpop.f32.mrb[0].mxu0
    %v4171 = vadd.f32 0.0, %v4170
    %v4172 = vpop.f32.mrb[0].mxu0
    %v4173 = vadd.f32 0.0, %v4172
    %v4174 = vpop.f32.mrb[0].mxu0
    %v4175 = vadd.f32 0.0, %v4174
    %v4176 = vpop.f32.mrb[0].mxu0
    %v4177 = vadd.f32 0.0, %v4176
    %4178 = vdwg.mxu0
    %4179 = vmatprep.subr.bf16.mxu0 %v3999
    %4180 = vmatpush1.bf16.msra.mxu0 %v3998
    %4181 = vmatprep.subr.bf16.mxu0 %v4003
    %4182 = vmatpush1.bf16.msra.mxu0 %v4002
    %4183 = vmatprep.subr.bf16.mxu0 %v4007
    %4184 = vmatpush1.bf16.msra.mxu0 %v4006
    %4185 = vmatprep.subr.bf16.mxu0 %v4011
    %4186 = vmatpush1.bf16.msra.mxu0 %v4010
    %4187 = vmatprep.subr.bf16.mxu0 %v4015
    %4188 = vmatpush1.bf16.msra.mxu0 %v4014
    %4189 = vmatprep.subr.bf16.mxu0 %v4019
    %4190 = vmatpush1.bf16.msra.mxu0 %v4018
    %4191 = vmatprep.subr.bf16.mxu0 %v4023
    %4192 = vmatpush1.bf16.msra.mxu0 %v4022
    %4193 = vmatprep.subr.bf16.mxu0 %v4027
    %4194 = vmatpush1.bf16.msra.mxu0 %v4026
    %4195 = vmatprep.subr.bf16.mxu0 0
    %4196 = vmatpush1.bf16.msra.mxu0 0
    %4197 = vmatprep.subr.bf16.mxu0 0
    %4198 = vmatpush1.bf16.msra.mxu0 0
    %4199 = vmatprep.subr.bf16.mxu0 0
    %4200 = vmatpush1.bf16.msra.mxu0 0
    %4201 = vmatprep.subr.bf16.mxu0 0
    %4202 = vmatpush1.bf16.msra.mxu0 0
    %4203 = vmatprep.subr.bf16.mxu0 0
    %4204 = vmatpush1.bf16.msra.mxu0 0
    %4205 = vmatprep.subr.bf16.mxu0 0
    %4206 = vmatpush1.bf16.msra.mxu0 0
    %4207 = vmatprep.subr.bf16.mxu0 0
    %4208 = vmatpush1.bf16.msra.mxu0 0
    %4209 = vmatprep.subr.bf16.mxu0 0
    %4210 = vmatpush1.bf16.msra.mxu0 0
    %4211 = vmatprep.mubr.bf16.mxu0 0
    %4212 = vmatmul.mubr.bf16.gmra.mrb[0].mxu0 %v2420
    %v4213 = vpop.f32.mrb[0].mxu0
    %v4214 = vadd.f32 %v4161, %v4213
    %v4215 = vpop.f32.mrb[0].mxu0
    %v4216 = vadd.f32 %v4163, %v4215
    %v4217 = vpop.f32.mrb[0].mxu0
    %v4218 = vadd.f32 %v4165, %v4217
    %v4219 = vpop.f32.mrb[0].mxu0
    %v4220 = vadd.f32 %v4167, %v4219
    %4221 = vmatprep.mubr.bf16.mxu0 0
    %4222 = vmatmul.mubr.bf16.gmra.mrb[0].mxu0 %v2426
    %v4223 = vpop.f32.mrb[0].mxu0
    %v4224 = vadd.f32 %v4171, %v4223
    %v4225 = vpop.f32.mrb[0].mxu0
    %v4226 = vadd.f32 %v4173, %v4225
    %v4227 = vpop.f32.mrb[0].mxu0
    %v4228 = vadd.f32 %v4175, %v4227
    %v4229 = vpop.f32.mrb[0].mxu0
    %v4230 = vadd.f32 %v4177, %v4229
    %4231 = vdwg.mxu0
    %4232 = vmatprep.subr.bf16.mxu0 %v3937
    %4233 = vmatpush1.bf16.msra.mxu0 %v3936
    %4234 = vmatprep.subr.bf16.mxu0 %v3941
    %4235 = vmatpush1.bf16.msra.mxu0 %v3940
    %4236 = vmatprep.subr.bf16.mxu0 %v3945
    %4237 = vmatpush1.bf16.msra.mxu0 %v3944
    %4238 = vmatprep.subr.bf16.mxu0 %v3949
    %4239 = vmatpush1.bf16.msra.mxu0 %v3948
    %4240 = vmatprep.subr.bf16.mxu0 %v3953
    %4241 = vmatpush1.bf16.msra.mxu0 %v3952
    %4242 = vmatprep.subr.bf16.mxu0 %v3957
    %4243 = vmatpush1.bf16.msra.mxu0 %v3956
    %4244 = vmatprep.subr.bf16.mxu0 %v3961
    %4245 = vmatpush1.bf16.msra.mxu0 %v3960
    %4246 = vmatprep.subr.bf16.mxu0 %v3965
    %4247 = vmatpush1.bf16.msra.mxu0 %v3964
    %4248 = vmatprep.subr.bf16.mxu0 %v3969
    %4249 = vmatpush1.bf16.msra.mxu0 %v3968
    %4250 = vmatprep.subr.bf16.mxu0 %v3973
    %4251 = vmatpush1.bf16.msra.mxu0 %v3972
    %4252 = vmatprep.subr.bf16.mxu0 %v3977
    %4253 = vmatpush1.bf16.msra.mxu0 %v3976
    %4254 = vmatprep.subr.bf16.mxu0 %v3981
    %4255 = vmatpush1.bf16.msra.mxu0 %v3980
    %4256 = vmatprep.subr.bf16.mxu0 %v3985
    %4257 = vmatpush1.bf16.msra.mxu0 %v3984
    %4258 = vmatprep.subr.bf16.mxu0 %v3989
    %4259 = vmatpush1.bf16.msra.mxu0 %v3988
    %4260 = vmatprep.subr.bf16.mxu0 %v3993
    %4261 = vmatpush1.bf16.msra.mxu0 %v3992
    %4262 = vmatprep.subr.bf16.mxu0 %v3997
    %4263 = vmatpush1.bf16.msra.mxu0 %v3996
    %4264 = vmatprep.mubr.bf16.mxu0 %v2417
    %4265 = vmatmul.mubr.bf16.gmra.mrb[0].mxu0 %v2414
    %v4266 = vpop.f32.mrb[0].mxu0
    %v4267 = vadd.f32 0.0, %v4266
    %v4268 = vpop.f32.mrb[0].mxu0
    %v4269 = vadd.f32 0.0, %v4268
    %v4270 = vpop.f32.mrb[0].mxu0
    %v4271 = vadd.f32 0.0, %v4270
    %v4272 = vpop.f32.mrb[0].mxu0
    %v4273 = vadd.f32 0.0, %v4272
    %4274 = vmatprep.mubr.bf16.mxu0 %v2424
    %4275 = vmatmul.mubr.bf16.gmra.mrb[0].mxu0 %v2422
    %v4276 = vpop.f32.mrb[0].mxu0
    %v4277 = vadd.f32 0.0, %v4276
    %v4278 = vpop.f32.mrb[0].mxu0
    %v4279 = vadd.f32 0.0, %v4278
    %v4280 = vpop.f32.mrb[0].mxu0
    %v4281 = vadd.f32 0.0, %v4280
    %v4282 = vpop.f32.mrb[0].mxu0
    %v4283 = vadd.f32 0.0, %v4282
    %4284 = vdwg.mxu0
    %4285 = vmatprep.subr.bf16.mxu0 %v4001
    %4286 = vmatpush1.bf16.msra.mxu0 %v4000
    %4287 = vmatprep.subr.bf16.mxu0 %v4005
    %4288 = vmatpush1.bf16.msra.mxu0 %v4004
    %4289 = vmatprep.subr.bf16.mxu0 %v4009
    %4290 = vmatpush1.bf16.msra.mxu0 %v4008
    %4291 = vmatprep.subr.bf16.mxu0 %v4013
    %4292 = vmatpush1.bf16.msra.mxu0 %v4012
    %4293 = vmatprep.subr.bf16.mxu0 %v4017
    %4294 = vmatpush1.bf16.msra.mxu0 %v4016
    %4295 = vmatprep.subr.bf16.mxu0 %v4021
    %4296 = vmatpush1.bf16.msra.mxu0 %v4020
    %4297 = vmatprep.subr.bf16.mxu0 %v4025
    %4298 = vmatpush1.bf16.msra.mxu0 %v4024
    %4299 = vmatprep.subr.bf16.mxu0 %v4029
    %4300 = vmatpush1.bf16.msra.mxu0 %v4028
    %4301 = vmatprep.subr.bf16.mxu0 0
    %4302 = vmatpush1.bf16.msra.mxu0 0
    %4303 = vmatprep.subr.bf16.mxu0 0
    %4304 = vmatpush1.bf16.msra.mxu0 0
    %4305 = vmatprep.subr.bf16.mxu0 0
    %4306 = vmatpush1.bf16.msra.mxu0 0
    %4307 = vmatprep.subr.bf16.mxu0 0
    %4308 = vmatpush1.bf16.msra.mxu0 0
    %4309 = vmatprep.subr.bf16.mxu0 0
    %4310 = vmatpush1.bf16.msra.mxu0 0
    %4311 = vmatprep.subr.bf16.mxu0 0
    %4312 = vmatpush1.bf16.msra.mxu0 0
    %4313 = vmatprep.subr.bf16.mxu0 0
    %4314 = vmatpush1.bf16.msra.mxu0 0
    %4315 = vmatprep.subr.bf16.mxu0 0
    %4316 = vmatpush1.bf16.msra.mxu0 0
    %4317 = vmatprep.mubr.bf16.mxu0 0
    %4318 = vmatmul.mubr.bf16.gmra.mrb[0].mxu0 %v2420
    %v4319 = vpop.f32.mrb[0].mxu0
    %v4320 = vadd.f32 %v4267, %v4319
    %v4321 = vpop.f32.mrb[0].mxu0
    %v4322 = vadd.f32 %v4269, %v4321
    %v4323 = vpop.f32.mrb[0].mxu0
    %v4324 = vadd.f32 %v4271, %v4323
    %v4325 = vpop.f32.mrb[0].mxu0
    %v4326 = vadd.f32 %v4273, %v4325
    %4327 = vmatprep.mubr.bf16.mxu0 0
    %4328 = vmatmul.mubr.bf16.gmra.mrb[0].mxu0 %v2426
    %v4329 = vpop.f32.mrb[0].mxu0
    %v4330 = vadd.f32 %v4277, %v4329
    %v4331 = vpop.f32.mrb[0].mxu0
    %v4332 = vadd.f32 %v4279, %v4331
    %v4333 = vpop.f32.mrb[0].mxu0
    %v4334 = vadd.f32 %v4281, %v4333
    %v4335 = vpop.f32.mrb[0].mxu0
    %v4336 = vadd.f32 %v4283, %v4335
    %4337 = vdwg.mxu0
    %v4347 = vrot.slane %v1508, 4
    %v4348 = vrot.slane %v1511, 4
    %v4349 = vsel %vm2411, %v4347, %v4348
    %v4350 = vrot.slane %v1509, 4
    %v4351 = vrot.slane %v1512, 4
    %v4352 = vsel %vm2411, %v4350, %v4351
    %v4353 = vrot.slane %v1510, 4
    %v4354 = vrot.slane %v1513, 4
    %v4355 = vsel %vm2411, %v4353, %v4354
    %v4356 = vrot.slane %v1514, 4
    %v4357 = vsel %vm2411, %v4348, %v4356
    %v4358 = vrot.slane %v1515, 4
    %v4359 = vsel %vm2411, %v4351, %v4358
    %v4360 = vrot.slane %v1516, 4
    %v4361 = vsel %vm2411, %v4354, %v4360
    %4368 = vmatprep.subr.bf16.mxu0 %v3935
    %4369 = vmatpush1.bf16.msra.mxu0 %v3934
    %4370 = vmatprep.subr.bf16.mxu0 %v3939
    %4371 = vmatpush1.bf16.msra.mxu0 %v3938
    %4372 = vmatprep.subr.bf16.mxu0 %v3943
    %4373 = vmatpush1.bf16.msra.mxu0 %v3942
    %4374 = vmatprep.subr.bf16.mxu0 %v3947
    %4375 = vmatpush1.bf16.msra.mxu0 %v3946
    %4376 = vmatprep.subr.bf16.mxu0 %v3951
    %4377 = vmatpush1.bf16.msra.mxu0 %v3950
    %4378 = vmatprep.subr.bf16.mxu0 %v3955
    %4379 = vmatpush1.bf16.msra.mxu0 %v3954
    %4380 = vmatprep.subr.bf16.mxu0 %v3959
    %4381 = vmatpush1.bf16.msra.mxu0 %v3958
    %4382 = vmatprep.subr.bf16.mxu0 %v3963
    %4383 = vmatpush1.bf16.msra.mxu0 %v3962
    %4384 = vmatprep.subr.bf16.mxu0 %v3967
    %4385 = vmatpush1.bf16.msra.mxu0 %v3966
    %4386 = vmatprep.subr.bf16.mxu0 %v3971
    %4387 = vmatpush1.bf16.msra.mxu0 %v3970
    %4388 = vmatprep.subr.bf16.mxu0 %v3975
    %4389 = vmatpush1.bf16.msra.mxu0 %v3974
    %4390 = vmatprep.subr.bf16.mxu0 %v3979
    %4391 = vmatpush1.bf16.msra.mxu0 %v3978
    %4392 = vmatprep.subr.bf16.mxu0 %v3983
    %4393 = vmatpush1.bf16.msra.mxu0 %v3982
    %4394 = vmatprep.subr.bf16.mxu0 %v3987
    %4395 = vmatpush1.bf16.msra.mxu0 %v3986
    %4396 = vmatprep.subr.bf16.mxu0 %v3991
    %4397 = vmatpush1.bf16.msra.mxu0 %v3990
    %4398 = vmatprep.subr.bf16.mxu0 %v3995
    %4399 = vmatpush1.bf16.msra.mxu0 %v3994
    %4400 = vmatprep.mubr.bf16.mxu0 %v4352
    %4401 = vmatmul.mubr.bf16.gmra.mrb[0].mxu0 %v4349
    %v4402 = vpop.f32.mrb[0].mxu0
    %v4403 = vadd.f32 0.0, %v4402
    %v4404 = vpop.f32.mrb[0].mxu0
    %v4405 = vadd.f32 0.0, %v4404
    %v4406 = vpop.f32.mrb[0].mxu0
    %v4407 = vadd.f32 0.0, %v4406
    %v4408 = vpop.f32.mrb[0].mxu0
    %v4409 = vadd.f32 0.0, %v4408
    %4410 = vmatprep.mubr.bf16.mxu0 %v4359
    %4411 = vmatmul.mubr.bf16.gmra.mrb[0].mxu0 %v4357
    %v4412 = vpop.f32.mrb[0].mxu0
    %v4413 = vadd.f32 0.0, %v4412
    %v4414 = vpop.f32.mrb[0].mxu0
    %v4415 = vadd.f32 0.0, %v4414
    %v4416 = vpop.f32.mrb[0].mxu0
    %v4417 = vadd.f32 0.0, %v4416
    %v4418 = vpop.f32.mrb[0].mxu0
    %v4419 = vadd.f32 0.0, %v4418
    %4420 = vdwg.mxu0
    %4421 = vmatprep.subr.bf16.mxu0 %v3999
    %4422 = vmatpush1.bf16.msra.mxu0 %v3998
    %4423 = vmatprep.subr.bf16.mxu0 %v4003
    %4424 = vmatpush1.bf16.msra.mxu0 %v4002
    %4425 = vmatprep.subr.bf16.mxu0 %v4007
    %4426 = vmatpush1.bf16.msra.mxu0 %v4006
    %4427 = vmatprep.subr.bf16.mxu0 %v4011
    %4428 = vmatpush1.bf16.msra.mxu0 %v4010
    %4429 = vmatprep.subr.bf16.mxu0 %v4015
    %4430 = vmatpush1.bf16.msra.mxu0 %v4014
    %4431 = vmatprep.subr.bf16.mxu0 %v4019
    %4432 = vmatpush1.bf16.msra.mxu0 %v4018
    %4433 = vmatprep.subr.bf16.mxu0 %v4023
    %4434 = vmatpush1.bf16.msra.mxu0 %v4022
    %4435 = vmatprep.subr.bf16.mxu0 %v4027
    %4436 = vmatpush1.bf16.msra.mxu0 %v4026
    %4437 = vmatprep.subr.bf16.mxu0 0
    %4438 = vmatpush1.bf16.msra.mxu0 0
    %4439 = vmatprep.subr.bf16.mxu0 0
    %4440 = vmatpush1.bf16.msra.mxu0 0
    %4441 = vmatprep.subr.bf16.mxu0 0
    %4442 = vmatpush1.bf16.msra.mxu0 0
    %4443 = vmatprep.subr.bf16.mxu0 0
    %4444 = vmatpush1.bf16.msra.mxu0 0
    %4445 = vmatprep.subr.bf16.mxu0 0
    %4446 = vmatpush1.bf16.msra.mxu0 0
    %4447 = vmatprep.subr.bf16.mxu0 0
    %4448 = vmatpush1.bf16.msra.mxu0 0
    %4449 = vmatprep.subr.bf16.mxu0 0
    %4450 = vmatpush1.bf16.msra.mxu0 0
    %4451 = vmatprep.subr.bf16.mxu0 0
    %4452 = vmatpush1.bf16.msra.mxu0 0
    %4453 = vmatprep.mubr.bf16.mxu0 0
    %4454 = vmatmul.mubr.bf16.gmra.mrb[0].mxu0 %v4355
    %v4455 = vpop.f32.mrb[0].mxu0
    %v4456 = vadd.f32 %v4403, %v4455
    %v4457 = vpop.f32.mrb[0].mxu0
    %v4458 = vadd.f32 %v4405, %v4457
    %v4459 = vpop.f32.mrb[0].mxu0
    %v4460 = vadd.f32 %v4407, %v4459
    %v4461 = vpop.f32.mrb[0].mxu0
    %v4462 = vadd.f32 %v4409, %v4461
    %4463 = vmatprep.mubr.bf16.mxu0 0
    %4464 = vmatmul.mubr.bf16.gmra.mrb[0].mxu0 %v4361
    %v4465 = vpop.f32.mrb[0].mxu0
    %v4466 = vadd.f32 %v4413, %v4465
    %v4467 = vpop.f32.mrb[0].mxu0
    %v4468 = vadd.f32 %v4415, %v4467
    %v4469 = vpop.f32.mrb[0].mxu0
    %v4470 = vadd.f32 %v4417, %v4469
    %v4471 = vpop.f32.mrb[0].mxu0
    %v4472 = vadd.f32 %v4419, %v4471
    %4473 = vdwg.mxu0
    %4474 = vmatprep.subr.bf16.mxu0 %v3937
    %4475 = vmatpush1.bf16.msra.mxu0 %v3936
    %4476 = vmatprep.subr.bf16.mxu0 %v3941
    %4477 = vmatpush1.bf16.msra.mxu0 %v3940
    %4478 = vmatprep.subr.bf16.mxu0 %v3945
    %4479 = vmatpush1.bf16.msra.mxu0 %v3944
    %4480 = vmatprep.subr.bf16.mxu0 %v3949
    %4481 = vmatpush1.bf16.msra.mxu0 %v3948
    %4482 = vmatprep.subr.bf16.mxu0 %v3953
    %4483 = vmatpush1.bf16.msra.mxu0 %v3952
    %4484 = vmatprep.subr.bf16.mxu0 %v3957
    %4485 = vmatpush1.bf16.msra.mxu0 %v3956
    %4486 = vmatprep.subr.bf16.mxu0 %v3961
    %4487 = vmatpush1.bf16.msra.mxu0 %v3960
    %4488 = vmatprep.subr.bf16.mxu0 %v3965
    %4489 = vmatpush1.bf16.msra.mxu0 %v3964
    %4490 = vmatprep.subr.bf16.mxu0 %v3969
    %4491 = vmatpush1.bf16.msra.mxu0 %v3968
    %4492 = vmatprep.subr.bf16.mxu0 %v3973
    %4493 = vmatpush1.bf16.msra.mxu0 %v3972
    %4494 = vmatprep.subr.bf16.mxu0 %v3977
    %4495 = vmatpush1.bf16.msra.mxu0 %v3976
    %4496 = vmatprep.subr.bf16.mxu0 %v3981
    %4497 = vmatpush1.bf16.msra.mxu0 %v3980
    %4498 = vmatprep.subr.bf16.mxu0 %v3985
    %4499 = vmatpush1.bf16.msra.mxu0 %v3984
    %4500 = vmatprep.subr.bf16.mxu0 %v3989
    %4501 = vmatpush1.bf16.msra.mxu0 %v3988
    %4502 = vmatprep.subr.bf16.mxu0 %v3993
    %4503 = vmatpush1.bf16.msra.mxu0 %v3992
    %4504 = vmatprep.subr.bf16.mxu0 %v3997
    %4505 = vmatpush1.bf16.msra.mxu0 %v3996
    %4506 = vmatprep.mubr.bf16.mxu0 %v4352
    %4507 = vmatmul.mubr.bf16.gmra.mrb[0].mxu0 %v4349
    %v4508 = vpop.f32.mrb[0].mxu0
    %v4509 = vadd.f32 0.0, %v4508
    %v4510 = vpop.f32.mrb[0].mxu0
    %v4511 = vadd.f32 0.0, %v4510
    %v4512 = vpop.f32.mrb[0].mxu0
    %v4513 = vadd.f32 0.0, %v4512
    %v4514 = vpop.f32.mrb[0].mxu0
    %v4515 = vadd.f32 0.0, %v4514
    %4516 = vmatprep.mubr.bf16.mxu0 %v4359
    %4517 = vmatmul.mubr.bf16.gmra.mrb[0].mxu0 %v4357
    %v4518 = vpop.f32.mrb[0].mxu0
    %v4519 = vadd.f32 0.0, %v4518
    %v4520 = vpop.f32.mrb[0].mxu0
    %v4521 = vadd.f32 0.0, %v4520
    %v4522 = vpop.f32.mrb[0].mxu0
    %v4523 = vadd.f32 0.0, %v4522
    %v4524 = vpop.f32.mrb[0].mxu0
    %v4525 = vadd.f32 0.0, %v4524
    %4526 = vdwg.mxu0
    %4527 = vmatprep.subr.bf16.mxu0 %v4001
    %4528 = vmatpush1.bf16.msra.mxu0 %v4000
    %4529 = vmatprep.subr.bf16.mxu0 %v4005
    %4530 = vmatpush1.bf16.msra.mxu0 %v4004
    %4531 = vmatprep.subr.bf16.mxu0 %v4009
    %4532 = vmatpush1.bf16.msra.mxu0 %v4008
    %4533 = vmatprep.subr.bf16.mxu0 %v4013
    %4534 = vmatpush1.bf16.msra.mxu0 %v4012
    %4535 = vmatprep.subr.bf16.mxu0 %v4017
    %4536 = vmatpush1.bf16.msra.mxu0 %v4016
    %4537 = vmatprep.subr.bf16.mxu0 %v4021
    %4538 = vmatpush1.bf16.msra.mxu0 %v4020
    %4539 = vmatprep.subr.bf16.mxu0 %v4025
    %4540 = vmatpush1.bf16.msra.mxu0 %v4024
    %4541 = vmatprep.subr.bf16.mxu0 %v4029
    %4542 = vmatpush1.bf16.msra.mxu0 %v4028
    %4543 = vmatprep.subr.bf16.mxu0 0
    %4544 = vmatpush1.bf16.msra.mxu0 0
    %4545 = vmatprep.subr.bf16.mxu0 0
    %4546 = vmatpush1.bf16.msra.mxu0 0
    %4547 = vmatprep.subr.bf16.mxu0 0
    %4548 = vmatpush1.bf16.msra.mxu0 0
    %4549 = vmatprep.subr.bf16.mxu0 0
    %4550 = vmatpush1.bf16.msra.mxu0 0
    %4551 = vmatprep.subr.bf16.mxu0 0
    %4552 = vmatpush1.bf16.msra.mxu0 0
    %4553 = vmatprep.subr.bf16.mxu0 0
    %4554 = vmatpush1.bf16.msra.mxu0 0
    %4555 = vmatprep.subr.bf16.mxu0 0
    %4556 = vmatpush1.bf16.msra.mxu0 0
    %4557 = vmatprep.subr.bf16.mxu0 0
    %4558 = vmatpush1.bf16.msra.mxu0 0
    %4559 = vmatprep.mubr.bf16.mxu0 0
    %4560 = vmatmul.mubr.bf16.gmra.mrb[0].mxu0 %v4355
    %v4561 = vpop.f32.mrb[0].mxu0
    %v4562 = vadd.f32 %v4509, %v4561
    %v4563 = vpop.f32.mrb[0].mxu0
    %v4564 = vadd.f32 %v4511, %v4563
    %v4565 = vpop.f32.mrb[0].mxu0
    %v4566 = vadd.f32 %v4513, %v4565
    %v4567 = vpop.f32.mrb[0].mxu0
    %v4568 = vadd.f32 %v4515, %v4567
    %4569 = vmatprep.mubr.bf16.mxu0 0
    %4570 = vmatmul.mubr.bf16.gmra.mrb[0].mxu0 %v4361
    %v4571 = vpop.f32.mrb[0].mxu0
    %v4572 = vadd.f32 %v4519, %v4571
    %v4573 = vpop.f32.mrb[0].mxu0
    %v4574 = vadd.f32 %v4521, %v4573
    %v4575 = vpop.f32.mrb[0].mxu0
    %v4576 = vadd.f32 %v4523, %v4575
    %v4577 = vpop.f32.mrb[0].mxu0
    %v4578 = vadd.f32 %v4525, %v4577
    %4579 = vdwg.mxu0
    %v4580 = vadd.f32 %v3213, %v4214
    %v4581 = vadd.f32 %v3215, %v4216
    %v4582 = vadd.f32 %v3319, %v4320
    %v4583 = vadd.f32 %v3321, %v4322
    %v4584 = vadd.f32 %v3217, %v4218
    %v4585 = vadd.f32 %v3219, %v4220
    %v4586 = vadd.f32 %v3323, %v4324
    %v4587 = vadd.f32 %v3325, %v4326
    %v4588 = vadd.f32 %v3223, %v4224
    %v4589 = vadd.f32 %v3225, %v4226
    %v4590 = vadd.f32 %v3329, %v4330
    %v4591 = vadd.f32 %v3331, %v4332
    %v4592 = vadd.f32 %v3227, %v4228
    %v4593 = vadd.f32 %v3229, %v4230
    %v4594 = vadd.f32 %v3333, %v4334
    %v4595 = vadd.f32 %v3335, %v4336
    %v4596 = vadd.f32 %v3425, %v4456
    %v4597 = vadd.f32 %v3427, %v4458
    %v4598 = vadd.f32 %v3531, %v4562
    %v4599 = vadd.f32 %v3533, %v4564
    %v4600 = vadd.f32 %v3429, %v4460
    %v4601 = vadd.f32 %v3431, %v4462
    %v4602 = vadd.f32 %v3535, %v4566
    %v4603 = vadd.f32 %v3537, %v4568
    %v4604 = vadd.f32 %v3435, %v4466
    %v4605 = vadd.f32 %v3437, %v4468
    %v4606 = vadd.f32 %v3541, %v4572
    %v4607 = vadd.f32 %v3543, %v4574
    %v4608 = vadd.f32 %v3439, %v4470
    %v4609 = vadd.f32 %v3441, %v4472
    %v4610 = vadd.f32 %v3545, %v4576
    %v4611 = vadd.f32 %v3547, %v4578
    %s4612 = scalar_lea.vmem [#allocation6], 2304
    %v4613 = vld [vmem:[%s4612] sm:$0xff]
    %v4614 = vld [vmem:[%s4612 + $0x8] sm:$0xff]
    %v4615 = vld [vmem:[%s4612 + $0x10] sm:$0xff]
    %v4616 = vld [vmem:[%s4612 + $0x18] sm:$0xff]
    %v4617 = vld [vmem:[%s4612 + $0x20] sm:$0xff]
    %v4618 = vld [vmem:[%s4612 + $0x28] sm:$0xff]
    %v4619 = vld [vmem:[%s4612 + $0x30] sm:$0xff]
    %v4620 = vld [vmem:[%s4612 + $0x38] sm:$0xff]
    %v4621 = vld [vmem:[%s4612 + $0x40] sm:$0xff]
    %v4622 = vld [vmem:[%s4612 + $0x48] sm:$0xff]
    %v4623 = vld [vmem:[%s4612 + $0x50] sm:$0xff]
    %v4624 = vld [vmem:[%s4612 + $0x58] sm:$0xff]
    %v4625 = vld [vmem:[%s4612 + $0x60] sm:$0xff]
    %v4626 = vld [vmem:[%s4612 + $0x68] sm:$0xff]
    %v4627 = vld [vmem:[%s4612 + $0x70] sm:$0xff]
    %v4628 = vld [vmem:[%s4612 + $0x78] sm:$0xff]
    %v4629 = vld [vmem:[%s4612 + $0x80] sm:$0xff]
    %v4630 = vld [vmem:[%s4612 + $0x88] sm:$0xff]
    %v4631 = vld [vmem:[%s4612 + $0x90] sm:$0xff]
    %v4632 = vld [vmem:[%s4612 + $0x98] sm:$0xff]
    %v4633 = vld [vmem:[%s4612 + $0xa0] sm:$0xff]
    %v4634 = vld [vmem:[%s4612 + $0xa8] sm:$0xff]
    %v4635 = vld [vmem:[%s4612 + $0xb0] sm:$0xff]
    %v4636 = vld [vmem:[%s4612 + $0xb8] sm:$0xff]
    %v4637 = vld [vmem:[%s4612 + $0xc0] sm:$0xff]
    %v4638 = vld [vmem:[%s4612 + $0xc8] sm:$0xff]
    %v4639 = vld [vmem:[%s4612 + $0xd0] sm:$0xff]
    %v4640 = vld [vmem:[%s4612 + $0xd8] sm:$0xff]
    %v4641 = vld [vmem:[%s4612 + $0xe0] sm:$0xff]
    %v4642 = vld [vmem:[%s4612 + $0xe8] sm:$0xff]
    %v4643 = vld [vmem:[%s4612 + $0xf0] sm:$0xff]
    %v4644 = vld [vmem:[%s4612 + $0xf8] sm:$0xff]
    %v4645 = vld [vmem:[%s4612 + $0x100] sm:$0xff]
    %v4646 = vld [vmem:[%s4612 + $0x108] sm:$0xff]
    %v4647 = vld [vmem:[%s4612 + $0x110] sm:$0xff]
    %v4648 = vld [vmem:[%s4612 + $0x118] sm:$0xff]
    %v4649 = vld [vmem:[%s4612 + $0x120] sm:$0xff]
    %v4650 = vld [vmem:[%s4612 + $0x128] sm:$0xff]
    %v4651 = vld [vmem:[%s4612 + $0x130] sm:$0xff]
    %v4652 = vld [vmem:[%s4612 + $0x138] sm:$0xff]
    %v4653 = vld [vmem:[%s4612 + $0x140] sm:$0xff]
    %v4654 = vld [vmem:[%s4612 + $0x148] sm:$0xff]
    %v4655 = vld [vmem:[%s4612 + $0x150] sm:$0xff]
    %v4656 = vld [vmem:[%s4612 + $0x158] sm:$0xff]
    %v4657 = vld [vmem:[%s4612 + $0x160] sm:$0xff]
    %v4658 = vld [vmem:[%s4612 + $0x168] sm:$0xff]
    %v4659 = vld [vmem:[%s4612 + $0x170] sm:$0xff]
    %v4660 = vld [vmem:[%s4612 + $0x178] sm:$0xff]
    %v4661 = vld [vmem:[%s4612 + $0x180] sm:$0xff]
    %v4662 = vld [vmem:[%s4612 + $0x188] sm:$0xff]
    %v4663 = vld [vmem:[%s4612 + $0x190] sm:$0xff]
    %v4664 = vld [vmem:[%s4612 + $0x198] sm:$0xff]
    %v4665 = vld [vmem:[%s4612 + $0x1a0] sm:$0xff]
    %v4666 = vld [vmem:[%s4612 + $0x1a8] sm:$0xff]
    %v4667 = vld [vmem:[%s4612 + $0x1b0] sm:$0xff]
    %v4668 = vld [vmem:[%s4612 + $0x1b8] sm:$0xff]
    %v4669 = vld [vmem:[%s4612 + $0x1c0] sm:$0xff]
    %v4670 = vld [vmem:[%s4612 + $0x1c8] sm:$0xff]
    %v4671 = vld [vmem:[%s4612 + $0x1d0] sm:$0xff]
    %v4672 = vld [vmem:[%s4612 + $0x1d8] sm:$0xff]
    %v4673 = vld [vmem:[%s4612 + $0x1e0] sm:$0xff]
    %v4674 = vld [vmem:[%s4612 + $0x1e8] sm:$0xff]
    %v4675 = vld [vmem:[%s4612 + $0x1f0] sm:$0xff]
    %v4676 = vld [vmem:[%s4612 + $0x1f8] sm:$0xff]
    %v4677 = vld [vmem:[%s4612 + $0x200] sm:$0xff]
    %v4678 = vld [vmem:[%s4612 + $0x208] sm:$0xff]
    %v4679 = vld [vmem:[%s4612 + $0x210] sm:$0xff]
    %v4680 = vld [vmem:[%s4612 + $0x218] sm:$0xff]
    %v4681 = vld [vmem:[%s4612 + $0x220] sm:$0xff]
    %v4682 = vld [vmem:[%s4612 + $0x228] sm:$0xff]
    %v4683 = vld [vmem:[%s4612 + $0x230] sm:$0xff]
    %v4684 = vld [vmem:[%s4612 + $0x238] sm:$0xff]
    %v4685 = vld [vmem:[%s4612 + $0x240] sm:$0xff]
    %v4686 = vld [vmem:[%s4612 + $0x248] sm:$0xff]
    %v4687 = vld [vmem:[%s4612 + $0x250] sm:$0xff]
    %v4688 = vld [vmem:[%s4612 + $0x258] sm:$0xff]
    %v4689 = vld [vmem:[%s4612 + $0x260] sm:$0xff]
    %v4690 = vld [vmem:[%s4612 + $0x268] sm:$0xff]
    %v4691 = vld [vmem:[%s4612 + $0x270] sm:$0xff]
    %v4692 = vld [vmem:[%s4612 + $0x278] sm:$0xff]
    %v4693 = vld [vmem:[%s4612 + $0x280] sm:$0xff]
    %v4694 = vld [vmem:[%s4612 + $0x288] sm:$0xff]
    %v4695 = vld [vmem:[%s4612 + $0x290] sm:$0xff]
    %v4696 = vld [vmem:[%s4612 + $0x298] sm:$0xff]
    %v4697 = vld [vmem:[%s4612 + $0x2a0] sm:$0xff]
    %v4698 = vld [vmem:[%s4612 + $0x2a8] sm:$0xff]
    %v4699 = vld [vmem:[%s4612 + $0x2b0] sm:$0xff]
    %v4700 = vld [vmem:[%s4612 + $0x2b8] sm:$0xff]
    %v4701 = vld [vmem:[%s4612 + $0x2c0] sm:$0xff]
    %v4702 = vld [vmem:[%s4612 + $0x2c8] sm:$0xff]
    %v4703 = vld [vmem:[%s4612 + $0x2d0] sm:$0xff]
    %v4704 = vld [vmem:[%s4612 + $0x2d8] sm:$0xff]
    %v4705 = vld [vmem:[%s4612 + $0x2e0] sm:$0xff]
    %v4706 = vld [vmem:[%s4612 + $0x2e8] sm:$0xff]
    %v4707 = vld [vmem:[%s4612 + $0x2f0] sm:$0xff]
    %v4708 = vld [vmem:[%s4612 + $0x2f8] sm:$0xff]
    %v4805 = vunpack.c.l.b16 %v4613
    %v4806 = vunpack.c.h.b16 %v4613
    %v4807 = vunpack.c.l.b16 %v4614
    %v4808 = vunpack.c.h.b16 %v4614
    %v4809 = vunpack.c.l.b16 %v4615
    %v4810 = vunpack.c.h.b16 %v4615
    %v4811 = vunpack.c.l.b16 %v4616
    %v4812 = vunpack.c.h.b16 %v4616
    %v4813 = vunpack.c.l.b16 %v4617
    %v4814 = vunpack.c.h.b16 %v4617
    %v4815 = vunpack.c.l.b16 %v4618
    %v4816 = vunpack.c.h.b16 %v4618
    %v4817 = vunpack.c.l.b16 %v4619
    %v4818 = vunpack.c.h.b16 %v4619
    %v4819 = vunpack.c.l.b16 %v4620
    %v4820 = vunpack.c.h.b16 %v4620
    %v4821 = vunpack.c.l.b16 %v4621
    %v4822 = vunpack.c.h.b16 %v4621
    %v4823 = vunpack.c.l.b16 %v4622
    %v4824 = vunpack.c.h.b16 %v4622
    %v4825 = vunpack.c.l.b16 %v4623
    %v4826 = vunpack.c.h.b16 %v4623
    %v4827 = vunpack.c.l.b16 %v4624
    %v4828 = vunpack.c.h.b16 %v4624
    %v4829 = vunpack.c.l.b16 %v4625
    %v4830 = vunpack.c.h.b16 %v4625
    %v4831 = vunpack.c.l.b16 %v4626
    %v4832 = vunpack.c.h.b16 %v4626
    %v4833 = vunpack.c.l.b16 %v4627
    %v4834 = vunpack.c.h.b16 %v4627
    %v4835 = vunpack.c.l.b16 %v4628
    %v4836 = vunpack.c.h.b16 %v4628
    %v4837 = vunpack.c.l.b16 %v4629
    %v4838 = vunpack.c.h.b16 %v4629
    %v4839 = vunpack.c.l.b16 %v4630
    %v4840 = vunpack.c.h.b16 %v4630
    %v4841 = vunpack.c.l.b16 %v4631
    %v4842 = vunpack.c.h.b16 %v4631
    %v4843 = vunpack.c.l.b16 %v4632
    %v4844 = vunpack.c.h.b16 %v4632
    %v4845 = vunpack.c.l.b16 %v4633
    %v4846 = vunpack.c.h.b16 %v4633
    %v4847 = vunpack.c.l.b16 %v4634
    %v4848 = vunpack.c.h.b16 %v4634
    %v4849 = vunpack.c.l.b16 %v4635
    %v4850 = vunpack.c.h.b16 %v4635
    %v4851 = vunpack.c.l.b16 %v4636
    %v4852 = vunpack.c.h.b16 %v4636
    %v4853 = vunpack.c.l.b16 %v4637
    %v4854 = vunpack.c.h.b16 %v4637
    %v4855 = vunpack.c.l.b16 %v4638
    %v4856 = vunpack.c.h.b16 %v4638
    %v4857 = vunpack.c.l.b16 %v4639
    %v4858 = vunpack.c.h.b16 %v4639
    %v4859 = vunpack.c.l.b16 %v4640
    %v4860 = vunpack.c.h.b16 %v4640
    %v4861 = vunpack.c.l.b16 %v4641
    %v4862 = vunpack.c.h.b16 %v4641
    %v4863 = vunpack.c.l.b16 %v4642
    %v4864 = vunpack.c.h.b16 %v4642
    %v4865 = vunpack.c.l.b16 %v4643
    %v4866 = vunpack.c.h.b16 %v4643
    %v4867 = vunpack.c.l.b16 %v4644
    %v4868 = vunpack.c.h.b16 %v4644
    %v4869 = vunpack.c.l.b16 %v4645
    %v4870 = vunpack.c.h.b16 %v4645
    %v4871 = vunpack.c.l.b16 %v4646
    %v4872 = vunpack.c.h.b16 %v4646
    %v4873 = vunpack.c.l.b16 %v4647
    %v4874 = vunpack.c.h.b16 %v4647
    %v4875 = vunpack.c.l.b16 %v4648
    %v4876 = vunpack.c.h.b16 %v4648
    %v4877 = vunpack.c.l.b16 %v4649
    %v4878 = vunpack.c.h.b16 %v4649
    %v4879 = vunpack.c.l.b16 %v4650
    %v4880 = vunpack.c.h.b16 %v4650
    %v4881 = vunpack.c.l.b16 %v4651
    %v4882 = vunpack.c.h.b16 %v4651
    %v4883 = vunpack.c.l.b16 %v4652
    %v4884 = vunpack.c.h.b16 %v4652
    %v4885 = vunpack.c.l.b16 %v4653
    %v4886 = vunpack.c.h.b16 %v4653
    %v4887 = vunpack.c.l.b16 %v4654
    %v4888 = vunpack.c.h.b16 %v4654
    %v4889 = vunpack.c.l.b16 %v4655
    %v4890 = vunpack.c.h.b16 %v4655
    %v4891 = vunpack.c.l.b16 %v4656
    %v4892 = vunpack.c.h.b16 %v4656
    %v4893 = vunpack.c.l.b16 %v4657
    %v4894 = vunpack.c.h.b16 %v4657
    %v4895 = vunpack.c.l.b16 %v4658
    %v4896 = vunpack.c.h.b16 %v4658
    %v4897 = vunpack.c.l.b16 %v4659
    %v4898 = vunpack.c.h.b16 %v4659
    %v4899 = vunpack.c.l.b16 %v4660
    %v4900 = vunpack.c.h.b16 %v4660
    %v4901 = vunpack.c.l.b16 %v4661
    %v4902 = vunpack.c.h.b16 %v4661
    %v4903 = vunpack.c.l.b16 %v4662
    %v4904 = vunpack.c.h.b16 %v4662
    %v4905 = vunpack.c.l.b16 %v4663
    %v4906 = vunpack.c.h.b16 %v4663
    %v4907 = vunpack.c.l.b16 %v4664
    %v4908 = vunpack.c.h.b16 %v4664
    %v4909 = vunpack.c.l.b16 %v4665
    %v4910 = vunpack.c.h.b16 %v4665
    %v4911 = vunpack.c.l.b16 %v4666
    %v4912 = vunpack.c.h.b16 %v4666
    %v4913 = vunpack.c.l.b16 %v4667
    %v4914 = vunpack.c.h.b16 %v4667
    %v4915 = vunpack.c.l.b16 %v4668
    %v4916 = vunpack.c.h.b16 %v4668
    %v4917 = vunpack.c.l.b16 %v4669
    %v4918 = vunpack.c.h.b16 %v4669
    %v4919 = vunpack.c.l.b16 %v4670
    %v4920 = vunpack.c.h.b16 %v4670
    %v4921 = vunpack.c.l.b16 %v4671
    %v4922 = vunpack.c.h.b16 %v4671
    %v4923 = vunpack.c.l.b16 %v4672
    %v4924 = vunpack.c.h.b16 %v4672
    %v4925 = vunpack.c.l.b16 %v4673
    %v4926 = vunpack.c.h.b16 %v4673
    %v4927 = vunpack.c.l.b16 %v4674
    %v4928 = vunpack.c.h.b16 %v4674
    %v4929 = vunpack.c.l.b16 %v4675
    %v4930 = vunpack.c.h.b16 %v4675
    %v4931 = vunpack.c.l.b16 %v4676
    %v4932 = vunpack.c.h.b16 %v4676
    %v4933 = vunpack.c.l.b16 %v4677
    %v4934 = vunpack.c.h.b16 %v4677
    %v4935 = vunpack.c.l.b16 %v4678
    %v4936 = vunpack.c.h.b16 %v4678
    %v4937 = vunpack.c.l.b16 %v4679
    %v4938 = vunpack.c.h.b16 %v4679
    %v4939 = vunpack.c.l.b16 %v4680
    %v4940 = vunpack.c.h.b16 %v4680
    %v4941 = vunpack.c.l.b16 %v4681
    %v4942 = vunpack.c.h.b16 %v4681
    %v4943 = vunpack.c.l.b16 %v4682
    %v4944 = vunpack.c.h.b16 %v4682
    %v4945 = vunpack.c.l.b16 %v4683
    %v4946 = vunpack.c.h.b16 %v4683
    %v4947 = vunpack.c.l.b16 %v4684
    %v4948 = vunpack.c.h.b16 %v4684
    %v4949 = vunpack.c.l.b16 %v4685
    %v4950 = vunpack.c.h.b16 %v4685
    %v4951 = vunpack.c.l.b16 %v4686
    %v4952 = vunpack.c.h.b16 %v4686
    %v4953 = vunpack.c.l.b16 %v4687
    %v4954 = vunpack.c.h.b16 %v4687
    %v4955 = vunpack.c.l.b16 %v4688
    %v4956 = vunpack.c.h.b16 %v4688
    %v4957 = vunpack.c.l.b16 %v4689
    %v4958 = vunpack.c.h.b16 %v4689
    %v4959 = vunpack.c.l.b16 %v4690
    %v4960 = vunpack.c.h.b16 %v4690
    %v4961 = vunpack.c.l.b16 %v4691
    %v4962 = vunpack.c.h.b16 %v4691
    %v4963 = vunpack.c.l.b16 %v4692
    %v4964 = vunpack.c.h.b16 %v4692
    %v4965 = vunpack.c.l.b16 %v4693
    %v4966 = vunpack.c.h.b16 %v4693
    %v4967 = vunpack.c.l.b16 %v4694
    %v4968 = vunpack.c.h.b16 %v4694
    %v4969 = vunpack.c.l.b16 %v4695
    %v4970 = vunpack.c.h.b16 %v4695
    %v4971 = vunpack.c.l.b16 %v4696
    %v4972 = vunpack.c.h.b16 %v4696
    %v4973 = vunpack.c.l.b16 %v4697
    %v4974 = vunpack.c.h.b16 %v4697
    %v4975 = vunpack.c.l.b16 %v4698
    %v4976 = vunpack.c.h.b16 %v4698
    %v4977 = vunpack.c.l.b16 %v4699
    %v4978 = vunpack.c.h.b16 %v4699
    %v4979 = vunpack.c.l.b16 %v4700
    %v4980 = vunpack.c.h.b16 %v4700
    %v4981 = vunpack.c.l.b16 %v4701
    %v4982 = vunpack.c.h.b16 %v4701
    %v4983 = vunpack.c.l.b16 %v4702
    %v4984 = vunpack.c.h.b16 %v4702
    %v4985 = vunpack.c.l.b16 %v4703
    %v4986 = vunpack.c.h.b16 %v4703
    %v4987 = vunpack.c.l.b16 %v4704
    %v4988 = vunpack.c.h.b16 %v4704
    %v4989 = vunpack.c.l.b16 %v4705
    %v4990 = vunpack.c.h.b16 %v4705
    %v4991 = vunpack.c.l.b16 %v4706
    %v4992 = vunpack.c.h.b16 %v4706
    %v4993 = vunpack.c.l.b16 %v4707
    %v4994 = vunpack.c.h.b16 %v4707
    %v4995 = vunpack.c.l.b16 %v4708
    %v4996 = vunpack.c.h.b16 %v4708
    %v4997 = vpack.c.b16 %v4809, %v4805
    %v4998 = vpack.c.b16 %v4810, %v4806
    %v4999 = vpack.c.b16 %v4811, %v4807
    %v5000 = vpack.c.b16 %v4812, %v4808
    %v5001 = vpack.c.b16 %v4817, %v4813
    %v5002 = vpack.c.b16 %v4818, %v4814
    %v5003 = vpack.c.b16 %v4819, %v4815
    %v5004 = vpack.c.b16 %v4820, %v4816
    %v5005 = vpack.c.b16 %v4825, %v4821
    %v5006 = vpack.c.b16 %v4826, %v4822
    %v5007 = vpack.c.b16 %v4827, %v4823
    %v5008 = vpack.c.b16 %v4828, %v4824
    %v5009 = vpack.c.b16 %v4833, %v4829
    %v5010 = vpack.c.b16 %v4834, %v4830
    %v5011 = vpack.c.b16 %v4835, %v4831
    %v5012 = vpack.c.b16 %v4836, %v4832
    %v5013 = vpack.c.b16 %v4841, %v4837
    %v5014 = vpack.c.b16 %v4842, %v4838
    %v5015 = vpack.c.b16 %v4843, %v4839
    %v5016 = vpack.c.b16 %v4844, %v4840
    %v5017 = vpack.c.b16 %v4849, %v4845
    %v5018 = vpack.c.b16 %v4850, %v4846
    %v5019 = vpack.c.b16 %v4851, %v4847
    %v5020 = vpack.c.b16 %v4852, %v4848
    %v5021 = vpack.c.b16 %v4857, %v4853
    %v5022 = vpack.c.b16 %v4858, %v4854
    %v5023 = vpack.c.b16 %v4859, %v4855
    %v5024 = vpack.c.b16 %v4860, %v4856
    %v5025 = vpack.c.b16 %v4865, %v4861
    %v5026 = vpack.c.b16 %v4866, %v4862
    %v5027 = vpack.c.b16 %v4867, %v4863
    %v5028 = vpack.c.b16 %v4868, %v4864
    %v5029 = vpack.c.b16 %v4873, %v4869
    %v5030 = vpack.c.b16 %v4874, %v4870
    %v5031 = vpack.c.b16 %v4875, %v4871
    %v5032 = vpack.c.b16 %v4876, %v4872
    %v5033 = vpack.c.b16 %v4881, %v4877
    %v5034 = vpack.c.b16 %v4882, %v4878
    %v5035 = vpack.c.b16 %v4883, %v4879
    %v5036 = vpack.c.b16 %v4884, %v4880
    %v5037 = vpack.c.b16 %v4889, %v4885
    %v5038 = vpack.c.b16 %v4890, %v4886
    %v5039 = vpack.c.b16 %v4891, %v4887
    %v5040 = vpack.c.b16 %v4892, %v4888
    %v5041 = vpack.c.b16 %v4897, %v4893
    %v5042 = vpack.c.b16 %v4898, %v4894
    %v5043 = vpack.c.b16 %v4899, %v4895
    %v5044 = vpack.c.b16 %v4900, %v4896
    %v5045 = vpack.c.b16 %v4905, %v4901
    %v5046 = vpack.c.b16 %v4906, %v4902
    %v5047 = vpack.c.b16 %v4907, %v4903
    %v5048 = vpack.c.b16 %v4908, %v4904
    %v5049 = vpack.c.b16 %v4913, %v4909
    %v5050 = vpack.c.b16 %v4914, %v4910
    %v5051 = vpack.c.b16 %v4915, %v4911
    %v5052 = vpack.c.b16 %v4916, %v4912
    %v5053 = vpack.c.b16 %v4921, %v4917
    %v5054 = vpack.c.b16 %v4922, %v4918
    %v5055 = vpack.c.b16 %v4923, %v4919
    %v5056 = vpack.c.b16 %v4924, %v4920
    %v5057 = vpack.c.b16 %v4929, %v4925
    %v5058 = vpack.c.b16 %v4930, %v4926
    %v5059 = vpack.c.b16 %v4931, %v4927
    %v5060 = vpack.c.b16 %v4932, %v4928
    %v5061 = vpack.c.b16 %v4937, %v4933
    %v5062 = vpack.c.b16 %v4938, %v4934
    %v5063 = vpack.c.b16 %v4939, %v4935
    %v5064 = vpack.c.b16 %v4940, %v4936
    %v5065 = vpack.c.b16 %v4945, %v4941
    %v5066 = vpack.c.b16 %v4946, %v4942
    %v5067 = vpack.c.b16 %v4947, %v4943
    %v5068 = vpack.c.b16 %v4948, %v4944
    %v5069 = vpack.c.b16 %v4953, %v4949
    %v5070 = vpack.c.b16 %v4954, %v4950
    %v5071 = vpack.c.b16 %v4955, %v4951
    %v5072 = vpack.c.b16 %v4956, %v4952
    %v5073 = vpack.c.b16 %v4961, %v4957
    %v5074 = vpack.c.b16 %v4962, %v4958
    %v5075 = vpack.c.b16 %v4963, %v4959
    %v5076 = vpack.c.b16 %v4964, %v4960
    %v5077 = vpack.c.b16 %v4969, %v4965
    %v5078 = vpack.c.b16 %v4970, %v4966
    %v5079 = vpack.c.b16 %v4971, %v4967
    %v5080 = vpack.c.b16 %v4972, %v4968
    %v5081 = vpack.c.b16 %v4977, %v4973
    %v5082 = vpack.c.b16 %v4978, %v4974
    %v5083 = vpack.c.b16 %v4979, %v4975
    %v5084 = vpack.c.b16 %v4980, %v4976
    %v5085 = vpack.c.b16 %v4985, %v4981
    %v5086 = vpack.c.b16 %v4986, %v4982
    %v5087 = vpack.c.b16 %v4987, %v4983
    %v5088 = vpack.c.b16 %v4988, %v4984
    %v5089 = vpack.c.b16 %v4993, %v4989
    %v5090 = vpack.c.b16 %v4994, %v4990
    %v5091 = vpack.c.b16 %v4995, %v4991
    %v5092 = vpack.c.b16 %v4996, %v4992
    %5189 = vmatprep.subr.bf16.mxu0 %v4998
    %5190 = vmatpush1.bf16.msra.mxu0 %v4997
    %5191 = vmatprep.subr.bf16.mxu0 %v5002
    %5192 = vmatpush1.bf16.msra.mxu0 %v5001
    %5193 = vmatprep.subr.bf16.mxu0 %v5006
    %5194 = vmatpush1.bf16.msra.mxu0 %v5005
    %5195 = vmatprep.subr.bf16.mxu0 %v5010
    %5196 = vmatpush1.bf16.msra.mxu0 %v5009
    %5197 = vmatprep.subr.bf16.mxu0 %v5014
    %5198 = vmatpush1.bf16.msra.mxu0 %v5013
    %5199 = vmatprep.subr.bf16.mxu0 %v5018
    %5200 = vmatpush1.bf16.msra.mxu0 %v5017
    %5201 = vmatprep.subr.bf16.mxu0 %v5022
    %5202 = vmatpush1.bf16.msra.mxu0 %v5021
    %5203 = vmatprep.subr.bf16.mxu0 %v5026
    %5204 = vmatpush1.bf16.msra.mxu0 %v5025
    %5205 = vmatprep.subr.bf16.mxu0 %v5030
    %5206 = vmatpush1.bf16.msra.mxu0 %v5029
    %5207 = vmatprep.subr.bf16.mxu0 %v5034
    %5208 = vmatpush1.bf16.msra.mxu0 %v5033
    %5209 = vmatprep.subr.bf16.mxu0 %v5038
    %5210 = vmatpush1.bf16.msra.mxu0 %v5037
    %5211 = vmatprep.subr.bf16.mxu0 %v5042
    %5212 = vmatpush1.bf16.msra.mxu0 %v5041
    %5213 = vmatprep.subr.bf16.mxu0 %v5046
    %5214 = vmatpush1.bf16.msra.mxu0 %v5045
    %5215 = vmatprep.subr.bf16.mxu0 %v5050
    %5216 = vmatpush1.bf16.msra.mxu0 %v5049
    %5217 = vmatprep.subr.bf16.mxu0 %v5054
    %5218 = vmatpush1.bf16.msra.mxu0 %v5053
    %5219 = vmatprep.subr.bf16.mxu0 %v5058
    %5220 = vmatpush1.bf16.msra.mxu0 %v5057
    %5221 = vmatprep.mubr.bf16.mxu0 %v4352
    %5222 = vmatmul.mubr.bf16.gmra.mrb[0].mxu0 %v4349
    %v5223 = vpop.f32.mrb[0].mxu0
    %v5224 = vadd.f32 0.0, %v5223
    %v5225 = vpop.f32.mrb[0].mxu0
    %v5226 = vadd.f32 0.0, %v5225
    %v5227 = vpop.f32.mrb[0].mxu0
    %v5228 = vadd.f32 0.0, %v5227
    %v5229 = vpop.f32.mrb[0].mxu0
    %v5230 = vadd.f32 0.0, %v5229
    %5231 = vmatprep.mubr.bf16.mxu0 %v4359
    %5232 = vmatmul.mubr.bf16.gmra.mrb[0].mxu0 %v4357
    %v5233 = vpop.f32.mrb[0].mxu0
    %v5234 = vadd.f32 0.0, %v5233
    %v5235 = vpop.f32.mrb[0].mxu0
    %v5236 = vadd.f32 0.0, %v5235
    %v5237 = vpop.f32.mrb[0].mxu0
    %v5238 = vadd.f32 0.0, %v5237
    %v5239 = vpop.f32.mrb[0].mxu0
    %v5240 = vadd.f32 0.0, %v5239
    %5241 = vdwg.mxu0
    %5242 = vmatprep.subr.bf16.mxu0 %v5062
    %5243 = vmatpush1.bf16.msra.mxu0 %v5061
    %5244 = vmatprep.subr.bf16.mxu0 %v5066
    %5245 = vmatpush1.bf16.msra.mxu0 %v5065
    %5246 = vmatprep.subr.bf16.mxu0 %v5070
    %5247 = vmatpush1.bf16.msra.mxu0 %v5069
    %5248 = vmatprep.subr.bf16.mxu0 %v5074
    %5249 = vmatpush1.bf16.msra.mxu0 %v5073
    %5250 = vmatprep.subr.bf16.mxu0 %v5078
    %5251 = vmatpush1.bf16.msra.mxu0 %v5077
    %5252 = vmatprep.subr.bf16.mxu0 %v5082
    %5253 = vmatpush1.bf16.msra.mxu0 %v5081
    %5254 = vmatprep.subr.bf16.mxu0 %v5086
    %5255 = vmatpush1.bf16.msra.mxu0 %v5085
    %5256 = vmatprep.subr.bf16.mxu0 %v5090
    %5257 = vmatpush1.bf16.msra.mxu0 %v5089
    %5258 = vmatprep.subr.bf16.mxu0 0
    %5259 = vmatpush1.bf16.msra.mxu0 0
    %5260 = vmatprep.subr.bf16.mxu0 0
    %5261 = vmatpush1.bf16.msra.mxu0 0
    %5262 = vmatprep.subr.bf16.mxu0 0
    %5263 = vmatpush1.bf16.msra.mxu0 0
    %5264 = vmatprep.subr.bf16.mxu0 0
    %5265 = vmatpush1.bf16.msra.mxu0 0
    %5266 = vmatprep.subr.bf16.mxu0 0
    %5267 = vmatpush1.bf16.msra.mxu0 0
    %5268 = vmatprep.subr.bf16.mxu0 0
    %5269 = vmatpush1.bf16.msra.mxu0 0
    %5270 = vmatprep.subr.bf16.mxu0 0
    %5271 = vmatpush1.bf16.msra.mxu0 0
    %5272 = vmatprep.subr.bf16.mxu0 0
    %5273 = vmatpush1.bf16.msra.mxu0 0
    %5274 = vmatprep.mubr.bf16.mxu0 0
    %5275 = vmatmul.mubr.bf16.gmra.mrb[0].mxu0 %v4355
    %v5276 = vpop.f32.mrb[0].mxu0
    %v5277 = vadd.f32 %v5224, %v5276
    %v5278 = vpop.f32.mrb[0].mxu0
    %v5279 = vadd.f32 %v5226, %v5278
    %v5280 = vpop.f32.mrb[0].mxu0
    %v5281 = vadd.f32 %v5228, %v5280
    %v5282 = vpop.f32.mrb[0].mxu0
    %v5283 = vadd.f32 %v5230, %v5282
    %5284 = vmatprep.mubr.bf16.mxu0 0
    %5285 = vmatmul.mubr.bf16.gmra.mrb[0].mxu0 %v4361
    %v5286 = vpop.f32.mrb[0].mxu0
    %v5287 = vadd.f32 %v5234, %v5286
    %v5288 = vpop.f32.mrb[0].mxu0
    %v5289 = vadd.f32 %v5236, %v5288
    %v5290 = vpop.f32.mrb[0].mxu0
    %v5291 = vadd.f32 %v5238, %v5290
    %v5292 = vpop.f32.mrb[0].mxu0
    %v5293 = vadd.f32 %v5240, %v5292
    %5294 = vdwg.mxu0
    %5295 = vmatprep.subr.bf16.mxu0 %v5000
    %5296 = vmatpush1.bf16.msra.mxu0 %v4999
    %5297 = vmatprep.subr.bf16.mxu0 %v5004
    %5298 = vmatpush1.bf16.msra.mxu0 %v5003
    %5299 = vmatprep.subr.bf16.mxu0 %v5008
    %5300 = vmatpush1.bf16.msra.mxu0 %v5007
    %5301 = vmatprep.subr.bf16.mxu0 %v5012
    %5302 = vmatpush1.bf16.msra.mxu0 %v5011
    %5303 = vmatprep.subr.bf16.mxu0 %v5016
    %5304 = vmatpush1.bf16.msra.mxu0 %v5015
    %5305 = vmatprep.subr.bf16.mxu0 %v5020
    %5306 = vmatpush1.bf16.msra.mxu0 %v5019
    %5307 = vmatprep.subr.bf16.mxu0 %v5024
    %5308 = vmatpush1.bf16.msra.mxu0 %v5023
    %5309 = vmatprep.subr.bf16.mxu0 %v5028
    %5310 = vmatpush1.bf16.msra.mxu0 %v5027
    %5311 = vmatprep.subr.bf16.mxu0 %v5032
    %5312 = vmatpush1.bf16.msra.mxu0 %v5031
    %5313 = vmatprep.subr.bf16.mxu0 %v5036
    %5314 = vmatpush1.bf16.msra.mxu0 %v5035
    %5315 = vmatprep.subr.bf16.mxu0 %v5040
    %5316 = vmatpush1.bf16.msra.mxu0 %v5039
    %5317 = vmatprep.subr.bf16.mxu0 %v5044
    %5318 = vmatpush1.bf16.msra.mxu0 %v5043
    %5319 = vmatprep.subr.bf16.mxu0 %v5048
    %5320 = vmatpush1.bf16.msra.mxu0 %v5047
    %5321 = vmatprep.subr.bf16.mxu0 %v5052
    %5322 = vmatpush1.bf16.msra.mxu0 %v5051
    %5323 = vmatprep.subr.bf16.mxu0 %v5056
    %5324 = vmatpush1.bf16.msra.mxu0 %v5055
    %5325 = vmatprep.subr.bf16.mxu0 %v5060
    %5326 = vmatpush1.bf16.msra.mxu0 %v5059
    %5327 = vmatprep.mubr.bf16.mxu0 %v4352
    %5328 = vmatmul.mubr.bf16.gmra.mrb[0].mxu0 %v4349
    %v5329 = vpop.f32.mrb[0].mxu0
    %v5330 = vadd.f32 0.0, %v5329
    %v5331 = vpop.f32.mrb[0].mxu0
    %v5332 = vadd.f32 0.0, %v5331
    %v5333 = vpop.f32.mrb[0].mxu0
    %v5334 = vadd.f32 0.0, %v5333
    %v5335 = vpop.f32.mrb[0].mxu0
    %v5336 = vadd.f32 0.0, %v5335
    %5337 = vmatprep.mubr.bf16.mxu0 %v4359
    %5338 = vmatmul.mubr.bf16.gmra.mrb[0].mxu0 %v4357
    %v5339 = vpop.f32.mrb[0].mxu0
    %v5340 = vadd.f32 0.0, %v5339
    %v5341 = vpop.f32.mrb[0].mxu0
    %v5342 = vadd.f32 0.0, %v5341
    %v5343 = vpop.f32.mrb[0].mxu0
    %v5344 = vadd.f32 0.0, %v5343
    %v5345 = vpop.f32.mrb[0].mxu0
    %v5346 = vadd.f32 0.0, %v5345
    %5347 = vdwg.mxu0
    %5348 = vmatprep.subr.bf16.mxu0 %v5064
    %5349 = vmatpush1.bf16.msra.mxu0 %v5063
    %5350 = vmatprep.subr.bf16.mxu0 %v5068
    %5351 = vmatpush1.bf16.msra.mxu0 %v5067
    %5352 = vmatprep.subr.bf16.mxu0 %v5072
    %5353 = vmatpush1.bf16.msra.mxu0 %v5071
    %5354 = vmatprep.subr.bf16.mxu0 %v5076
    %5355 = vmatpush1.bf16.msra.mxu0 %v5075
    %5356 = vmatprep.subr.bf16.mxu0 %v5080
    %5357 = vmatpush1.bf16.msra.mxu0 %v5079
    %5358 = vmatprep.subr.bf16.mxu0 %v5084
    %5359 = vmatpush1.bf16.msra.mxu0 %v5083
    %5360 = vmatprep.subr.bf16.mxu0 %v5088
    %5361 = vmatpush1.bf16.msra.mxu0 %v5087
    %5362 = vmatprep.subr.bf16.mxu0 %v5092
    %5363 = vmatpush1.bf16.msra.mxu0 %v5091
    %5364 = vmatprep.subr.bf16.mxu0 0
    %5365 = vmatpush1.bf16.msra.mxu0 0
    %5366 = vmatprep.subr.bf16.mxu0 0
    %5367 = vmatpush1.bf16.msra.mxu0 0
    %5368 = vmatprep.subr.bf16.mxu0 0
    %5369 = vmatpush1.bf16.msra.mxu0 0
    %5370 = vmatprep.subr.bf16.mxu0 0
    %5371 = vmatpush1.bf16.msra.mxu0 0
    %5372 = vmatprep.subr.bf16.mxu0 0
    %5373 = vmatpush1.bf16.msra.mxu0 0
    %5374 = vmatprep.subr.bf16.mxu0 0
    %5375 = vmatpush1.bf16.msra.mxu0 0
    %5376 = vmatprep.subr.bf16.mxu0 0
    %5377 = vmatpush1.bf16.msra.mxu0 0
    %5378 = vmatprep.subr.bf16.mxu0 0
    %5379 = vmatpush1.bf16.msra.mxu0 0
    %5380 = vmatprep.mubr.bf16.mxu0 0
    %5381 = vmatmul.mubr.bf16.gmra.mrb[0].mxu0 %v4355
    %v5382 = vpop.f32.mrb[0].mxu0
    %v5383 = vadd.f32 %v5330, %v5382
    %v5384 = vpop.f32.mrb[0].mxu0
    %v5385 = vadd.f32 %v5332, %v5384
    %v5386 = vpop.f32.mrb[0].mxu0
    %v5387 = vadd.f32 %v5334, %v5386
    %v5388 = vpop.f32.mrb[0].mxu0
    %v5389 = vadd.f32 %v5336, %v5388
    %5390 = vmatprep.mubr.bf16.mxu0 0
    %5391 = vmatmul.mubr.bf16.gmra.mrb[0].mxu0 %v4361
    %v5392 = vpop.f32.mrb[0].mxu0
    %v5393 = vadd.f32 %v5340, %v5392
    %v5394 = vpop.f32.mrb[0].mxu0
    %v5395 = vadd.f32 %v5342, %v5394
    %v5396 = vpop.f32.mrb[0].mxu0
    %v5397 = vadd.f32 %v5344, %v5396
    %v5398 = vpop.f32.mrb[0].mxu0
    %v5399 = vadd.f32 %v5346, %v5398
    %5400 = vdwg.mxu0
    %5401 = vmatprep.subr.bf16.mxu0 %v4998
    %5402 = vmatpush1.bf16.msra.mxu0 %v4997
    %5403 = vmatprep.subr.bf16.mxu0 %v5002
    %5404 = vmatpush1.bf16.msra.mxu0 %v5001
    %5405 = vmatprep.subr.bf16.mxu0 %v5006
    %5406 = vmatpush1.bf16.msra.mxu0 %v5005
    %5407 = vmatprep.subr.bf16.mxu0 %v5010
    %5408 = vmatpush1.bf16.msra.mxu0 %v5009
    %5409 = vmatprep.subr.bf16.mxu0 %v5014
    %5410 = vmatpush1.bf16.msra.mxu0 %v5013
    %5411 = vmatprep.subr.bf16.mxu0 %v5018
    %5412 = vmatpush1.bf16.msra.mxu0 %v5017
    %5413 = vmatprep.subr.bf16.mxu0 %v5022
    %5414 = vmatpush1.bf16.msra.mxu0 %v5021
    %5415 = vmatprep.subr.bf16.mxu0 %v5026
    %5416 = vmatpush1.bf16.msra.mxu0 %v5025
    %5417 = vmatprep.subr.bf16.mxu0 %v5030
    %5418 = vmatpush1.bf16.msra.mxu0 %v5029
    %5419 = vmatprep.subr.bf16.mxu0 %v5034
    %5420 = vmatpush1.bf16.msra.mxu0 %v5033
    %5421 = vmatprep.subr.bf16.mxu0 %v5038
    %5422 = vmatpush1.bf16.msra.mxu0 %v5037
    %5423 = vmatprep.subr.bf16.mxu0 %v5042
    %5424 = vmatpush1.bf16.msra.mxu0 %v5041
    %5425 = vmatprep.subr.bf16.mxu0 %v5046
    %5426 = vmatpush1.bf16.msra.mxu0 %v5045
    %5427 = vmatprep.subr.bf16.mxu0 %v5050
    %5428 = vmatpush1.bf16.msra.mxu0 %v5049
    %5429 = vmatprep.subr.bf16.mxu0 %v5054
    %5430 = vmatpush1.bf16.msra.mxu0 %v5053
    %5431 = vmatprep.subr.bf16.mxu0 %v5058
    %5432 = vmatpush1.bf16.msra.mxu0 %v5057
    %5433 = vmatprep.mubr.bf16.mxu0 %v967
    %5434 = vmatmul.mubr.bf16.gmra.mrb[0].mxu0 %v966
    %v5435 = vpop.f32.mrb[0].mxu0
    %v5436 = vadd.f32 0.0, %v5435
    %v5437 = vpop.f32.mrb[0].mxu0
    %v5438 = vadd.f32 0.0, %v5437
    %v5439 = vpop.f32.mrb[0].mxu0
    %v5440 = vadd.f32 0.0, %v5439
    %v5441 = vpop.f32.mrb[0].mxu0
    %v5442 = vadd.f32 0.0, %v5441
    %5443 = vmatprep.mubr.bf16.mxu0 %v970
    %5444 = vmatmul.mubr.bf16.gmra.mrb[0].mxu0 %v969
    %v5445 = vpop.f32.mrb[0].mxu0
    %v5446 = vadd.f32 0.0, %v5445
    %v5447 = vpop.f32.mrb[0].mxu0
    %v5448 = vadd.f32 0.0, %v5447
    %v5449 = vpop.f32.mrb[0].mxu0
    %v5450 = vadd.f32 0.0, %v5449
    %v5451 = vpop.f32.mrb[0].mxu0
    %v5452 = vadd.f32 0.0, %v5451
    %5453 = vdwg.mxu0
    %5454 = vmatprep.subr.bf16.mxu0 %v5062
    %5455 = vmatpush1.bf16.msra.mxu0 %v5061
    %5456 = vmatprep.subr.bf16.mxu0 %v5066
    %5457 = vmatpush1.bf16.msra.mxu0 %v5065
    %5458 = vmatprep.subr.bf16.mxu0 %v5070
    %5459 = vmatpush1.bf16.msra.mxu0 %v5069
    %5460 = vmatprep.subr.bf16.mxu0 %v5074
    %5461 = vmatpush1.bf16.msra.mxu0 %v5073
    %5462 = vmatprep.subr.bf16.mxu0 %v5078
    %5463 = vmatpush1.bf16.msra.mxu0 %v5077
    %5464 = vmatprep.subr.bf16.mxu0 %v5082
    %5465 = vmatpush1.bf16.msra.mxu0 %v5081
    %5466 = vmatprep.subr.bf16.mxu0 %v5086
    %5467 = vmatpush1.bf16.msra.mxu0 %v5085
    %5468 = vmatprep.subr.bf16.mxu0 %v5090
    %5469 = vmatpush1.bf16.msra.mxu0 %v5089
    %5470 = vmatprep.subr.bf16.mxu0 0
    %5471 = vmatpush1.bf16.msra.mxu0 0
    %5472 = vmatprep.subr.bf16.mxu0 0
    %5473 = vmatpush1.bf16.msra.mxu0 0
    %5474 = vmatprep.subr.bf16.mxu0 0
    %5475 = vmatpush1.bf16.msra.mxu0 0
    %5476 = vmatprep.subr.bf16.mxu0 0
    %5477 = vmatpush1.bf16.msra.mxu0 0
    %5478 = vmatprep.subr.bf16.mxu0 0
    %5479 = vmatpush1.bf16.msra.mxu0 0
    %5480 = vmatprep.subr.bf16.mxu0 0
    %5481 = vmatpush1.bf16.msra.mxu0 0
    %5482 = vmatprep.subr.bf16.mxu0 0
    %5483 = vmatpush1.bf16.msra.mxu0 0
    %5484 = vmatprep.subr.bf16.mxu0 0
    %5485 = vmatpush1.bf16.msra.mxu0 0
    %5486 = vmatprep.mubr.bf16.mxu0 0
    %5487 = vmatmul.mubr.bf16.gmra.mrb[0].mxu0 %v968
    %v5488 = vpop.f32.mrb[0].mxu0
    %v5489 = vadd.f32 %v5436, %v5488
    %v5490 = vpop.f32.mrb[0].mxu0
    %v5491 = vadd.f32 %v5438, %v5490
    %v5492 = vpop.f32.mrb[0].mxu0
    %v5493 = vadd.f32 %v5440, %v5492
    %v5494 = vpop.f32.mrb[0].mxu0
    %v5495 = vadd.f32 %v5442, %v5494
    %5496 = vmatprep.mubr.bf16.mxu0 0
    %5497 = vmatmul.mubr.bf16.gmra.mrb[0].mxu0 %v971
    %v5498 = vpop.f32.mrb[0].mxu0
    %v5499 = vadd.f32 %v5446, %v5498
    %v5500 = vpop.f32.mrb[0].mxu0
    %v5501 = vadd.f32 %v5448, %v5500
    %v5502 = vpop.f32.mrb[0].mxu0
    %v5503 = vadd.f32 %v5450, %v5502
    %v5504 = vpop.f32.mrb[0].mxu0
    %v5505 = vadd.f32 %v5452, %v5504
    %5506 = vdwg.mxu0
    %5507 = vmatprep.subr.bf16.mxu0 %v5000
    %5508 = vmatpush1.bf16.msra.mxu0 %v4999
    %5509 = vmatprep.subr.bf16.mxu0 %v5004
    %5510 = vmatpush1.bf16.msra.mxu0 %v5003
    %5511 = vmatprep.subr.bf16.mxu0 %v5008
    %5512 = vmatpush1.bf16.msra.mxu0 %v5007
    %5513 = vmatprep.subr.bf16.mxu0 %v5012
    %5514 = vmatpush1.bf16.msra.mxu0 %v5011
    %5515 = vmatprep.subr.bf16.mxu0 %v5016
    %5516 = vmatpush1.bf16.msra.mxu0 %v5015
    %5517 = vmatprep.subr.bf16.mxu0 %v5020
    %5518 = vmatpush1.bf16.msra.mxu0 %v5019
    %5519 = vmatprep.subr.bf16.mxu0 %v5024
    %5520 = vmatpush1.bf16.msra.mxu0 %v5023
    %5521 = vmatprep.subr.bf16.mxu0 %v5028
    %5522 = vmatpush1.bf16.msra.mxu0 %v5027
    %5523 = vmatprep.subr.bf16.mxu0 %v5032
    %5524 = vmatpush1.bf16.msra.mxu0 %v5031
    %5525 = vmatprep.subr.bf16.mxu0 %v5036
    %5526 = vmatpush1.bf16.msra.mxu0 %v5035
    %5527 = vmatprep.subr.bf16.mxu0 %v5040
    %5528 = vmatpush1.bf16.msra.mxu0 %v5039
    %5529 = vmatprep.subr.bf16.mxu0 %v5044
    %5530 = vmatpush1.bf16.msra.mxu0 %v5043
    %5531 = vmatprep.subr.bf16.mxu0 %v5048
    %5532 = vmatpush1.bf16.msra.mxu0 %v5047
    %5533 = vmatprep.subr.bf16.mxu0 %v5052
    %5534 = vmatpush1.bf16.msra.mxu0 %v5051
    %5535 = vmatprep.subr.bf16.mxu0 %v5056
    %5536 = vmatpush1.bf16.msra.mxu0 %v5055
    %5537 = vmatprep.subr.bf16.mxu0 %v5060
    %5538 = vmatpush1.bf16.msra.mxu0 %v5059
    %5539 = vmatprep.mubr.bf16.mxu0 %v967
    %5540 = vmatmul.mubr.bf16.gmra.mrb[0].mxu0 %v966
    %v5541 = vpop.f32.mrb[0].mxu0
    %v5542 = vadd.f32 0.0, %v5541
    %v5543 = vpop.f32.mrb[0].mxu0
    %v5544 = vadd.f32 0.0, %v5543
    %v5545 = vpop.f32.mrb[0].mxu0
    %v5546 = vadd.f32 0.0, %v5545
    %v5547 = vpop.f32.mrb[0].mxu0
    %v5548 = vadd.f32 0.0, %v5547
    %5549 = vmatprep.mubr.bf16.mxu0 %v970
    %5550 = vmatmul.mubr.bf16.gmra.mrb[0].mxu0 %v969
    %v5551 = vpop.f32.mrb[0].mxu0
    %v5552 = vadd.f32 0.0, %v5551
    %v5553 = vpop.f32.mrb[0].mxu0
    %v5554 = vadd.f32 0.0, %v5553
    %v5555 = vpop.f32.mrb[0].mxu0
    %v5556 = vadd.f32 0.0, %v5555
    %v5557 = vpop.f32.mrb[0].mxu0
    %v5558 = vadd.f32 0.0, %v5557
    %5559 = vdwg.mxu0
    %5560 = vmatprep.subr.bf16.mxu0 %v5064
    %5561 = vmatpush1.bf16.msra.mxu0 %v5063
    %5562 = vmatprep.subr.bf16.mxu0 %v5068
    %5563 = vmatpush1.bf16.msra.mxu0 %v5067
    %5564 = vmatprep.subr.bf16.mxu0 %v5072
    %5565 = vmatpush1.bf16.msra.mxu0 %v5071
    %5566 = vmatprep.subr.bf16.mxu0 %v5076
    %5567 = vmatpush1.bf16.msra.mxu0 %v5075
    %5568 = vmatprep.subr.bf16.mxu0 %v5080
    %5569 = vmatpush1.bf16.msra.mxu0 %v5079
    %5570 = vmatprep.subr.bf16.mxu0 %v5084
    %5571 = vmatpush1.bf16.msra.mxu0 %v5083
    %5572 = vmatprep.subr.bf16.mxu0 %v5088
    %5573 = vmatpush1.bf16.msra.mxu0 %v5087
    %5574 = vmatprep.subr.bf16.mxu0 %v5092
    %5575 = vmatpush1.bf16.msra.mxu0 %v5091
    %5576 = vmatprep.subr.bf16.mxu0 0
    %5577 = vmatpush1.bf16.msra.mxu0 0
    %5578 = vmatprep.subr.bf16.mxu0 0
    %5579 = vmatpush1.bf16.msra.mxu0 0
    %5580 = vmatprep.subr.bf16.mxu0 0
    %5581 = vmatpush1.bf16.msra.mxu0 0
    %5582 = vmatprep.subr.bf16.mxu0 0
    %5583 = vmatpush1.bf16.msra.mxu0 0
    %5584 = vmatprep.subr.bf16.mxu0 0
    %5585 = vmatpush1.bf16.msra.mxu0 0
    %5586 = vmatprep.subr.bf16.mxu0 0
    %5587 = vmatpush1.bf16.msra.mxu0 0
    %5588 = vmatprep.subr.bf16.mxu0 0
    %5589 = vmatpush1.bf16.msra.mxu0 0
    %5590 = vmatprep.subr.bf16.mxu0 0
    %5591 = vmatpush1.bf16.msra.mxu0 0
    %5592 = vmatprep.mubr.bf16.mxu0 0
    %5593 = vmatmul.mubr.bf16.gmra.mrb[0].mxu0 %v968
    %v5594 = vpop.f32.mrb[0].mxu0
    %v5595 = vadd.f32 %v5542, %v5594
    %v5596 = vpop.f32.mrb[0].mxu0
    %v5597 = vadd.f32 %v5544, %v5596
    %v5598 = vpop.f32.mrb[0].mxu0
    %v5599 = vadd.f32 %v5546, %v5598
    %v5600 = vpop.f32.mrb[0].mxu0
    %v5601 = vadd.f32 %v5548, %v5600
    %5602 = vmatprep.mubr.bf16.mxu0 0
    %5603 = vmatmul.mubr.bf16.gmra.mrb[0].mxu0 %v971
    %v5604 = vpop.f32.mrb[0].mxu0
    %v5605 = vadd.f32 %v5552, %v5604
    %v5606 = vpop.f32.mrb[0].mxu0
    %v5607 = vadd.f32 %v5554, %v5606
    %v5608 = vpop.f32.mrb[0].mxu0
    %v5609 = vadd.f32 %v5556, %v5608
    %v5610 = vpop.f32.mrb[0].mxu0
    %v5611 = vadd.f32 %v5558, %v5610
    %5612 = vdwg.mxu0
    %v5613 = vadd.f32 %v4580, %v5277
    %v5614 = vadd.f32 %v4581, %v5279
    %v5615 = vadd.f32 %v4582, %v5383
    %v5616 = vadd.f32 %v4583, %v5385
    %v5617 = vadd.f32 %v4584, %v5281
    %v5618 = vadd.f32 %v4585, %v5283
    %v5619 = vadd.f32 %v4586, %v5387
    %v5620 = vadd.f32 %v4587, %v5389
    %v5621 = vadd.f32 %v4588, %v5287
    %v5622 = vadd.f32 %v4589, %v5289
    %v5623 = vadd.f32 %v4590, %v5393
    %v5624 = vadd.f32 %v4591, %v5395
    %v5625 = vadd.f32 %v4592, %v5291
    %v5626 = vadd.f32 %v4593, %v5293
    %v5627 = vadd.f32 %v4594, %v5397
    %v5628 = vadd.f32 %v4595, %v5399
    %v5629 = vadd.f32 %v4596, %v5489
    %v5630 = vadd.f32 %v4597, %v5491
    %v5631 = vadd.f32 %v4598, %v5595
    %v5632 = vadd.f32 %v4599, %v5597
    %v5633 = vadd.f32 %v4600, %v5493
    %v5634 = vadd.f32 %v4601, %v5495
    %v5635 = vadd.f32 %v4602, %v5599
    %v5636 = vadd.f32 %v4603, %v5601
    %v5637 = vadd.f32 %v4604, %v5499
    %v5638 = vadd.f32 %v4605, %v5501
    %v5639 = vadd.f32 %v4606, %v5605
    %v5640 = vadd.f32 %v4607, %v5607
    %v5641 = vadd.f32 %v4608, %v5503
    %v5642 = vadd.f32 %v4609, %v5505
    %v5643 = vadd.f32 %v4610, %v5609
    %v5644 = vadd.f32 %v4611, %v5611
    %s5645 = scalar_lea.vmem [#allocation6], 3072
    %v5646 = vld [vmem:[%s5645] sm:$0xff]
    %v5647 = vld [vmem:[%s5645 + $0x8] sm:$0xff]
    %v5648 = vld [vmem:[%s5645 + $0x10] sm:$0xff]
    %v5649 = vld [vmem:[%s5645 + $0x18] sm:$0xff]
    %v5650 = vld [vmem:[%s5645 + $0x20] sm:$0xff]
    %v5651 = vld [vmem:[%s5645 + $0x28] sm:$0xff]
    %v5652 = vld [vmem:[%s5645 + $0x30] sm:$0xff]
    %v5653 = vld [vmem:[%s5645 + $0x38] sm:$0xff]
    %v5654 = vld [vmem:[%s5645 + $0x40] sm:$0xff]
    %v5655 = vld [vmem:[%s5645 + $0x48] sm:$0xff]
    %v5656 = vld [vmem:[%s5645 + $0x50] sm:$0xff]
    %v5657 = vld [vmem:[%s5645 + $0x58] sm:$0xff]
    %v5658 = vld [vmem:[%s5645 + $0x60] sm:$0xff]
    %v5659 = vld [vmem:[%s5645 + $0x68] sm:$0xff]
    %v5660 = vld [vmem:[%s5645 + $0x70] sm:$0xff]
    %v5661 = vld [vmem:[%s5645 + $0x78] sm:$0xff]
    %v5662 = vld [vmem:[%s5645 + $0x80] sm:$0xff]
    %v5663 = vld [vmem:[%s5645 + $0x88] sm:$0xff]
    %v5664 = vld [vmem:[%s5645 + $0x90] sm:$0xff]
    %v5665 = vld [vmem:[%s5645 + $0x98] sm:$0xff]
    %v5666 = vld [vmem:[%s5645 + $0xa0] sm:$0xff]
    %v5667 = vld [vmem:[%s5645 + $0xa8] sm:$0xff]
    %v5668 = vld [vmem:[%s5645 + $0xb0] sm:$0xff]
    %v5669 = vld [vmem:[%s5645 + $0xb8] sm:$0xff]
    %v5670 = vld [vmem:[%s5645 + $0xc0] sm:$0xff]
    %v5671 = vld [vmem:[%s5645 + $0xc8] sm:$0xff]
    %v5672 = vld [vmem:[%s5645 + $0xd0] sm:$0xff]
    %v5673 = vld [vmem:[%s5645 + $0xd8] sm:$0xff]
    %v5674 = vld [vmem:[%s5645 + $0xe0] sm:$0xff]
    %v5675 = vld [vmem:[%s5645 + $0xe8] sm:$0xff]
    %v5676 = vld [vmem:[%s5645 + $0xf0] sm:$0xff]
    %v5677 = vld [vmem:[%s5645 + $0xf8] sm:$0xff]
    %v5678 = vld [vmem:[%s5645 + $0x100] sm:$0xff]
    %v5679 = vld [vmem:[%s5645 + $0x108] sm:$0xff]
    %v5680 = vld [vmem:[%s5645 + $0x110] sm:$0xff]
    %v5681 = vld [vmem:[%s5645 + $0x118] sm:$0xff]
    %v5682 = vld [vmem:[%s5645 + $0x120] sm:$0xff]
    %v5683 = vld [vmem:[%s5645 + $0x128] sm:$0xff]
    %v5684 = vld [vmem:[%s5645 + $0x130] sm:$0xff]
    %v5685 = vld [vmem:[%s5645 + $0x138] sm:$0xff]
    %v5686 = vld [vmem:[%s5645 + $0x140] sm:$0xff]
    %v5687 = vld [vmem:[%s5645 + $0x148] sm:$0xff]
    %v5688 = vld [vmem:[%s5645 + $0x150] sm:$0xff]
    %v5689 = vld [vmem:[%s5645 + $0x158] sm:$0xff]
    %v5690 = vld [vmem:[%s5645 + $0x160] sm:$0xff]
    %v5691 = vld [vmem:[%s5645 + $0x168] sm:$0xff]
    %v5692 = vld [vmem:[%s5645 + $0x170] sm:$0xff]
    %v5693 = vld [vmem:[%s5645 + $0x178] sm:$0xff]
    %v5694 = vld [vmem:[%s5645 + $0x180] sm:$0xff]
    %v5695 = vld [vmem:[%s5645 + $0x188] sm:$0xff]
    %v5696 = vld [vmem:[%s5645 + $0x190] sm:$0xff]
    %v5697 = vld [vmem:[%s5645 + $0x198] sm:$0xff]
    %v5698 = vld [vmem:[%s5645 + $0x1a0] sm:$0xff]
    %v5699 = vld [vmem:[%s5645 + $0x1a8] sm:$0xff]
    %v5700 = vld [vmem:[%s5645 + $0x1b0] sm:$0xff]
    %v5701 = vld [vmem:[%s5645 + $0x1b8] sm:$0xff]
    %v5702 = vld [vmem:[%s5645 + $0x1c0] sm:$0xff]
    %v5703 = vld [vmem:[%s5645 + $0x1c8] sm:$0xff]
    %v5704 = vld [vmem:[%s5645 + $0x1d0] sm:$0xff]
    %v5705 = vld [vmem:[%s5645 + $0x1d8] sm:$0xff]
    %v5706 = vld [vmem:[%s5645 + $0x1e0] sm:$0xff]
    %v5707 = vld [vmem:[%s5645 + $0x1e8] sm:$0xff]
    %v5708 = vld [vmem:[%s5645 + $0x1f0] sm:$0xff]
    %v5709 = vld [vmem:[%s5645 + $0x1f8] sm:$0xff]
    %v5710 = vld [vmem:[%s5645 + $0x200] sm:$0xff]
    %v5711 = vld [vmem:[%s5645 + $0x208] sm:$0xff]
    %v5712 = vld [vmem:[%s5645 + $0x210] sm:$0xff]
    %v5713 = vld [vmem:[%s5645 + $0x218] sm:$0xff]
    %v5714 = vld [vmem:[%s5645 + $0x220] sm:$0xff]
    %v5715 = vld [vmem:[%s5645 + $0x228] sm:$0xff]
    %v5716 = vld [vmem:[%s5645 + $0x230] sm:$0xff]
    %v5717 = vld [vmem:[%s5645 + $0x238] sm:$0xff]
    %v5718 = vld [vmem:[%s5645 + $0x240] sm:$0xff]
    %v5719 = vld [vmem:[%s5645 + $0x248] sm:$0xff]
    %v5720 = vld [vmem:[%s5645 + $0x250] sm:$0xff]
    %v5721 = vld [vmem:[%s5645 + $0x258] sm:$0xff]
    %v5722 = vld [vmem:[%s5645 + $0x260] sm:$0xff]
    %v5723 = vld [vmem:[%s5645 + $0x268] sm:$0xff]
    %v5724 = vld [vmem:[%s5645 + $0x270] sm:$0xff]
    %v5725 = vld [vmem:[%s5645 + $0x278] sm:$0xff]
    %v5726 = vld [vmem:[%s5645 + $0x280] sm:$0xff]
    %v5727 = vld [vmem:[%s5645 + $0x288] sm:$0xff]
    %v5728 = vld [vmem:[%s5645 + $0x290] sm:$0xff]
    %v5729 = vld [vmem:[%s5645 + $0x298] sm:$0xff]
    %v5730 = vld [vmem:[%s5645 + $0x2a0] sm:$0xff]
    %v5731 = vld [vmem:[%s5645 + $0x2a8] sm:$0xff]
    %v5732 = vld [vmem:[%s5645 + $0x2b0] sm:$0xff]
    %v5733 = vld [vmem:[%s5645 + $0x2b8] sm:$0xff]
    %v5734 = vld [vmem:[%s5645 + $0x2c0] sm:$0xff]
    %v5735 = vld [vmem:[%s5645 + $0x2c8] sm:$0xff]
    %v5736 = vld [vmem:[%s5645 + $0x2d0] sm:$0xff]
    %v5737 = vld [vmem:[%s5645 + $0x2d8] sm:$0xff]
    %v5738 = vld [vmem:[%s5645 + $0x2e0] sm:$0xff]
    %v5739 = vld [vmem:[%s5645 + $0x2e8] sm:$0xff]
    %v5740 = vld [vmem:[%s5645 + $0x2f0] sm:$0xff]
    %v5741 = vld [vmem:[%s5645 + $0x2f8] sm:$0xff]
    %v5838 = vunpack.c.l.b16 %v5646
    %v5839 = vunpack.c.h.b16 %v5646
    %v5840 = vunpack.c.l.b16 %v5647
    %v5841 = vunpack.c.h.b16 %v5647
    %v5842 = vunpack.c.l.b16 %v5648
    %v5843 = vunpack.c.h.b16 %v5648
    %v5844 = vunpack.c.l.b16 %v5649
    %v5845 = vunpack.c.h.b16 %v5649
    %v5846 = vunpack.c.l.b16 %v5650
    %v5847 = vunpack.c.h.b16 %v5650
    %v5848 = vunpack.c.l.b16 %v5651
    %v5849 = vunpack.c.h.b16 %v5651
    %v5850 = vunpack.c.l.b16 %v5652
    %v5851 = vunpack.c.h.b16 %v5652
    %v5852 = vunpack.c.l.b16 %v5653
    %v5853 = vunpack.c.h.b16 %v5653
    %v5854 = vunpack.c.l.b16 %v5654
    %v5855 = vunpack.c.h.b16 %v5654
    %v5856 = vunpack.c.l.b16 %v5655
    %v5857 = vunpack.c.h.b16 %v5655
    %v5858 = vunpack.c.l.b16 %v5656
    %v5859 = vunpack.c.h.b16 %v5656
    %v5860 = vunpack.c.l.b16 %v5657
    %v5861 = vunpack.c.h.b16 %v5657
    %v5862 = vunpack.c.l.b16 %v5658
    %v5863 = vunpack.c.h.b16 %v5658
    %v5864 = vunpack.c.l.b16 %v5659
    %v5865 = vunpack.c.h.b16 %v5659
    %v5866 = vunpack.c.l.b16 %v5660
    %v5867 = vunpack.c.h.b16 %v5660
    %v5868 = vunpack.c.l.b16 %v5661
    %v5869 = vunpack.c.h.b16 %v5661
    %v5870 = vunpack.c.l.b16 %v5662
    %v5871 = vunpack.c.h.b16 %v5662
    %v5872 = vunpack.c.l.b16 %v5663
    %v5873 = vunpack.c.h.b16 %v5663
    %v5874 = vunpack.c.l.b16 %v5664
    %v5875 = vunpack.c.h.b16 %v5664
    %v5876 = vunpack.c.l.b16 %v5665
    %v5877 = vunpack.c.h.b16 %v5665
    %v5878 = vunpack.c.l.b16 %v5666
    %v5879 = vunpack.c.h.b16 %v5666
    %v5880 = vunpack.c.l.b16 %v5667
    %v5881 = vunpack.c.h.b16 %v5667
    %v5882 = vunpack.c.l.b16 %v5668
    %v5883 = vunpack.c.h.b16 %v5668
    %v5884 = vunpack.c.l.b16 %v5669
    %v5885 = vunpack.c.h.b16 %v5669
    %v5886 = vunpack.c.l.b16 %v5670
    %v5887 = vunpack.c.h.b16 %v5670
    %v5888 = vunpack.c.l.b16 %v5671
    %v5889 = vunpack.c.h.b16 %v5671
    %v5890 = vunpack.c.l.b16 %v5672
    %v5891 = vunpack.c.h.b16 %v5672
    %v5892 = vunpack.c.l.b16 %v5673
    %v5893 = vunpack.c.h.b16 %v5673
    %v5894 = vunpack.c.l.b16 %v5674
    %v5895 = vunpack.c.h.b16 %v5674
    %v5896 = vunpack.c.l.b16 %v5675
    %v5897 = vunpack.c.h.b16 %v5675
    %v5898 = vunpack.c.l.b16 %v5676
    %v5899 = vunpack.c.h.b16 %v5676
    %v5900 = vunpack.c.l.b16 %v5677
    %v5901 = vunpack.c.h.b16 %v5677
    %v5902 = vunpack.c.l.b16 %v5678
    %v5903 = vunpack.c.h.b16 %v5678
    %v5904 = vunpack.c.l.b16 %v5679
    %v5905 = vunpack.c.h.b16 %v5679
    %v5906 = vunpack.c.l.b16 %v5680
    %v5907 = vunpack.c.h.b16 %v5680
    %v5908 = vunpack.c.l.b16 %v5681
    %v5909 = vunpack.c.h.b16 %v5681
    %v5910 = vunpack.c.l.b16 %v5682
    %v5911 = vunpack.c.h.b16 %v5682
    %v5912 = vunpack.c.l.b16 %v5683
    %v5913 = vunpack.c.h.b16 %v5683
    %v5914 = vunpack.c.l.b16 %v5684
    %v5915 = vunpack.c.h.b16 %v5684
    %v5916 = vunpack.c.l.b16 %v5685
    %v5917 = vunpack.c.h.b16 %v5685
    %v5918 = vunpack.c.l.b16 %v5686
    %v5919 = vunpack.c.h.b16 %v5686
    %v5920 = vunpack.c.l.b16 %v5687
    %v5921 = vunpack.c.h.b16 %v5687
    %v5922 = vunpack.c.l.b16 %v5688
    %v5923 = vunpack.c.h.b16 %v5688
    %v5924 = vunpack.c.l.b16 %v5689
    %v5925 = vunpack.c.h.b16 %v5689
    %v5926 = vunpack.c.l.b16 %v5690
    %v5927 = vunpack.c.h.b16 %v5690
    %v5928 = vunpack.c.l.b16 %v5691
    %v5929 = vunpack.c.h.b16 %v5691
    %v5930 = vunpack.c.l.b16 %v5692
    %v5931 = vunpack.c.h.b16 %v5692
    %v5932 = vunpack.c.l.b16 %v5693
    %v5933 = vunpack.c.h.b16 %v5693
    %v5934 = vunpack.c.l.b16 %v5694
    %v5935 = vunpack.c.h.b16 %v5694
    %v5936 = vunpack.c.l.b16 %v5695
    %v5937 = vunpack.c.h.b16 %v5695
    %v5938 = vunpack.c.l.b16 %v5696
    %v5939 = vunpack.c.h.b16 %v5696
    %v5940 = vunpack.c.l.b16 %v5697
    %v5941 = vunpack.c.h.b16 %v5697
    %v5942 = vunpack.c.l.b16 %v5698
    %v5943 = vunpack.c.h.b16 %v5698
    %v5944 = vunpack.c.l.b16 %v5699
    %v5945 = vunpack.c.h.b16 %v5699
    %v5946 = vunpack.c.l.b16 %v5700
    %v5947 = vunpack.c.h.b16 %v5700
    %v5948 = vunpack.c.l.b16 %v5701
    %v5949 = vunpack.c.h.b16 %v5701
    %v5950 = vunpack.c.l.b16 %v5702
    %v5951 = vunpack.c.h.b16 %v5702
    %v5952 = vunpack.c.l.b16 %v5703
    %v5953 = vunpack.c.h.b16 %v5703
    %v5954 = vunpack.c.l.b16 %v5704
    %v5955 = vunpack.c.h.b16 %v5704
    %v5956 = vunpack.c.l.b16 %v5705
    %v5957 = vunpack.c.h.b16 %v5705
    %v5958 = vunpack.c.l.b16 %v5706
    %v5959 = vunpack.c.h.b16 %v5706
    %v5960 = vunpack.c.l.b16 %v5707
    %v5961 = vunpack.c.h.b16 %v5707
    %v5962 = vunpack.c.l.b16 %v5708
    %v5963 = vunpack.c.h.b16 %v5708
    %v5964 = vunpack.c.l.b16 %v5709
    %v5965 = vunpack.c.h.b16 %v5709
    %v5966 = vunpack.c.l.b16 %v5710
    %v5967 = vunpack.c.h.b16 %v5710
    %v5968 = vunpack.c.l.b16 %v5711
    %v5969 = vunpack.c.h.b16 %v5711
    %v5970 = vunpack.c.l.b16 %v5712
    %v5971 = vunpack.c.h.b16 %v5712
    %v5972 = vunpack.c.l.b16 %v5713
    %v5973 = vunpack.c.h.b16 %v5713
    %v5974 = vunpack.c.l.b16 %v5714
    %v5975 = vunpack.c.h.b16 %v5714
    %v5976 = vunpack.c.l.b16 %v5715
    %v5977 = vunpack.c.h.b16 %v5715
    %v5978 = vunpack.c.l.b16 %v5716
    %v5979 = vunpack.c.h.b16 %v5716
    %v5980 = vunpack.c.l.b16 %v5717
    %v5981 = vunpack.c.h.b16 %v5717
    %v5982 = vunpack.c.l.b16 %v5718
    %v5983 = vunpack.c.h.b16 %v5718
    %v5984 = vunpack.c.l.b16 %v5719
    %v5985 = vunpack.c.h.b16 %v5719
    %v5986 = vunpack.c.l.b16 %v5720
    %v5987 = vunpack.c.h.b16 %v5720
    %v5988 = vunpack.c.l.b16 %v5721
    %v5989 = vunpack.c.h.b16 %v5721
    %v5990 = vunpack.c.l.b16 %v5722
    %v5991 = vunpack.c.h.b16 %v5722
    %v5992 = vunpack.c.l.b16 %v5723
    %v5993 = vunpack.c.h.b16 %v5723
    %v5994 = vunpack.c.l.b16 %v5724
    %v5995 = vunpack.c.h.b16 %v5724
    %v5996 = vunpack.c.l.b16 %v5725
    %v5997 = vunpack.c.h.b16 %v5725
    %v5998 = vunpack.c.l.b16 %v5726
    %v5999 = vunpack.c.h.b16 %v5726
    %v6000 = vunpack.c.l.b16 %v5727
    %v6001 = vunpack.c.h.b16 %v5727
    %v6002 = vunpack.c.l.b16 %v5728
    %v6003 = vunpack.c.h.b16 %v5728
    %v6004 = vunpack.c.l.b16 %v5729
    %v6005 = vunpack.c.h.b16 %v5729
    %v6006 = vunpack.c.l.b16 %v5730
    %v6007 = vunpack.c.h.b16 %v5730
    %v6008 = vunpack.c.l.b16 %v5731
    %v6009 = vunpack.c.h.b16 %v5731
    %v6010 = vunpack.c.l.b16 %v5732
    %v6011 = vunpack.c.h.b16 %v5732
    %v6012 = vunpack.c.l.b16 %v5733
    %v6013 = vunpack.c.h.b16 %v5733
    %v6014 = vunpack.c.l.b16 %v5734
    %v6015 = vunpack.c.h.b16 %v5734
    %v6016 = vunpack.c.l.b16 %v5735
    %v6017 = vunpack.c.h.b16 %v5735
    %v6018 = vunpack.c.l.b16 %v5736
    %v6019 = vunpack.c.h.b16 %v5736
    %v6020 = vunpack.c.l.b16 %v5737
    %v6021 = vunpack.c.h.b16 %v5737
    %v6022 = vunpack.c.l.b16 %v5738
    %v6023 = vunpack.c.h.b16 %v5738
    %v6024 = vunpack.c.l.b16 %v5739
    %v6025 = vunpack.c.h.b16 %v5739
    %v6026 = vunpack.c.l.b16 %v5740
    %v6027 = vunpack.c.h.b16 %v5740
    %v6028 = vunpack.c.l.b16 %v5741
    %v6029 = vunpack.c.h.b16 %v5741
    %v6030 = vpack.c.b16 %v5842, %v5838
    %v6031 = vpack.c.b16 %v5843, %v5839
    %v6032 = vpack.c.b16 %v5844, %v5840
    %v6033 = vpack.c.b16 %v5845, %v5841
    %v6034 = vpack.c.b16 %v5850, %v5846
    %v6035 = vpack.c.b16 %v5851, %v5847
    %v6036 = vpack.c.b16 %v5852, %v5848
    %v6037 = vpack.c.b16 %v5853, %v5849
    %v6038 = vpack.c.b16 %v5858, %v5854
    %v6039 = vpack.c.b16 %v5859, %v5855
    %v6040 = vpack.c.b16 %v5860, %v5856
    %v6041 = vpack.c.b16 %v5861, %v5857
    %v6042 = vpack.c.b16 %v5866, %v5862
    %v6043 = vpack.c.b16 %v5867, %v5863
    %v6044 = vpack.c.b16 %v5868, %v5864
    %v6045 = vpack.c.b16 %v5869, %v5865
    %v6046 = vpack.c.b16 %v5874, %v5870
    %v6047 = vpack.c.b16 %v5875, %v5871
    %v6048 = vpack.c.b16 %v5876, %v5872
    %v6049 = vpack.c.b16 %v5877, %v5873
    %v6050 = vpack.c.b16 %v5882, %v5878
    %v6051 = vpack.c.b16 %v5883, %v5879
    %v6052 = vpack.c.b16 %v5884, %v5880
    %v6053 = vpack.c.b16 %v5885, %v5881
    %v6054 = vpack.c.b16 %v5890, %v5886
    %v6055 = vpack.c.b16 %v5891, %v5887
    %v6056 = vpack.c.b16 %v5892, %v5888
    %v6057 = vpack.c.b16 %v5893, %v5889
    %v6058 = vpack.c.b16 %v5898, %v5894
    %v6059 = vpack.c.b16 %v5899, %v5895
    %v6060 = vpack.c.b16 %v5900, %v5896
    %v6061 = vpack.c.b16 %v5901, %v5897
    %v6062 = vpack.c.b16 %v5906, %v5902
    %v6063 = vpack.c.b16 %v5907, %v5903
    %v6064 = vpack.c.b16 %v5908, %v5904
    %v6065 = vpack.c.b16 %v5909, %v5905
    %v6066 = vpack.c.b16 %v5914, %v5910
    %v6067 = vpack.c.b16 %v5915, %v5911
    %v6068 = vpack.c.b16 %v5916, %v5912
    %v6069 = vpack.c.b16 %v5917, %v5913
    %v6070 = vpack.c.b16 %v5922, %v5918
    %v6071 = vpack.c.b16 %v5923, %v5919
    %v6072 = vpack.c.b16 %v5924, %v5920
    %v6073 = vpack.c.b16 %v5925, %v5921
    %v6074 = vpack.c.b16 %v5930, %v5926
    %v6075 = vpack.c.b16 %v5931, %v5927
    %v6076 = vpack.c.b16 %v5932, %v5928
    %v6077 = vpack.c.b16 %v5933, %v5929
    %v6078 = vpack.c.b16 %v5938, %v5934
    %v6079 = vpack.c.b16 %v5939, %v5935
    %v6080 = vpack.c.b16 %v5940, %v5936
    %v6081 = vpack.c.b16 %v5941, %v5937
    %v6082 = vpack.c.b16 %v5946, %v5942
    %v6083 = vpack.c.b16 %v5947, %v5943
    %v6084 = vpack.c.b16 %v5948, %v5944
    %v6085 = vpack.c.b16 %v5949, %v5945
    %v6086 = vpack.c.b16 %v5954, %v5950
    %v6087 = vpack.c.b16 %v5955, %v5951
    %v6088 = vpack.c.b16 %v5956, %v5952
    %v6089 = vpack.c.b16 %v5957, %v5953
    %v6090 = vpack.c.b16 %v5962, %v5958
    %v6091 = vpack.c.b16 %v5963, %v5959
    %v6092 = vpack.c.b16 %v5964, %v5960
    %v6093 = vpack.c.b16 %v5965, %v5961
    %v6094 = vpack.c.b16 %v5970, %v5966
    %v6095 = vpack.c.b16 %v5971, %v5967
    %v6096 = vpack.c.b16 %v5972, %v5968
    %v6097 = vpack.c.b16 %v5973, %v5969
    %v6098 = vpack.c.b16 %v5978, %v5974
    %v6099 = vpack.c.b16 %v5979, %v5975
    %v6100 = vpack.c.b16 %v5980, %v5976
    %v6101 = vpack.c.b16 %v5981, %v5977
    %v6102 = vpack.c.b16 %v5986, %v5982
    %v6103 = vpack.c.b16 %v5987, %v5983
    %v6104 = vpack.c.b16 %v5988, %v5984
    %v6105 = vpack.c.b16 %v5989, %v5985
    %v6106 = vpack.c.b16 %v5994, %v5990
    %v6107 = vpack.c.b16 %v5995, %v5991
    %v6108 = vpack.c.b16 %v5996, %v5992
    %v6109 = vpack.c.b16 %v5997, %v5993
    %v6110 = vpack.c.b16 %v6002, %v5998
    %v6111 = vpack.c.b16 %v6003, %v5999
    %v6112 = vpack.c.b16 %v6004, %v6000
    %v6113 = vpack.c.b16 %v6005, %v6001
    %v6114 = vpack.c.b16 %v6010, %v6006
    %v6115 = vpack.c.b16 %v6011, %v6007
    %v6116 = vpack.c.b16 %v6012, %v6008
    %v6117 = vpack.c.b16 %v6013, %v6009
    %v6118 = vpack.c.b16 %v6018, %v6014
    %v6119 = vpack.c.b16 %v6019, %v6015
    %v6120 = vpack.c.b16 %v6020, %v6016
    %v6121 = vpack.c.b16 %v6021, %v6017
    %v6122 = vpack.c.b16 %v6026, %v6022
    %v6123 = vpack.c.b16 %v6027, %v6023
    %v6124 = vpack.c.b16 %v6028, %v6024
    %v6125 = vpack.c.b16 %v6029, %v6025
    %6222 = vmatprep.subr.bf16.mxu0 %v6031
    %6223 = vmatpush1.bf16.msra.mxu0 %v6030
    %6224 = vmatprep.subr.bf16.mxu0 %v6035
    %6225 = vmatpush1.bf16.msra.mxu0 %v6034
    %6226 = vmatprep.subr.bf16.mxu0 %v6039
    %6227 = vmatpush1.bf16.msra.mxu0 %v6038
    %6228 = vmatprep.subr.bf16.mxu0 %v6043
    %6229 = vmatpush1.bf16.msra.mxu0 %v6042
    %6230 = vmatprep.subr.bf16.mxu0 %v6047
    %6231 = vmatpush1.bf16.msra.mxu0 %v6046
    %6232 = vmatprep.subr.bf16.mxu0 %v6051
    %6233 = vmatpush1.bf16.msra.mxu0 %v6050
    %6234 = vmatprep.subr.bf16.mxu0 %v6055
    %6235 = vmatpush1.bf16.msra.mxu0 %v6054
    %6236 = vmatprep.subr.bf16.mxu0 %v6059
    %6237 = vmatpush1.bf16.msra.mxu0 %v6058
    %6238 = vmatprep.subr.bf16.mxu0 %v6063
    %6239 = vmatpush1.bf16.msra.mxu0 %v6062
    %6240 = vmatprep.subr.bf16.mxu0 %v6067
    %6241 = vmatpush1.bf16.msra.mxu0 %v6066
    %6242 = vmatprep.subr.bf16.mxu0 %v6071
    %6243 = vmatpush1.bf16.msra.mxu0 %v6070
    %6244 = vmatprep.subr.bf16.mxu0 %v6075
    %6245 = vmatpush1.bf16.msra.mxu0 %v6074
    %6246 = vmatprep.subr.bf16.mxu0 %v6079
    %6247 = vmatpush1.bf16.msra.mxu0 %v6078
    %6248 = vmatprep.subr.bf16.mxu0 %v6083
    %6249 = vmatpush1.bf16.msra.mxu0 %v6082
    %6250 = vmatprep.subr.bf16.mxu0 %v6087
    %6251 = vmatpush1.bf16.msra.mxu0 %v6086
    %6252 = vmatprep.subr.bf16.mxu0 %v6091
    %6253 = vmatpush1.bf16.msra.mxu0 %v6090
    %6254 = vmatprep.mubr.bf16.mxu0 %v967
    %6255 = vmatmul.mubr.bf16.gmra.mrb[0].mxu0 %v966
    %v6256 = vpop.f32.mrb[0].mxu0
    %v6257 = vadd.f32 0.0, %v6256
    %v6258 = vpop.f32.mrb[0].mxu0
    %v6259 = vadd.f32 0.0, %v6258
    %v6260 = vpop.f32.mrb[0].mxu0
    %v6261 = vadd.f32 0.0, %v6260
    %v6262 = vpop.f32.mrb[0].mxu0
    %v6263 = vadd.f32 0.0, %v6262
    %6264 = vmatprep.mubr.bf16.mxu0 %v970
    %6265 = vmatmul.mubr.bf16.gmra.mrb[0].mxu0 %v969
    %v6266 = vpop.f32.mrb[0].mxu0
    %v6267 = vadd.f32 0.0, %v6266
    %v6268 = vpop.f32.mrb[0].mxu0
    %v6269 = vadd.f32 0.0, %v6268
    %v6270 = vpop.f32.mrb[0].mxu0
    %v6271 = vadd.f32 0.0, %v6270
    %v6272 = vpop.f32.mrb[0].mxu0
    %v6273 = vadd.f32 0.0, %v6272
    %6274 = vdwg.mxu0
    %6275 = vmatprep.subr.bf16.mxu0 %v6095
    %6276 = vmatpush1.bf16.msra.mxu0 %v6094
    %6277 = vmatprep.subr.bf16.mxu0 %v6099
    %6278 = vmatpush1.bf16.msra.mxu0 %v6098
    %6279 = vmatprep.subr.bf16.mxu0 %v6103
    %6280 = vmatpush1.bf16.msra.mxu0 %v6102
    %6281 = vmatprep.subr.bf16.mxu0 %v6107
    %6282 = vmatpush1.bf16.msra.mxu0 %v6106
    %6283 = vmatprep.subr.bf16.mxu0 %v6111
    %6284 = vmatpush1.bf16.msra.mxu0 %v6110
    %6285 = vmatprep.subr.bf16.mxu0 %v6115
    %6286 = vmatpush1.bf16.msra.mxu0 %v6114
    %6287 = vmatprep.subr.bf16.mxu0 %v6119
    %6288 = vmatpush1.bf16.msra.mxu0 %v6118
    %6289 = vmatprep.subr.bf16.mxu0 %v6123
    %6290 = vmatpush1.bf16.msra.mxu0 %v6122
    %6291 = vmatprep.subr.bf16.mxu0 0
    %6292 = vmatpush1.bf16.msra.mxu0 0
    %6293 = vmatprep.subr.bf16.mxu0 0
    %6294 = vmatpush1.bf16.msra.mxu0 0
    %6295 = vmatprep.subr.bf16.mxu0 0
    %6296 = vmatpush1.bf16.msra.mxu0 0
    %6297 = vmatprep.subr.bf16.mxu0 0
    %6298 = vmatpush1.bf16.msra.mxu0 0
    %6299 = vmatprep.subr.bf16.mxu0 0
    %6300 = vmatpush1.bf16.msra.mxu0 0
    %6301 = vmatprep.subr.bf16.mxu0 0
    %6302 = vmatpush1.bf16.msra.mxu0 0
    %6303 = vmatprep.subr.bf16.mxu0 0
    %6304 = vmatpush1.bf16.msra.mxu0 0
    %6305 = vmatprep.subr.bf16.mxu0 0
    %6306 = vmatpush1.bf16.msra.mxu0 0
    %6307 = vmatprep.mubr.bf16.mxu0 0
    %6308 = vmatmul.mubr.bf16.gmra.mrb[0].mxu0 %v968
    %v6309 = vpop.f32.mrb[0].mxu0
    %v6310 = vadd.f32 %v6257, %v6309
    %v6311 = vpop.f32.mrb[0].mxu0
    %v6312 = vadd.f32 %v6259, %v6311
    %v6313 = vpop.f32.mrb[0].mxu0
    %v6314 = vadd.f32 %v6261, %v6313
    %v6315 = vpop.f32.mrb[0].mxu0
    %v6316 = vadd.f32 %v6263, %v6315
    %6317 = vmatprep.mubr.bf16.mxu0 0
    %6318 = vmatmul.mubr.bf16.gmra.mrb[0].mxu0 %v971
    %v6319 = vpop.f32.mrb[0].mxu0
    %v6320 = vadd.f32 %v6267, %v6319
    %v6321 = vpop.f32.mrb[0].mxu0
    %v6322 = vadd.f32 %v6269, %v6321
    %v6323 = vpop.f32.mrb[0].mxu0
    %v6324 = vadd.f32 %v6271, %v6323
    %v6325 = vpop.f32.mrb[0].mxu0
    %v6326 = vadd.f32 %v6273, %v6325
    %6327 = vdwg.mxu0
    %6328 = vmatprep.subr.bf16.mxu0 %v6033
    %6329 = vmatpush1.bf16.msra.mxu0 %v6032
    %6330 = vmatprep.subr.bf16.mxu0 %v6037
    %6331 = vmatpush1.bf16.msra.mxu0 %v6036
    %6332 = vmatprep.subr.bf16.mxu0 %v6041
    %6333 = vmatpush1.bf16.msra.mxu0 %v6040
    %6334 = vmatprep.subr.bf16.mxu0 %v6045
    %6335 = vmatpush1.bf16.msra.mxu0 %v6044
    %6336 = vmatprep.subr.bf16.mxu0 %v6049
    %6337 = vmatpush1.bf16.msra.mxu0 %v6048
    %6338 = vmatprep.subr.bf16.mxu0 %v6053
    %6339 = vmatpush1.bf16.msra.mxu0 %v6052
    %6340 = vmatprep.subr.bf16.mxu0 %v6057
    %6341 = vmatpush1.bf16.msra.mxu0 %v6056
    %6342 = vmatprep.subr.bf16.mxu0 %v6061
    %6343 = vmatpush1.bf16.msra.mxu0 %v6060
    %6344 = vmatprep.subr.bf16.mxu0 %v6065
    %6345 = vmatpush1.bf16.msra.mxu0 %v6064
    %6346 = vmatprep.subr.bf16.mxu0 %v6069
    %6347 = vmatpush1.bf16.msra.mxu0 %v6068
    %6348 = vmatprep.subr.bf16.mxu0 %v6073
    %6349 = vmatpush1.bf16.msra.mxu0 %v6072
    %6350 = vmatprep.subr.bf16.mxu0 %v6077
    %6351 = vmatpush1.bf16.msra.mxu0 %v6076
    %6352 = vmatprep.subr.bf16.mxu0 %v6081
    %6353 = vmatpush1.bf16.msra.mxu0 %v6080
    %6354 = vmatprep.subr.bf16.mxu0 %v6085
    %6355 = vmatpush1.bf16.msra.mxu0 %v6084
    %6356 = vmatprep.subr.bf16.mxu0 %v6089
    %6357 = vmatpush1.bf16.msra.mxu0 %v6088
    %6358 = vmatprep.subr.bf16.mxu0 %v6093
    %6359 = vmatpush1.bf16.msra.mxu0 %v6092
    %6360 = vmatprep.mubr.bf16.mxu0 %v967
    %6361 = vmatmul.mubr.bf16.gmra.mrb[0].mxu0 %v966
    %v6362 = vpop.f32.mrb[0].mxu0
    %v6363 = vadd.f32 0.0, %v6362
    %v6364 = vpop.f32.mrb[0].mxu0
    %v6365 = vadd.f32 0.0, %v6364
    %v6366 = vpop.f32.mrb[0].mxu0
    %v6367 = vadd.f32 0.0, %v6366
    %v6368 = vpop.f32.mrb[0].mxu0
    %v6369 = vadd.f32 0.0, %v6368
    %6370 = vmatprep.mubr.bf16.mxu0 %v970
    %6371 = vmatmul.mubr.bf16.gmra.mrb[0].mxu0 %v969
    %v6372 = vpop.f32.mrb[0].mxu0
    %v6373 = vadd.f32 0.0, %v6372
    %v6374 = vpop.f32.mrb[0].mxu0
    %v6375 = vadd.f32 0.0, %v6374
    %v6376 = vpop.f32.mrb[0].mxu0
    %v6377 = vadd.f32 0.0, %v6376
    %v6378 = vpop.f32.mrb[0].mxu0
    %v6379 = vadd.f32 0.0, %v6378
    %6380 = vdwg.mxu0
    %6381 = vmatprep.subr.bf16.mxu0 %v6097
    %6382 = vmatpush1.bf16.msra.mxu0 %v6096
    %6383 = vmatprep.subr.bf16.mxu0 %v6101
    %6384 = vmatpush1.bf16.msra.mxu0 %v6100
    %6385 = vmatprep.subr.bf16.mxu0 %v6105
    %6386 = vmatpush1.bf16.msra.mxu0 %v6104
    %6387 = vmatprep.subr.bf16.mxu0 %v6109
    %6388 = vmatpush1.bf16.msra.mxu0 %v6108
    %6389 = vmatprep.subr.bf16.mxu0 %v6113
    %6390 = vmatpush1.bf16.msra.mxu0 %v6112
    %6391 = vmatprep.subr.bf16.mxu0 %v6117
    %6392 = vmatpush1.bf16.msra.mxu0 %v6116
    %6393 = vmatprep.subr.bf16.mxu0 %v6121
    %6394 = vmatpush1.bf16.msra.mxu0 %v6120
    %6395 = vmatprep.subr.bf16.mxu0 %v6125
    %6396 = vmatpush1.bf16.msra.mxu0 %v6124
    %6397 = vmatprep.subr.bf16.mxu0 0
    %6398 = vmatpush1.bf16.msra.mxu0 0
    %6399 = vmatprep.subr.bf16.mxu0 0
    %6400 = vmatpush1.bf16.msra.mxu0 0
    %6401 = vmatprep.subr.bf16.mxu0 0
    %6402 = vmatpush1.bf16.msra.mxu0 0
    %6403 = vmatprep.subr.bf16.mxu0 0
    %6404 = vmatpush1.bf16.msra.mxu0 0
    %6405 = vmatprep.subr.bf16.mxu0 0
    %6406 = vmatpush1.bf16.msra.mxu0 0
    %6407 = vmatprep.subr.bf16.mxu0 0
    %6408 = vmatpush1.bf16.msra.mxu0 0
    %6409 = vmatprep.subr.bf16.mxu0 0
    %6410 = vmatpush1.bf16.msra.mxu0 0
    %6411 = vmatprep.subr.bf16.mxu0 0
    %6412 = vmatpush1.bf16.msra.mxu0 0
    %6413 = vmatprep.mubr.bf16.mxu0 0
    %6414 = vmatmul.mubr.bf16.gmra.mrb[0].mxu0 %v968
    %v6415 = vpop.f32.mrb[0].mxu0
    %v6416 = vadd.f32 %v6363, %v6415
    %v6417 = vpop.f32.mrb[0].mxu0
    %v6418 = vadd.f32 %v6365, %v6417
    %v6419 = vpop.f32.mrb[0].mxu0
    %v6420 = vadd.f32 %v6367, %v6419
    %v6421 = vpop.f32.mrb[0].mxu0
    %v6422 = vadd.f32 %v6369, %v6421
    %6423 = vmatprep.mubr.bf16.mxu0 0
    %6424 = vmatmul.mubr.bf16.gmra.mrb[0].mxu0 %v971
    %v6425 = vpop.f32.mrb[0].mxu0
    %v6426 = vadd.f32 %v6373, %v6425
    %v6427 = vpop.f32.mrb[0].mxu0
    %v6428 = vadd.f32 %v6375, %v6427
    %v6429 = vpop.f32.mrb[0].mxu0
    %v6430 = vadd.f32 %v6377, %v6429
    %v6431 = vpop.f32.mrb[0].mxu0
    %v6432 = vadd.f32 %v6379, %v6431
    %6433 = vdwg.mxu0
    %6434 = vmatprep.subr.bf16.mxu0 %v6031
    %6435 = vmatpush1.bf16.msra.mxu0 %v6030
    %6436 = vmatprep.subr.bf16.mxu0 %v6035
    %6437 = vmatpush1.bf16.msra.mxu0 %v6034
    %6438 = vmatprep.subr.bf16.mxu0 %v6039
    %6439 = vmatpush1.bf16.msra.mxu0 %v6038
    %6440 = vmatprep.subr.bf16.mxu0 %v6043
    %6441 = vmatpush1.bf16.msra.mxu0 %v6042
    %6442 = vmatprep.subr.bf16.mxu0 %v6047
    %6443 = vmatpush1.bf16.msra.mxu0 %v6046
    %6444 = vmatprep.subr.bf16.mxu0 %v6051
    %6445 = vmatpush1.bf16.msra.mxu0 %v6050
    %6446 = vmatprep.subr.bf16.mxu0 %v6055
    %6447 = vmatpush1.bf16.msra.mxu0 %v6054
    %6448 = vmatprep.subr.bf16.mxu0 %v6059
    %6449 = vmatpush1.bf16.msra.mxu0 %v6058
    %6450 = vmatprep.subr.bf16.mxu0 %v6063
    %6451 = vmatpush1.bf16.msra.mxu0 %v6062
    %6452 = vmatprep.subr.bf16.mxu0 %v6067
    %6453 = vmatpush1.bf16.msra.mxu0 %v6066
    %6454 = vmatprep.subr.bf16.mxu0 %v6071
    %6455 = vmatpush1.bf16.msra.mxu0 %v6070
    %6456 = vmatprep.subr.bf16.mxu0 %v6075
    %6457 = vmatpush1.bf16.msra.mxu0 %v6074
    %6458 = vmatprep.subr.bf16.mxu0 %v6079
    %6459 = vmatpush1.bf16.msra.mxu0 %v6078
    %6460 = vmatprep.subr.bf16.mxu0 %v6083
    %6461 = vmatpush1.bf16.msra.mxu0 %v6082
    %6462 = vmatprep.subr.bf16.mxu0 %v6087
    %6463 = vmatpush1.bf16.msra.mxu0 %v6086
    %6464 = vmatprep.subr.bf16.mxu0 %v6091
    %6465 = vmatpush1.bf16.msra.mxu0 %v6090
    %6466 = vmatprep.mubr.bf16.mxu0 %v1512
    %6467 = vmatmul.mubr.bf16.gmra.mrb[0].mxu0 %v1511
    %v6468 = vpop.f32.mrb[0].mxu0
    %v6469 = vadd.f32 0.0, %v6468
    %v6470 = vpop.f32.mrb[0].mxu0
    %v6471 = vadd.f32 0.0, %v6470
    %v6472 = vpop.f32.mrb[0].mxu0
    %v6473 = vadd.f32 0.0, %v6472
    %v6474 = vpop.f32.mrb[0].mxu0
    %v6475 = vadd.f32 0.0, %v6474
    %6476 = vmatprep.mubr.bf16.mxu0 %v1515
    %6477 = vmatmul.mubr.bf16.gmra.mrb[0].mxu0 %v1514
    %v6478 = vpop.f32.mrb[0].mxu0
    %v6479 = vadd.f32 0.0, %v6478
    %v6480 = vpop.f32.mrb[0].mxu0
    %v6481 = vadd.f32 0.0, %v6480
    %v6482 = vpop.f32.mrb[0].mxu0
    %v6483 = vadd.f32 0.0, %v6482
    %v6484 = vpop.f32.mrb[0].mxu0
    %v6485 = vadd.f32 0.0, %v6484
    %6486 = vdwg.mxu0
    %6487 = vmatprep.subr.bf16.mxu0 %v6095
    %6488 = vmatpush1.bf16.msra.mxu0 %v6094
    %6489 = vmatprep.subr.bf16.mxu0 %v6099
    %6490 = vmatpush1.bf16.msra.mxu0 %v6098
    %6491 = vmatprep.subr.bf16.mxu0 %v6103
    %6492 = vmatpush1.bf16.msra.mxu0 %v6102
    %6493 = vmatprep.subr.bf16.mxu0 %v6107
    %6494 = vmatpush1.bf16.msra.mxu0 %v6106
    %6495 = vmatprep.subr.bf16.mxu0 %v6111
    %6496 = vmatpush1.bf16.msra.mxu0 %v6110
    %6497 = vmatprep.subr.bf16.mxu0 %v6115
    %6498 = vmatpush1.bf16.msra.mxu0 %v6114
    %6499 = vmatprep.subr.bf16.mxu0 %v6119
    %6500 = vmatpush1.bf16.msra.mxu0 %v6118
    %6501 = vmatprep.subr.bf16.mxu0 %v6123
    %6502 = vmatpush1.bf16.msra.mxu0 %v6122
    %6503 = vmatprep.subr.bf16.mxu0 0
    %6504 = vmatpush1.bf16.msra.mxu0 0
    %6505 = vmatprep.subr.bf16.mxu0 0
    %6506 = vmatpush1.bf16.msra.mxu0 0
    %6507 = vmatprep.subr.bf16.mxu0 0
    %6508 = vmatpush1.bf16.msra.mxu0 0
    %6509 = vmatprep.subr.bf16.mxu0 0
    %6510 = vmatpush1.bf16.msra.mxu0 0
    %6511 = vmatprep.subr.bf16.mxu0 0
    %6512 = vmatpush1.bf16.msra.mxu0 0
    %6513 = vmatprep.subr.bf16.mxu0 0
    %6514 = vmatpush1.bf16.msra.mxu0 0
    %6515 = vmatprep.subr.bf16.mxu0 0
    %6516 = vmatpush1.bf16.msra.mxu0 0
    %6517 = vmatprep.subr.bf16.mxu0 0
    %6518 = vmatpush1.bf16.msra.mxu0 0
    %6519 = vmatprep.mubr.bf16.mxu0 0
    %6520 = vmatmul.mubr.bf16.gmra.mrb[0].mxu0 %v1513
    %v6521 = vpop.f32.mrb[0].mxu0
    %v6522 = vadd.f32 %v6469, %v6521
    %v6523 = vpop.f32.mrb[0].mxu0
    %v6524 = vadd.f32 %v6471, %v6523
    %v6525 = vpop.f32.mrb[0].mxu0
    %v6526 = vadd.f32 %v6473, %v6525
    %v6527 = vpop.f32.mrb[0].mxu0
    %v6528 = vadd.f32 %v6475, %v6527
    %6529 = vmatprep.mubr.bf16.mxu0 0
    %6530 = vmatmul.mubr.bf16.gmra.mrb[0].mxu0 %v1516
    %v6531 = vpop.f32.mrb[0].mxu0
    %v6532 = vadd.f32 %v6479, %v6531
    %v6533 = vpop.f32.mrb[0].mxu0
    %v6534 = vadd.f32 %v6481, %v6533
    %v6535 = vpop.f32.mrb[0].mxu0
    %v6536 = vadd.f32 %v6483, %v6535
    %v6537 = vpop.f32.mrb[0].mxu0
    %v6538 = vadd.f32 %v6485, %v6537
    %6539 = vdwg.mxu0
    %6540 = vmatprep.subr.bf16.mxu0 %v6033
    %6541 = vmatpush1.bf16.msra.mxu0 %v6032
    %6542 = vmatprep.subr.bf16.mxu0 %v6037
    %6543 = vmatpush1.bf16.msra.mxu0 %v6036
    %6544 = vmatprep.subr.bf16.mxu0 %v6041
    %6545 = vmatpush1.bf16.msra.mxu0 %v6040
    %6546 = vmatprep.subr.bf16.mxu0 %v6045
    %6547 = vmatpush1.bf16.msra.mxu0 %v6044
    %6548 = vmatprep.subr.bf16.mxu0 %v6049
    %6549 = vmatpush1.bf16.msra.mxu0 %v6048
    %6550 = vmatprep.subr.bf16.mxu0 %v6053
    %6551 = vmatpush1.bf16.msra.mxu0 %v6052
    %6552 = vmatprep.subr.bf16.mxu0 %v6057
    %6553 = vmatpush1.bf16.msra.mxu0 %v6056
    %6554 = vmatprep.subr.bf16.mxu0 %v6061
    %6555 = vmatpush1.bf16.msra.mxu0 %v6060
    %6556 = vmatprep.subr.bf16.mxu0 %v6065
    %6557 = vmatpush1.bf16.msra.mxu0 %v6064
    %6558 = vmatprep.subr.bf16.mxu0 %v6069
    %6559 = vmatpush1.bf16.msra.mxu0 %v6068
    %6560 = vmatprep.subr.bf16.mxu0 %v6073
    %6561 = vmatpush1.bf16.msra.mxu0 %v6072
    %6562 = vmatprep.subr.bf16.mxu0 %v6077
    %6563 = vmatpush1.bf16.msra.mxu0 %v6076
    %6564 = vmatprep.subr.bf16.mxu0 %v6081
    %6565 = vmatpush1.bf16.msra.mxu0 %v6080
    %6566 = vmatprep.subr.bf16.mxu0 %v6085
    %6567 = vmatpush1.bf16.msra.mxu0 %v6084
    %6568 = vmatprep.subr.bf16.mxu0 %v6089
    %6569 = vmatpush1.bf16.msra.mxu0 %v6088
    %6570 = vmatprep.subr.bf16.mxu0 %v6093
    %6571 = vmatpush1.bf16.msra.mxu0 %v6092
    %6572 = vmatprep.mubr.bf16.mxu0 %v1512
    %6573 = vmatmul.mubr.bf16.gmra.mrb[0].mxu0 %v1511
    %v6574 = vpop.f32.mrb[0].mxu0
    %v6575 = vadd.f32 0.0, %v6574
    %v6576 = vpop.f32.mrb[0].mxu0
    %v6577 = vadd.f32 0.0, %v6576
    %v6578 = vpop.f32.mrb[0].mxu0
    %v6579 = vadd.f32 0.0, %v6578
    %v6580 = vpop.f32.mrb[0].mxu0
    %v6581 = vadd.f32 0.0, %v6580
    %6582 = vmatprep.mubr.bf16.mxu0 %v1515
    %6583 = vmatmul.mubr.bf16.gmra.mrb[0].mxu0 %v1514
    %v6584 = vpop.f32.mrb[0].mxu0
    %v6585 = vadd.f32 0.0, %v6584
    %v6586 = vpop.f32.mrb[0].mxu0
    %v6587 = vadd.f32 0.0, %v6586
    %v6588 = vpop.f32.mrb[0].mxu0
    %v6589 = vadd.f32 0.0, %v6588
    %v6590 = vpop.f32.mrb[0].mxu0
    %v6591 = vadd.f32 0.0, %v6590
    %6592 = vdwg.mxu0
    %6593 = vmatprep.subr.bf16.mxu0 %v6097
    %6594 = vmatpush1.bf16.msra.mxu0 %v6096
    %6595 = vmatprep.subr.bf16.mxu0 %v6101
    %6596 = vmatpush1.bf16.msra.mxu0 %v6100
    %6597 = vmatprep.subr.bf16.mxu0 %v6105
    %6598 = vmatpush1.bf16.msra.mxu0 %v6104
    %6599 = vmatprep.subr.bf16.mxu0 %v6109
    %6600 = vmatpush1.bf16.msra.mxu0 %v6108
    %6601 = vmatprep.subr.bf16.mxu0 %v6113
    %6602 = vmatpush1.bf16.msra.mxu0 %v6112
    %6603 = vmatprep.subr.bf16.mxu0 %v6117
    %6604 = vmatpush1.bf16.msra.mxu0 %v6116
    %6605 = vmatprep.subr.bf16.mxu0 %v6121
    %6606 = vmatpush1.bf16.msra.mxu0 %v6120
    %6607 = vmatprep.subr.bf16.mxu0 %v6125
    %6608 = vmatpush1.bf16.msra.mxu0 %v6124
    %6609 = vmatprep.subr.bf16.mxu0 0
    %6610 = vmatpush1.bf16.msra.mxu0 0
    %6611 = vmatprep.subr.bf16.mxu0 0
    %6612 = vmatpush1.bf16.msra.mxu0 0
    %6613 = vmatprep.subr.bf16.mxu0 0
    %6614 = vmatpush1.bf16.msra.mxu0 0
    %6615 = vmatprep.subr.bf16.mxu0 0
    %6616 = vmatpush1.bf16.msra.mxu0 0
    %6617 = vmatprep.subr.bf16.mxu0 0
    %6618 = vmatpush1.bf16.msra.mxu0 0
    %6619 = vmatprep.subr.bf16.mxu0 0
    %6620 = vmatpush1.bf16.msra.mxu0 0
    %6621 = vmatprep.subr.bf16.mxu0 0
    %6622 = vmatpush1.bf16.msra.mxu0 0
    %6623 = vmatprep.subr.bf16.mxu0 0
    %6624 = vmatpush1.bf16.msra.mxu0 0
    %6625 = vmatprep.mubr.bf16.mxu0 0
    %6626 = vmatmul.mubr.bf16.gmra.mrb[0].mxu0 %v1513
    %v6627 = vpop.f32.mrb[0].mxu0
    %v6628 = vadd.f32 %v6575, %v6627
    %v6629 = vpop.f32.mrb[0].mxu0
    %v6630 = vadd.f32 %v6577, %v6629
    %v6631 = vpop.f32.mrb[0].mxu0
    %v6632 = vadd.f32 %v6579, %v6631
    %v6633 = vpop.f32.mrb[0].mxu0
    %v6634 = vadd.f32 %v6581, %v6633
    %6635 = vmatprep.mubr.bf16.mxu0 0
    %6636 = vmatmul.mubr.bf16.gmra.mrb[0].mxu0 %v1516
    %v6637 = vpop.f32.mrb[0].mxu0
    %v6638 = vadd.f32 %v6585, %v6637
    %v6639 = vpop.f32.mrb[0].mxu0
    %v6640 = vadd.f32 %v6587, %v6639
    %v6641 = vpop.f32.mrb[0].mxu0
    %v6642 = vadd.f32 %v6589, %v6641
    %v6643 = vpop.f32.mrb[0].mxu0
    %v6644 = vadd.f32 %v6591, %v6643
    %6645 = vdwg.mxu0
    %v6646 = vadd.f32 %v5613, %v6310
    %v6647 = vadd.f32 %v5614, %v6312
    %v6648 = vadd.f32 %v5615, %v6416
    %v6649 = vadd.f32 %v5616, %v6418
    %v6650 = vadd.f32 %v5617, %v6314
    %v6651 = vadd.f32 %v5618, %v6316
    %v6652 = vadd.f32 %v5619, %v6420
    %v6653 = vadd.f32 %v5620, %v6422
    %v6654 = vadd.f32 %v5621, %v6320
    %v6655 = vadd.f32 %v5622, %v6322
    %v6656 = vadd.f32 %v5623, %v6426
    %v6657 = vadd.f32 %v5624, %v6428
    %v6658 = vadd.f32 %v5625, %v6324
    %v6659 = vadd.f32 %v5626, %v6326
    %v6660 = vadd.f32 %v5627, %v6430
    %v6661 = vadd.f32 %v5628, %v6432
    %v6662 = vadd.f32 %v5629, %v6522
    %v6663 = vadd.f32 %v5630, %v6524
    %v6664 = vadd.f32 %v5631, %v6628
    %v6665 = vadd.f32 %v5632, %v6630
    %v6666 = vadd.f32 %v5633, %v6526
    %v6667 = vadd.f32 %v5634, %v6528
    %v6668 = vadd.f32 %v5635, %v6632
    %v6669 = vadd.f32 %v5636, %v6634
    %v6670 = vadd.f32 %v5637, %v6532
    %v6671 = vadd.f32 %v5638, %v6534
    %v6672 = vadd.f32 %v5639, %v6638
    %v6673 = vadd.f32 %v5640, %v6640
    %v6674 = vadd.f32 %v5641, %v6536
    %v6675 = vadd.f32 %v5642, %v6538
    %v6676 = vadd.f32 %v5643, %v6642
    %v6677 = vadd.f32 %v5644, %v6644
    %v6678 = vmax.f32 %v6646, %v6662
    %v6679 = vmax.f32 %v6647, %v6663
    %v6680 = vmax.f32 %v6648, %v6664
    %v6681 = vmax.f32 %v6649, %v6665
    %v6682 = vmax.f32 %v6650, %v6666
    %v6683 = vmax.f32 %v6651, %v6667
    %v6684 = vmax.f32 %v6652, %v6668
    %v6685 = vmax.f32 %v6653, %v6669
    %v6686 = vmax.f32 %v6654, %v6670
    %v6687 = vmax.f32 %v6655, %v6671
    %v6688 = vmax.f32 %v6656, %v6672
    %v6689 = vmax.f32 %v6657, %v6673
    %v6690 = vmax.f32 %v6658, %v6674
    %v6691 = vmax.f32 %v6659, %v6675
    %v6692 = vmax.f32 %v6660, %v6676
    %v6693 = vmax.f32 %v6661, %v6677
    %v6694 = vmax.f32 %v6678, %v6680
    %v6695 = vmax.f32 %v6679, %v6681
    %v6696 = vmax.f32 %v6682, %v6684
    %v6697 = vmax.f32 %v6683, %v6685
    %v6698 = vmax.f32 %v6686, %v6688
    %v6699 = vmax.f32 %v6687, %v6689
    %v6700 = vmax.f32 %v6690, %v6692
    %v6701 = vmax.f32 %v6691, %v6693
    %v6703 = vlaneseq
    %v6704 = vshrl.u32 %v6703, 7
    %v6705 = vsub.s32 0, %v6704
    %v6706 = vrot.slane %v127, %v6705
    %v6707 = vlaneseq
    %v6708 = vshrl.u32 %v6707, 7
    %v6709 = vsub.s32 1, %v6708
    %v6710 = vrot.slane %v127, %v6709
    %v6713 = vadd.f32 %v6694, %v6706
    %v6714 = vadd.f32 %v6695, %v6710
    %v6715 = vadd.f32 %v6696, %v6706
    %v6716 = vadd.f32 %v6697, %v6710
    %v6717 = vadd.f32 %v6698, %v6706
    %v6718 = vadd.f32 %v6699, %v6710
    %v6719 = vadd.f32 %v6700, %v6706
    %v6720 = vadd.f32 %v6701, %v6710
    %6721 = vst [vmem:[%s5] sm:$0xff] %v6713
    %6722 = vst [vmem:[%s5 + $0x8] sm:$0xff] %v6714
    %6723 = vst [vmem:[%s5 + $0x10] sm:$0xff] %v6715
    %6724 = vst [vmem:[%s5 + $0x18] sm:$0xff] %v6716
    %6725 = vst [vmem:[%s5 + $0x20] sm:$0xff] %v6717
    %6726 = vst [vmem:[%s5 + $0x28] sm:$0xff] %v6718
    %6727 = vst [vmem:[%s5 + $0x30] sm:$0xff] %v6719
    %6728 = vst [vmem:[%s5 + $0x38] sm:$0xff] %v6720
    // Predicated region
    $region38: #{m2_stem_forward.1} parent=1 // pred_check
      _
    $region39: #{m2_stem_forward.1} parent=1 // pred_check_branch
      %6730 = sbr.rel (0) target = $region41
    $region40: #{m2_stem_forward.1} parent=1 // pred_region
      _
    $region41: #{m2_stem_forward.1} parent=1 // pred_fallthru
      _
    // Predicated region
    $region42: #{m2_stem_forward.1} parent=1 // pred_check
      _
    $region43: #{m2_stem_forward.1} parent=1 // pred_check_branch
      %6732 = sbr.rel (0) target = $region45
    $region44: #{m2_stem_forward.1} parent=1 // pred_region
      _
    $region45: #{m2_stem_forward.1} parent=1 // pred_fallthru
      _
    %6733 = vsyncpa [#allocation3], 1
    %6734 = vsyncpa [#allocation5], 1
    %6735 = vsyncpa [#allocation8], 1

</llo_original>
